<compile_context>
chip_gen: v7x
topology: tpu7x:2x2x1
jax: 0.10.0
libtpu: 0.0.40
codegen_flags: <defaults>
</compile_context>

<pallas_src>
import functools
import math

import jax
import jax.numpy as jnp
from jax import lax
from jax.experimental import pallas as pl
from jax.experimental.pallas import tpu as pltpu

# ------------------------- small deterministic config ------------------------
BATCH = 2
MAX_SEQ_LEN = 8          # args.max_seq_len
VOCAB = 100
HIDDEN = 32              # bert_config.hidden_size
NUM_HEADS = 4
HEAD_DIM = HIDDEN // NUM_HEADS
INTERMEDIATE = 64
NUM_LAYERS = 2
LSTM_H = 128             # self.lstm_hiden = 128
NUM_LABELS = 9           # args.num_labels
LABEL_PAD = 16           # CRF / emission label dim padded for TPU lanes
NEG = -1e9


def _fs(shape):
    """Full-array BlockSpec for a 1-D grid (block index is all zeros)."""
    return pl.BlockSpec(shape, lambda i, _n=len(shape): (0,) * _n)


def _ln_val(x, g, b, eps=1e-12):
    mu = jnp.mean(x, axis=-1, keepdims=True)
    var = jnp.mean(jnp.square(x - mu), axis=-1, keepdims=True)
    return (x - mu) * lax.rsqrt(var + eps) * g + b


# =============================== Pallas kernels ==============================

def layernorm_kernel(x_ref, g_ref, b_ref, o_ref):
    o_ref[...] = _ln_val(x_ref[...], g_ref[...], b_ref[...])


def encoder_layer_kernel(x_ref, bias_ref,
                         wq_ref, bq_ref, wk_ref, bk_ref, wv_ref, bv_ref,
                         wo_ref, bo_ref, ln1g_ref, ln1b_ref,
                         wi_ref, bi_ref, wff_ref, bff_ref,
                         ln2g_ref, ln2b_ref, o_ref, *, num_heads, head_dim):
    """One full BERT encoder layer for one batch element (block = (T, H))."""
    x = x_ref[...]                                   # (T, H)
    scale = 1.0 / math.sqrt(head_dim)
    bias = bias_ref[0]                               # (1, T) additive key-mask bias

    attn = jnp.zeros(x.shape, jnp.float32)
    for h in range(num_heads):                       # unrolled head loop (VMEM-resident)
        q = jnp.dot(x, wq_ref[h], preferred_element_type=jnp.float32) + bq_ref[h]
        k = jnp.dot(x, wk_ref[h], preferred_element_type=jnp.float32) + bk_ref[h]
        v = jnp.dot(x, wv_ref[h], preferred_element_type=jnp.float32) + bv_ref[h]
        s = jnp.dot(q, k.T, preferred_element_type=jnp.float32) * scale + bias   # (T, T)
        s = s - jnp.max(s, axis=-1, keepdims=True)
        p = jnp.exp(s)
        p = p / jnp.sum(p, axis=-1, keepdims=True)
        ctx = jnp.dot(p, v, preferred_element_type=jnp.float32)                  # (T, dh)
        attn = attn + jnp.dot(ctx, wo_ref[h], preferred_element_type=jnp.float32)
    attn = attn + bo_ref[...]

    x1 = _ln_val(x + attn, ln1g_ref[...], ln1b_ref[...])
    ff = jnp.dot(x1, wi_ref[...], preferred_element_type=jnp.float32) + bi_ref[...]
    ff = jax.nn.gelu(ff, approximate=True)           # tanh GELU (erf not needed here)
    ff = jnp.dot(ff, wff_ref[...], preferred_element_type=jnp.float32) + bff_ref[...]
    o_ref[...] = _ln_val(x1 + ff, ln2g_ref[...], ln2b_ref[...])


def bilstm_kernel(x_ref, wih_f_ref, whh_f_ref, bias_f_ref,
                  wih_b_ref, whh_b_ref, bias_b_ref,
                  hf_ref, hb_ref, h_f_sc, c_f_sc, h_b_sc, c_b_sc):
    """Bidirectional LSTM, both directions in one sequential loop.
    x_ref: (T, B, Din) time-major.  W_ih:(Din,4H)  W_hh:(H,4H)  bias:(1,4H)
    Gate order i, f, g, o (PyTorch).  Outputs hf/hb: (T, B, H) time-major."""
    T = x_ref.shape[0]
    H = h_f_sc.shape[-1]

    h_f_sc[...] = jnp.zeros_like(h_f_sc)
    c_f_sc[...] = jnp.zeros_like(c_f_sc)
    h_b_sc[...] = jnp.zeros_like(h_b_sc)
    c_b_sc[...] = jnp.zeros_like(c_b_sc)

    wih_f = wih_f_ref[...]; whh_f = whh_f_ref[...]; bias_f = bias_f_ref[...]
    wih_b = wih_b_ref[...]; whh_b = whh_b_ref[...]; bias_b = bias_b_ref[...]

    def cell(x_t, h, c, wih, whh, bias):
        g = (jnp.dot(x_t, wih, preferred_element_type=jnp.float32) + bias
             + jnp.dot(h, whh, preferred_element_type=jnp.float32))
        i = jax.nn.sigmoid(g[:, 0 * H:1 * H])
        f = jax.nn.sigmoid(g[:, 1 * H:2 * H])
        gc = jnp.tanh(g[:, 2 * H:3 * H])
        o = jax.nn.sigmoid(g[:, 3 * H:4 * H])
        c_new = f * c + i * gc
        h_new = o * jnp.tanh(c_new)
        return h_new, c_new

    def step(t, carry):
        # forward direction
        hf, cf = cell(x_ref[t], h_f_sc[...], c_f_sc[...], wih_f, whh_f, bias_f)
        h_f_sc[...] = hf
        c_f_sc[...] = cf
        hf_ref[t] = hf
        # backward direction (reversed time handled in-kernel)
        tb = T - 1 - t
        hb, cb = cell(x_ref[tb], h_b_sc[...], c_b_sc[...], wih_b, whh_b, bias_b)
        h_b_sc[...] = hb
        c_b_sc[...] = cb
        hb_ref[tb] = hb
        return carry

    lax.fori_loop(0, T, step, 0)


def crf_kernel(hf_ref, hb_ref, lwf_ref, lwb_ref, lb_ref, mask_ref,
               trans_t_ref, start_ref, end_ref,
               path_ref, emis_ref, delta_sc, bp_sc):
    """Fused emission head + masked Viterbi decode (torchcrf semantics).
    hf/hb:(T,B,128) time-major LSTM outputs.  lwf/lwb:(128,LP) lb:(1,LP)
    (pad labels have zero weight columns and -1e9 bias).  mask:(T,B,1)
    trans_t:(LP,LP)=transitions.T  start/end:(1,LP)
    Outputs: path (T,B,1) int32, emis (T,B,LP) f32."""
    T, B, LP = bp_sc.shape
    iota_l = lax.broadcasted_iota(jnp.int32, (B, LP), 1)
    iota_3 = lax.broadcasted_iota(jnp.int32, (B, LP, LP), 2)
    trans_t = trans_t_ref[...][None, :, :]            # (1, LP, LP)  [j, i]
    lwf = lwf_ref[...]; lwb = lwb_ref[...]; lb = lb_ref[...]

    def emit(t):
        return (jnp.dot(hf_ref[t], lwf, preferred_element_type=jnp.float32)
                + jnp.dot(hb_ref[t], lwb, preferred_element_type=jnp.float32)
                + lb)                                 # (B, LP)

    e0 = emit(0)
    emis_ref[0] = e0
    delta_sc[...] = start_ref[...] + e0               # (B, LP)
    bp_sc[0] = iota_l                                 # identity backpointers

    def fwd(t, carry):
        e = emit(t)
        emis_ref[t] = e
        cand = delta_sc[...][:, None, :] + trans_t                   # (B, LP, LP)
        best = jnp.max(cand, axis=-1)                                # (B, LP)
        bp = jnp.min(jnp.where(cand >= best[:, :, None], iota_3, LP),
                     axis=-1).astype(jnp.int32)                      # first-argmax
        new_delta = best + e
        m = mask_ref[t] > 0.5                                        # (B, 1)
        delta_sc[...] = jnp.where(m, new_delta, delta_sc[...])
        bp_sc[t] = jnp.where(m, bp, iota_l)
        return carry

    lax.fori_loop(1, T, fwd, 0)

    score = delta_sc[...] + end_ref[...]
    best = jnp.max(score, axis=-1, keepdims=True)
    tag0 = jnp.min(jnp.where(score >= best, iota_l, LP),
                   axis=-1, keepdims=True).astype(jnp.int32)          # (B, 1)

    def back(s, tag):
        t = T - 1 - s
        path_ref[t] = tag
        sel = iota_l == tag                                           # one-hot gather
        prev = jnp.sum(jnp.where(sel, bp_sc[t], 0),
                       axis=-1, keepdims=True).astype(jnp.int32)
        return prev

    lax.fori_loop(0, T, back, tag0)


# ============================ thin Pallas wrappers ============================

def layernorm(x, g, b):
    M, D = x.shape
    return pl.pallas_call(
        layernorm_kernel,
        out_shape=jax.ShapeDtypeStruct((M, D), jnp.float32),
        grid=(1,),
        in_specs=[_fs((M, D)), _fs((1, D)), _fs((1, D))],
        out_specs=_fs((M, D)),
    )(x, g, b)


def encoder_layer(x, key_bias, lyr):
    BT, H = x.shape
    B = key_bias.shape[0]
    T = BT // B
    kernel = functools.partial(encoder_layer_kernel,
                               num_heads=NUM_HEADS, head_dim=HEAD_DIM)
    return pl.pallas_call(
        kernel,
        out_shape=jax.ShapeDtypeStruct((BT, H), jnp.float32),
        grid=(B,),
        in_specs=[
            pl.BlockSpec((T, H), lambda b: (b, 0)),          # x rows of this batch
            pl.BlockSpec((1, 1, T), lambda b: (b, 0, 0)),    # key mask bias
            _fs((NUM_HEADS, H, HEAD_DIM)), _fs((NUM_HEADS, 1, HEAD_DIM)),   # wq, bq
            _fs((NUM_HEADS, H, HEAD_DIM)), _fs((NUM_HEADS, 1, HEAD_DIM)),   # wk, bk
            _fs((NUM_HEADS, H, HEAD_DIM)), _fs((NUM_HEADS, 1, HEAD_DIM)),   # wv, bv
            _fs((NUM_HEADS, HEAD_DIM, H)), _fs((1, H)),                      # wo, bo
            _fs((1, H)), _fs((1, H)),                                        # ln1 g/b
            _fs((H, INTERMEDIATE)), _fs((1, INTERMEDIATE)),                  # wi, bi
            _fs((INTERMEDIATE, H)), _fs((1, H)),                             # wff, bff
            _fs((1, H)), _fs((1, H)),                                        # ln2 g/b
        ],
        out_specs=pl.BlockSpec((T, H), lambda b: (b, 0)),
        compiler_params=pltpu.CompilerParams(dimension_semantics=("parallel",)),
    )(x, key_bias,
      lyr["wq"], lyr["bq"], lyr["wk"], lyr["bk"], lyr["wv"], lyr["bv"],
      lyr["wo"], lyr["bo"], lyr["ln1_g"], lyr["ln1_b"],
      lyr["wi"], lyr["bi"], lyr["wff"], lyr["bff"],
      lyr["ln2_g"], lyr["ln2_b"])


def bilstm(x_tm, lp):
    T, B, Din = x_tm.shape
    return pl.pallas_call(
        bilstm_kernel,
        out_shape=(jax.ShapeDtypeStruct((T, B, LSTM_H), jnp.float32),
                   jax.ShapeDtypeStruct((T, B, LSTM_H), jnp.float32)),
        grid=(1,),
        in_specs=[_fs((T, B, Din)),
                  _fs((Din, 4 * LSTM_H)), _fs((LSTM_H, 4 * LSTM_H)), _fs((1, 4 * LSTM_H)),
                  _fs((Din, 4 * LSTM_H)), _fs((LSTM_H, 4 * LSTM_H)), _fs((1, 4 * LSTM_H))],
        out_specs=(_fs((T, B, LSTM_H)), _fs((T, B, LSTM_H))),
        scratch_shapes=[pltpu.VMEM((B, LSTM_H), jnp.float32)] * 4,
    )(x_tm, lp["wih_f"], lp["whh_f"], lp["bias_f"],
      lp["wih_b"], lp["whh_b"], lp["bias_b"])


def crf_decode(h_f, h_b, mask_tm, fp):
    T, B, H = h_f.shape
    LP = LABEL_PAD
    return pl.pallas_call(
        crf_kernel,
        out_shape=(jax.ShapeDtypeStruct((T, B, 1), jnp.int32),
                   jax.ShapeDtypeStruct((T, B, LP), jnp.float32)),
        grid=(1,),
        in_specs=[_fs((T, B, H)), _fs((T, B, H)),
                  _fs((H, LP)), _fs((H, LP)), _fs((1, LP)),
                  _fs((T, B, 1)),
                  _fs((LP, LP)), _fs((1, LP)), _fs((1, LP))],
        out_specs=(_fs((T, B, 1)), _fs((T, B, LP))),
        scratch_shapes=[pltpu.VMEM((B, LP), jnp.float32),
                        pltpu.VMEM((T, B, LP), jnp.int32)],
    )(h_f, h_b, fp["lw_f"], fp["lw_b"], fp["lin_b"], mask_tm,
      fp["crf_trans_t"], fp["crf_start"], fp["crf_end"])


# ============================== parameter setup ==============================

def init_params(key):
    keys = iter(jax.random.split(key, 64))

    def nrm(shape, std=0.02):
        return jax.random.normal(next(keys), shape, jnp.float32) * std

    def uni(shape, lo=-0.1, hi=0.1):
        return jax.random.uniform(next(keys), shape, jnp.float32, lo, hi)

    params = {
        "word_emb": nrm((VOCAB, HIDDEN)),
        "pos_emb": nrm((MAX_SEQ_LEN, HIDDEN)),
        "type_emb": nrm((2, HIDDEN)),
        "emb_ln_g": jnp.ones((HIDDEN,), jnp.float32),
        "emb_ln_b": jnp.zeros((HIDDEN,), jnp.float32),
        "layers": [],
    }
    for _ in range(NUM_LAYERS):
        params["layers"].append({
            "wq": nrm((HIDDEN, HIDDEN)), "bq": nrm((HIDDEN,)),
            "wk": nrm((HIDDEN, HIDDEN)), "bk": nrm((HIDDEN,)),
            "wv": nrm((HIDDEN, HIDDEN)), "bv": nrm((HIDDEN,)),
            "wo": nrm((HIDDEN, HIDDEN)), "bo": nrm((HIDDEN,)),
            "ln1_g": jnp.ones((HIDDEN,), jnp.float32),
            "ln1_b": jnp.zeros((HIDDEN,), jnp.float32),
            "wi": nrm((HIDDEN, INTERMEDIATE)), "bi": nrm((INTERMEDIATE,)),
            "wff": nrm((INTERMEDIATE, HIDDEN)), "bff": nrm((HIDDEN,)),
            "ln2_g": jnp.ones((HIDDEN,), jnp.float32),
            "ln2_b": jnp.zeros((HIDDEN,), jnp.float32),
        })
    params["lstm"] = {
        # stored already transposed: (in, 4H) / (H, 4H); gate order i,f,g,o
        "wih_f": nrm((HIDDEN, 4 * LSTM_H)), "bih_f": nrm((4 * LSTM_H,)),
        "whh_f": nrm((LSTM_H, 4 * LSTM_H)), "bhh_f": nrm((4 * LSTM_H,)),
        "wih_b": nrm((HIDDEN, 4 * LSTM_H)), "bih_b": nrm((4 * LSTM_H,)),
        "whh_b": nrm((LSTM_H, 4 * LSTM_H)), "bhh_b": nrm((4 * LSTM_H,)),
    }
    params["lin_w"] = nrm((2 * LSTM_H, NUM_LABELS))
    params["lin_b"] = nrm((NUM_LABELS,))
    params["crf"] = {"start": uni((NUM_LABELS,)),
                     "end": uni((NUM_LABELS,)),
                     "trans": uni((NUM_LABELS, NUM_LABELS))}
    return params


def prepare_params(p):
    """One-time repack of the torch-style params into the fused-kernel layout."""
    fp = {
        "word_emb": p["word_emb"],
        "pos_emb": p["pos_emb"],
        "type_emb": p["type_emb"],
        "emb_ln_g": p["emb_ln_g"].reshape(1, HIDDEN),
        "emb_ln_b": p["emb_ln_b"].reshape(1, HIDDEN),
        "layers": [],
    }
    for lyr in p["layers"]:
        fp["layers"].append({
            # per-head weight layout: (nh, H, dh) so the kernel only needs
            # leading-dim indexing (no sub-lane slicing in VMEM).
            "wq": lyr["wq"].reshape(HIDDEN, NUM_HEADS, HEAD_DIM).transpose(1, 0, 2),
            "bq": lyr["bq"].reshape(NUM_HEADS, 1, HEAD_DIM),
            "wk": lyr["wk"].reshape(HIDDEN, NUM_HEADS, HEAD_DIM).transpose(1, 0, 2),
            "bk": lyr["bk"].reshape(NUM_HEADS, 1, HEAD_DIM),
            "wv": lyr["wv"].reshape(HIDDEN, NUM_HEADS, HEAD_DIM).transpose(1, 0, 2),
            "bv": lyr["bv"].reshape(NUM_HEADS, 1, HEAD_DIM),
            "wo": lyr["wo"].reshape(NUM_HEADS, HEAD_DIM, HIDDEN),
            "bo": lyr["bo"].reshape(1, HIDDEN),
            "ln1_g": lyr["ln1_g"].reshape(1, HIDDEN),
            "ln1_b": lyr["ln1_b"].reshape(1, HIDDEN),
            "wi": lyr["wi"], "bi": lyr["bi"].reshape(1, INTERMEDIATE),
            "wff": lyr["wff"], "bff": lyr["bff"].reshape(1, HIDDEN),
            "ln2_g": lyr["ln2_g"].reshape(1, HIDDEN),
            "ln2_b": lyr["ln2_b"].reshape(1, HIDDEN),
        })
    lp = p["lstm"]
    fp["lstm"] = {
        "wih_f": lp["wih_f"], "whh_f": lp["whh_f"],
        "bias_f": (lp["bih_f"] + lp["bhh_f"]).reshape(1, 4 * LSTM_H),
        "wih_b": lp["wih_b"], "whh_b": lp["whh_b"],
        "bias_b": (lp["bih_b"] + lp["bhh_b"]).reshape(1, 4 * LSTM_H),
    }
    # emission head padded to LABEL_PAD lanes: zero weight cols, -1e9 bias for pad labels
    lwp = jnp.pad(p["lin_w"], ((0, 0), (0, LABEL_PAD - NUM_LABELS)))
    fp["lw_f"] = lwp[:LSTM_H]
    fp["lw_b"] = lwp[LSTM_H:]
    fp["lin_b"] = (jnp.full((LABEL_PAD,), NEG, jnp.float32)
                   .at[:NUM_LABELS].set(p["lin_b"]).reshape(1, LABEL_PAD))
    crf = p["crf"]
    fp["crf_start"] = (jnp.full((LABEL_PAD,), NEG, jnp.float32)
                       .at[:NUM_LABELS].set(crf["start"]).reshape(1, LABEL_PAD))
    fp["crf_end"] = (jnp.full((LABEL_PAD,), NEG, jnp.float32)
                     .at[:NUM_LABELS].set(crf["end"]).reshape(1, LABEL_PAD))
    trans_p = (jnp.full((LABEL_PAD, LABEL_PAD), NEG, jnp.float32)
               .at[:NUM_LABELS, :NUM_LABELS].set(crf["trans"]))
    fp["crf_trans_t"] = trans_p.T
    return fp


# ================================ forward pass ===============================

def _forward(fp, input_ids, attention_mask):
    B, T = input_ids.shape
    mask_f = attention_mask.astype(jnp.float32)
    # additive attention mask bias, computed once per forward
    key_bias = ((1.0 - mask_f) * -10000.0).reshape(B, 1, T)

    # --- BERT embeddings (gather is XLA glue; LN is a Pallas kernel) ---
    x = (fp["word_emb"][input_ids]
         + fp["pos_emb"][None, :T, :]
         + fp["type_emb"][0][None, None, :])
    x = layernorm(x.reshape(B * T, HIDDEN), fp["emb_ln_g"], fp["emb_ln_b"])

    # --- BERT encoder: one fused Pallas kernel per layer, grid over batch ---
    for lyr in fp["layers"]:
        x = encoder_layer(x, key_bias, lyr)

    # --- BiLSTM: both directions + input projection fused in one kernel ---
    x_tm = x.reshape(B, T, HIDDEN).transpose(1, 0, 2)          # (T, B, H) time-major
    h_f, h_b = bilstm(x_tm, fp["lstm"])                         # each (T, B, 128)

    # --- fused emission head + CRF Viterbi decode ---
    mask_tm = mask_f.T[:, :, None]                              # (T, B, 1)
    path, emis = crf_decode(h_f, h_b, mask_tm, fp)
    tags = path[:, :, 0].T                                      # (B, T); padded steps repeat last valid tag
    emissions = emis[:, :, :NUM_LABELS].transpose(1, 0, 2)      # (B, T, 9)

    # TODO(synk): CRF negative log-likelihood (training loss) not implemented;
    # the reference forward only computes it when labels is not None (loss=None here).
    return {"logits": tags, "labels": None, "loss": None, "emissions": emissions}


bert_ner_forward = jax.jit(_forward)


# ==================================== main ===================================

if __name__ == "__main__":
    key = jax.random.PRNGKey(0)
    k_param, k_ids = jax.random.split(key)
    params = init_params(k_param)
    fused_params = prepare_params(params)

    input_ids = jax.random.randint(k_ids, (BATCH, MAX_SEQ_LEN), 0, VOCAB, jnp.int32)
    attention_mask = jnp.array(
        [[1] * MAX_SEQ_LEN,
         [1] * 5 + [0] * (MAX_SEQ_LEN - 5)], dtype=jnp.int32)

    out = bert_ner_forward(fused_params, input_ids, attention_mask)
    jax.block_until_ready(out["logits"])
    jax.block_until_ready(out["emissions"])
    assert out["logits"].shape == (BATCH, MAX_SEQ_LEN)
    assert out["emissions"].shape == (BATCH, MAX_SEQ_LEN, NUM_LABELS)
    assert bool(jnp.all(out["logits"] >= 0)) and bool(jnp.all(out["logits"] < NUM_LABELS))
    print("KERNEL_OK")
</pallas_src>

<mosaic_0001>
module attributes {stable_mosaic.version = 11 : i64} {
  func.func @layernorm_kernel(%arg0: i32, %arg1: memref<16x32xf32, #tpu.memory_space<vmem>>, %arg2: memref<1x32xf32, #tpu.memory_space<vmem>>, %arg3: memref<1x32xf32, #tpu.memory_space<vmem>>, %arg4: memref<16x32xf32, #tpu.memory_space<vmem>>) attributes {dimension_semantics = [#tpu.dimension_semantics<arbitrary>], iteration_bounds = array<i64: 1>, scalar_prefetch = 0 : i64, scratch_operands = 0 : i64, tpu.core_type = #tpu.core_type<tc>, window_params = [{pipeline_mode = #tpu.pipeline_mode<synchronous>, transform_indices = @transform_0, window_bounds = array<i64: 16, 32>}, {pipeline_mode = #tpu.pipeline_mode<synchronous>, transform_indices = @transform_1, window_bounds = array<i64: 1, 32>}, {pipeline_mode = #tpu.pipeline_mode<synchronous>, transform_indices = @transform_2, window_bounds = array<i64: 1, 32>}, {pipeline_mode = #tpu.pipeline_mode<synchronous>, transform_indices = @transform_3, window_bounds = array<i64: 16, 32>}]} {
    %c0 = arith.constant 0 : index
    %c0_0 = arith.constant 0 : index
    %0 = vector.load %arg1[%c0, %c0_0] : memref<16x32xf32, #tpu.memory_space<vmem>>, vector<16x32xf32>
    %c0_1 = arith.constant 0 : index
    %c0_2 = arith.constant 0 : index
    %1 = vector.load %arg2[%c0_1, %c0_2] : memref<1x32xf32, #tpu.memory_space<vmem>>, vector<1x32xf32>
    %c0_3 = arith.constant 0 : index
    %c0_4 = arith.constant 0 : index
    %2 = vector.load %arg3[%c0_3, %c0_4] : memref<1x32xf32, #tpu.memory_space<vmem>>, vector<1x32xf32>
    %cst = arith.constant dense<0.000000e+00> : vector<16xf32>
    %3 = vector.multi_reduction <add>, %0, %cst [1] : vector<16x32xf32> to vector<16xf32>
    %4 = vector.shape_cast %3 : vector<16xf32> to vector<16x1xf32>
    %cst_5 = arith.constant 3.200000e+01 : f32
    %5 = vector.broadcast %cst_5 : f32 to vector<16x1xf32>
    %6 = arith.divf %4, %5 : vector<16x1xf32>
    %7 = vector.broadcast %6 : vector<16x1xf32> to vector<16x32xf32>
    %8 = arith.subf %0, %7 : vector<16x32xf32>
    %9 = arith.mulf %8, %8 : vector<16x32xf32>
    %cst_6 = arith.constant dense<0.000000e+00> : vector<16xf32>
    %10 = vector.multi_reduction <add>, %9, %cst_6 [1] : vector<16x32xf32> to vector<16xf32>
    %11 = vector.shape_cast %10 : vector<16xf32> to vector<16x1xf32>
    %cst_7 = arith.constant 3.200000e+01 : f32
    %12 = vector.broadcast %cst_7 : f32 to vector<16x1xf32>
    %13 = arith.divf %11, %12 : vector<16x1xf32>
    %14 = vector.broadcast %6 : vector<16x1xf32> to vector<16x32xf32>
    %15 = arith.subf %0, %14 : vector<16x32xf32>
    %cst_8 = arith.constant 9.99999996E-13 : f32
    %16 = vector.broadcast %cst_8 : f32 to vector<16x1xf32>
    %17 = arith.addf %13, %16 : vector<16x1xf32>
    %18 = math.rsqrt %17 : vector<16x1xf32>
    %19 = vector.broadcast %18 : vector<16x1xf32> to vector<16x32xf32>
    %20 = arith.mulf %15, %19 : vector<16x32xf32>
    %21 = vector.broadcast %1 : vector<1x32xf32> to vector<16x32xf32>
    %22 = arith.mulf %20, %21 : vector<16x32xf32>
    %23 = vector.broadcast %2 : vector<1x32xf32> to vector<16x32xf32>
    %24 = arith.addf %22, %23 : vector<16x32xf32>
    %c0_9 = arith.constant 0 : index
    %c0_10 = arith.constant 0 : index
    %25 = vector.load %arg4[%c0_9, %c0_10] : memref<16x32xf32, #tpu.memory_space<vmem>>, vector<16x32xf32>
    tpu.vector_store %arg4[%c0_9, %c0_10], %24 {strides = array<i32>} : memref<16x32xf32, #tpu.memory_space<vmem>>, vector<16x32xf32>,
    return
  }
  func.func @transform_0(%arg0: i32) -> (i32, i32) {
    %c0_i32 = arith.constant 0 : i32
    %c0_i32_0 = arith.constant 0 : i32
    %c0_i32_1 = arith.constant 0 : i32
    return %c0_i32, %c0_i32_0 : i32, i32
  }
  func.func @transform_1(%arg0: i32) -> (i32, i32) {
    %c0_i32 = arith.constant 0 : i32
    %c0_i32_0 = arith.constant 0 : i32
    %c0_i32_1 = arith.constant 0 : i32
    return %c0_i32, %c0_i32_0 : i32, i32
  }
  func.func @transform_2(%arg0: i32) -> (i32, i32) {
    %c0_i32 = arith.constant 0 : i32
    %c0_i32_0 = arith.constant 0 : i32
    %c0_i32_1 = arith.constant 0 : i32
    return %c0_i32, %c0_i32_0 : i32, i32
  }
  func.func @transform_3(%arg0: i32) -> (i32, i32) {
    %c0_i32 = arith.constant 0 : i32
    %c0_i32_0 = arith.constant 0 : i32
    %c0_i32_1 = arith.constant 0 : i32
    return %c0_i32, %c0_i32_0 : i32, i32
  }
}

module attributes {stable_mosaic.version = 11 : i64} {
  func.func @encoder_layer_kernel(%arg0: i32, %arg1: memref<8x32xf32, #tpu.memory_space<vmem>>, %arg2: memref<1x1x8xf32, #tpu.memory_space<vmem>>, %arg3: memref<4x32x8xf32, #tpu.memory_space<vmem>>, %arg4: memref<4x1x8xf32, #tpu.memory_space<vmem>>, %arg5: memref<4x32x8xf32, #tpu.memory_space<vmem>>, %arg6: memref<4x1x8xf32, #tpu.memory_space<vmem>>, %arg7: memref<4x32x8xf32, #tpu.memory_space<vmem>>, %arg8: memref<4x1x8xf32, #tpu.memory_space<vmem>>, %arg9: memref<4x8x32xf32, #tpu.memory_space<vmem>>, %arg10: memref<1x32xf32, #tpu.memory_space<vmem>>, %arg11: memref<1x32xf32, #tpu.memory_space<vmem>>, %arg12: memref<1x32xf32, #tpu.memory_space<vmem>>, %arg13: memref<32x64xf32, #tpu.memory_space<vmem>>, %arg14: memref<1x64xf32, #tpu.memory_space<vmem>>, %arg15: memref<64x32xf32, #tpu.memory_space<vmem>>, %arg16: memref<1x32xf32, #tpu.memory_space<vmem>>, %arg17: memref<1x32xf32, #tpu.memory_space<vmem>>, %arg18: memref<1x32xf32, #tpu.memory_space<vmem>>, %arg19: memref<8x32xf32, #tpu.memory_space<vmem>>) attributes {dimension_semantics = [#tpu.dimension_semantics<parallel>], iteration_bounds = array<i64: 2>, scalar_prefetch = 0 : i64, scratch_operands = 0 : i64, tpu.core_type = #tpu.core_type<tc>, window_params = [{transform_indices = @transform_0, window_bounds = array<i64: 8, 32>}, {transform_indices = @transform_1, window_bounds = array<i64: 1, 1, 8>}, {pipeline_mode = #tpu.pipeline_mode<synchronous>, transform_indices = @transform_2, window_bounds = array<i64: 4, 32, 8>}, {pipeline_mode = #tpu.pipeline_mode<synchronous>, transform_indices = @transform_3, window_bounds = array<i64: 4, 1, 8>}, {pipeline_mode = #tpu.pipeline_mode<synchronous>, transform_indices = @transform_4, window_bounds = array<i64: 4, 32, 8>}, {pipeline_mode = #tpu.pipeline_mode<synchronous>, transform_indices = @transform_5, window_bounds = array<i64: 4, 1, 8>}, {pipeline_mode = #tpu.pipeline_mode<synchronous>, transform_indices = @transform_6, window_bounds = array<i64: 4, 32, 8>}, {pipeline_mode = #tpu.pipeline_mode<synchronous>, transform_indices = @transform_7, window_bounds = array<i64: 4, 1, 8>}, {pipeline_mode = #tpu.pipeline_mode<synchronous>, transform_indices = @transform_8, window_bounds = array<i64: 4, 8, 32>}, {pipeline_mode = #tpu.pipeline_mode<synchronous>, transform_indices = @transform_9, window_bounds = array<i64: 1, 32>}, {pipeline_mode = #tpu.pipeline_mode<synchronous>, transform_indices = @transform_10, window_bounds = array<i64: 1, 32>}, {pipeline_mode = #tpu.pipeline_mode<synchronous>, transform_indices = @transform_11, window_bounds = array<i64: 1, 32>}, {pipeline_mode = #tpu.pipeline_mode<synchronous>, transform_indices = @transform_12, window_bounds = array<i64: 32, 64>}, {pipeline_mode = #tpu.pipeline_mode<synchronous>, transform_indices = @transform_13, window_bounds = array<i64: 1, 64>}, {pipeline_mode = #tpu.pipeline_mode<synchronous>, transform_indices = @transform_14, window_bounds = array<i64: 64, 32>}, {pipeline_mode = #tpu.pipeline_mode<synchronous>, transform_indices = @transform_15, window_bounds = array<i64: 1, 32>}, {pipeline_mode = #tpu.pipeline_mode<synchronous>, transform_indices = @transform_16, window_bounds = array<i64: 1, 32>}, {pipeline_mode = #tpu.pipeline_mode<synchronous>, transform_indices = @transform_17, window_bounds = array<i64: 1, 32>}, {transform_indices = @transform_18, window_bounds = array<i64: 8, 32>}]} {
    %c0 = arith.constant 0 : index
    %c0_0 = arith.constant 0 : index
    %0 = vector.load %arg1[%c0, %c0_0] : memref<8x32xf32, #tpu.memory_space<vmem>>, vector<8x32xf32>
    %c0_1 = arith.constant 0 : index
    %c0_2 = arith.constant 0 : index
    %c0_3 = arith.constant 0 : index
    %1 = vector.load %arg2[%c0_1, %c0_2, %c0_3] : memref<1x1x8xf32, #tpu.memory_space<vmem>>, vector<1x1x8xf32>
    %2 = vector.shape_cast %1 : vector<1x1x8xf32> to vector<1x8xf32>
    %cst = arith.constant 0.000000e+00 : f32
    %3 = vector.broadcast %cst : f32 to vector<8x32xf32>
    %c0_4 = arith.constant 0 : index
    %c0_5 = arith.constant 0 : index
    %c0_6 = arith.constant 0 : index
    %4 = vector.load %arg3[%c0_4, %c0_5, %c0_6] : memref<4x32x8xf32, #tpu.memory_space<vmem>>, vector<1x32x8xf32>
    %5 = vector.shape_cast %4 : vector<1x32x8xf32> to vector<32x8xf32>
    %cst_7 = arith.constant dense<0.000000e+00> : vector<8x8xf32>
    %6 = tpu.matmul %0, %5, %cst_7 {dimension_numbers = #tpu.dot_dimension_numbers<[1], [0], [0], [1], [0, 0, 1, 1], [], []>} : vector<8x32xf32>, vector<32x8xf32>, vector<8x8xf32> -> vector<8x8xf32>
    %c0_8 = arith.constant 0 : index
    %c0_9 = arith.constant 0 : index
    %c0_10 = arith.constant 0 : index
    %7 = vector.load %arg4[%c0_8, %c0_9, %c0_10] : memref<4x1x8xf32, #tpu.memory_space<vmem>>, vector<1x1x8xf32>
    %8 = vector.shape_cast %7 : vector<1x1x8xf32> to vector<1x8xf32>
    %9 = vector.broadcast %8 : vector<1x8xf32> to vector<8x8xf32>
    %10 = arith.addf %6, %9 : vector<8x8xf32>
    %c0_11 = arith.constant 0 : index
    %c0_12 = arith.constant 0 : index
    %c0_13 = arith.constant 0 : index
    %11 = vector.load %arg5[%c0_11, %c0_12, %c0_13] : memref<4x32x8xf32, #tpu.memory_space<vmem>>, vector<1x32x8xf32>
    %12 = vector.shape_cast %11 : vector<1x32x8xf32> to vector<32x8xf32>
    %cst_14 = arith.constant dense<0.000000e+00> : vector<8x8xf32>
    %13 = tpu.matmul %0, %12, %cst_14 {dimension_numbers = #tpu.dot_dimension_numbers<[1], [0], [0], [1], [0, 0, 1, 1], [], []>} : vector<8x32xf32>, vector<32x8xf32>, vector<8x8xf32> -> vector<8x8xf32>
    %c0_15 = arith.constant 0 : index
    %c0_16 = arith.constant 0 : index
    %c0_17 = arith.constant 0 : index
    %14 = vector.load %arg6[%c0_15, %c0_16, %c0_17] : memref<4x1x8xf32, #tpu.memory_space<vmem>>, vector<1x1x8xf32>
    %15 = vector.shape_cast %14 : vector<1x1x8xf32> to vector<1x8xf32>
    %16 = vector.broadcast %15 : vector<1x8xf32> to vector<8x8xf32>
    %17 = arith.addf %13, %16 : vector<8x8xf32>
    %c0_18 = arith.constant 0 : index
    %c0_19 = arith.constant 0 : index
    %c0_20 = arith.constant 0 : index
    %18 = vector.load %arg7[%c0_18, %c0_19, %c0_20] : memref<4x32x8xf32, #tpu.memory_space<vmem>>, vector<1x32x8xf32>
    %19 = vector.shape_cast %18 : vector<1x32x8xf32> to vector<32x8xf32>
    %cst_21 = arith.constant dense<0.000000e+00> : vector<8x8xf32>
    %20 = tpu.matmul %0, %19, %cst_21 {dimension_numbers = #tpu.dot_dimension_numbers<[1], [0], [0], [1], [0, 0, 1, 1], [], []>} : vector<8x32xf32>, vector<32x8xf32>, vector<8x8xf32> -> vector<8x8xf32>
    %c0_22 = arith.constant 0 : index
    %c0_23 = arith.constant 0 : index
    %c0_24 = arith.constant 0 : index
    %21 = vector.load %arg8[%c0_22, %c0_23, %c0_24] : memref<4x1x8xf32, #tpu.memory_space<vmem>>, vector<1x1x8xf32>
    %22 = vector.shape_cast %21 : vector<1x1x8xf32> to vector<1x8xf32>
    %23 = vector.broadcast %22 : vector<1x8xf32> to vector<8x8xf32>
    %24 = arith.addf %20, %23 : vector<8x8xf32>
    %25 = tpu.transpose %17, [1, 0] : vector<8x8xf32> -> vector<8x8xf32>
    %cst_25 = arith.constant dense<0.000000e+00> : vector<8x8xf32>
    %26 = tpu.matmul %10, %25, %cst_25 {dimension_numbers = #tpu.dot_dimension_numbers<[1], [0], [0], [1], [0, 0, 1, 1], [], []>} : vector<8x8xf32>, vector<8x8xf32>, vector<8x8xf32> -> vector<8x8xf32>
    %cst_26 = arith.constant 0.353553385 : f32
    %27 = vector.broadcast %cst_26 : f32 to vector<8x8xf32>
    %28 = arith.mulf %26, %27 : vector<8x8xf32>
    %29 = vector.broadcast %2 : vector<1x8xf32> to vector<8x8xf32>
    %30 = arith.addf %28, %29 : vector<8x8xf32>
    %cst_27 = arith.constant dense<0xFF800000> : vector<8xf32>
    %31 = vector.multi_reduction <maximumf>, %30, %cst_27 [1] : vector<8x8xf32> to vector<8xf32>
    %32 = vector.shape_cast %31 : vector<8xf32> to vector<8x1xf32>
    %33 = vector.broadcast %32 : vector<8x1xf32> to vector<8x8xf32>
    %34 = arith.subf %30, %33 : vector<8x8xf32>
    %35 = math.exp %34 : vector<8x8xf32>
    %cst_28 = arith.constant dense<0.000000e+00> : vector<8xf32>
    %36 = vector.multi_reduction <add>, %35, %cst_28 [1] : vector<8x8xf32> to vector<8xf32>
    %37 = vector.shape_cast %36 : vector<8xf32> to vector<8x1xf32>
    %38 = vector.broadcast %37 : vector<8x1xf32> to vector<8x8xf32>
    %39 = arith.divf %35, %38 : vector<8x8xf32>
    %cst_29 = arith.constant dense<0.000000e+00> : vector<8x8xf32>
    %40 = tpu.matmul %39, %24, %cst_29 {dimension_numbers = #tpu.dot_dimension_numbers<[1], [0], [0], [1], [0, 0, 1, 1], [], []>} : vector<8x8xf32>, vector<8x8xf32>, vector<8x8xf32> -> vector<8x8xf32>
    %c0_30 = arith.constant 0 : index
    %c0_31 = arith.constant 0 : index
    %c0_32 = arith.constant 0 : index
    %41 = vector.load %arg9[%c0_30, %c0_31, %c0_32] : memref<4x8x32xf32, #tpu.memory_space<vmem>>, vector<1x8x32xf32>
    %42 = vector.shape_cast %41 : vector<1x8x32xf32> to vector<8x32xf32>
    %cst_33 = arith.constant dense<0.000000e+00> : vector<8x32xf32>
    %43 = tpu.matmul %40, %42, %cst_33 {dimension_numbers = #tpu.dot_dimension_numbers<[1], [0], [0], [1], [0, 0, 1, 1], [], []>} : vector<8x8xf32>, vector<8x32xf32>, vector<8x32xf32> -> vector<8x32xf32>
    %44 = arith.addf %3, %43 : vector<8x32xf32>
    %c1 = arith.constant 1 : index
    %c0_34 = arith.constant 0 : index
    %c0_35 = arith.constant 0 : index
    %45 = vector.load %arg3[%c1, %c0_34, %c0_35] : memref<4x32x8xf32, #tpu.memory_space<vmem>>, vector<1x32x8xf32>
    %46 = vector.shape_cast %45 : vector<1x32x8xf32> to vector<32x8xf32>
    %cst_36 = arith.constant dense<0.000000e+00> : vector<8x8xf32>
    %47 = tpu.matmul %0, %46, %cst_36 {dimension_numbers = #tpu.dot_dimension_numbers<[1], [0], [0], [1], [0, 0, 1, 1], [], []>} : vector<8x32xf32>, vector<32x8xf32>, vector<8x8xf32> -> vector<8x8xf32>
    %c1_37 = arith.constant 1 : index
    %c0_38 = arith.constant 0 : index
    %c0_39 = arith.constant 0 : index
    %48 = vector.load %arg4[%c1_37, %c0_38, %c0_39] : memref<4x1x8xf32, #tpu.memory_space<vmem>>, vector<1x1x8xf32>
    %49 = vector.shape_cast %48 : vector<1x1x8xf32> to vector<1x8xf32>
    %50 = vector.broadcast %49 : vector<1x8xf32> to vector<8x8xf32>
    %51 = arith.addf %47, %50 : vector<8x8xf32>
    %c1_40 = arith.constant 1 : index
    %c0_41 = arith.constant 0 : index
    %c0_42 = arith.constant 0 : index
    %52 = vector.load %arg5[%c1_40, %c0_41, %c0_42] : memref<4x32x8xf32, #tpu.memory_space<vmem>>, vector<1x32x8xf32>
    %53 = vector.shape_cast %52 : vector<1x32x8xf32> to vector<32x8xf32>
    %cst_43 = arith.constant dense<0.000000e+00> : vector<8x8xf32>
    %54 = tpu.matmul %0, %53, %cst_43 {dimension_numbers = #tpu.dot_dimension_numbers<[1], [0], [0], [1], [0, 0, 1, 1], [], []>} : vector<8x32xf32>, vector<32x8xf32>, vector<8x8xf32> -> vector<8x8xf32>
    %c1_44 = arith.constant 1 : index
    %c0_45 = arith.constant 0 : index
    %c0_46 = arith.constant 0 : index
    %55 = vector.load %arg6[%c1_44, %c0_45, %c0_46] : memref<4x1x8xf32, #tpu.memory_space<vmem>>, vector<1x1x8xf32>
    %56 = vector.shape_cast %55 : vector<1x1x8xf32> to vector<1x8xf32>
    %57 = vector.broadcast %56 : vector<1x8xf32> to vector<8x8xf32>
    %58 = arith.addf %54, %57 : vector<8x8xf32>
    %c1_47 = arith.constant 1 : index
    %c0_48 = arith.constant 0 : index
    %c0_49 = arith.constant 0 : index
    %59 = vector.load %arg7[%c1_47, %c0_48, %c0_49] : memref<4x32x8xf32, #tpu.memory_space<vmem>>, vector<1x32x8xf32>
    %60 = vector.shape_cast %59 : vector<1x32x8xf32> to vector<32x8xf32>
    %cst_50 = arith.constant dense<0.000000e+00> : vector<8x8xf32>
    %61 = tpu.matmul %0, %60, %cst_50 {dimension_numbers = #tpu.dot_dimension_numbers<[1], [0], [0], [1], [0, 0, 1, 1], [], []>} : vector<8x32xf32>, vector<32x8xf32>, vector<8x8xf32> -> vector<8x8xf32>
    %c1_51 = arith.constant 1 : index
    %c0_52 = arith.constant 0 : index
    %c0_53 = arith.constant 0 : index
    %62 = vector.load %arg8[%c1_51, %c0_52, %c0_53] : memref<4x1x8xf32, #tpu.memory_space<vmem>>, vector<1x1x8xf32>
    %63 = vector.shape_cast %62 : vector<1x1x8xf32> to vector<1x8xf32>
    %64 = vector.broadcast %63 : vector<1x8xf32> to vector<8x8xf32>
    %65 = arith.addf %61, %64 : vector<8x8xf32>
    %66 = tpu.transpose %58, [1, 0] : vector<8x8xf32> -> vector<8x8xf32>
    %cst_54 = arith.constant dense<0.000000e+00> : vector<8x8xf32>
    %67 = tpu.matmul %51, %66, %cst_54 {dimension_numbers = #tpu.dot_dimension_numbers<[1], [0], [0], [1], [0, 0, 1, 1], [], []>} : vector<8x8xf32>, vector<8x8xf32>, vector<8x8xf32> -> vector<8x8xf32>
    %cst_55 = arith.constant 0.353553385 : f32
    %68 = vector.broadcast %cst_55 : f32 to vector<8x8xf32>
    %69 = arith.mulf %67, %68 : vector<8x8xf32>
    %70 = vector.broadcast %2 : vector<1x8xf32> to vector<8x8xf32>
    %71 = arith.addf %69, %70 : vector<8x8xf32>
    %cst_56 = arith.constant dense<0xFF800000> : vector<8xf32>
    %72 = vector.multi_reduction <maximumf>, %71, %cst_56 [1] : vector<8x8xf32> to vector<8xf32>
    %73 = vector.shape_cast %72 : vector<8xf32> to vector<8x1xf32>
    %74 = vector.broadcast %73 : vector<8x1xf32> to vector<8x8xf32>
    %75 = arith.subf %71, %74 : vector<8x8xf32>
    %76 = math.exp %75 : vector<8x8xf32>
    %cst_57 = arith.constant dense<0.000000e+00> : vector<8xf32>
    %77 = vector.multi_reduction <add>, %76, %cst_57 [1] : vector<8x8xf32> to vector<8xf32>
    %78 = vector.shape_cast %77 : vector<8xf32> to vector<8x1xf32>
    %79 = vector.broadcast %78 : vector<8x1xf32> to vector<8x8xf32>
    %80 = arith.divf %76, %79 : vector<8x8xf32>
    %cst_58 = arith.constant dense<0.000000e+00> : vector<8x8xf32>
    %81 = tpu.matmul %80, %65, %cst_58 {dimension_numbers = #tpu.dot_dimension_numbers<[1], [0], [0], [1], [0, 0, 1, 1], [], []>} : vector<8x8xf32>, vector<8x8xf32>, vector<8x8xf32> -> vector<8x8xf32>
    %c1_59 = arith.constant 1 : index
    %c0_60 = arith.constant 0 : index
    %c0_61 = arith.constant 0 : index
    %82 = vector.load %arg9[%c1_59, %c0_60, %c0_61] : memref<4x8x32xf32, #tpu.memory_space<vmem>>, vector<1x8x32xf32>
    %83 = vector.shape_cast %82 : vector<1x8x32xf32> to vector<8x32xf32>
    %cst_62 = arith.constant dense<0.000000e+00> : vector<8x32xf32>
    %84 = tpu.matmul %81, %83, %cst_62 {dimension_numbers = #tpu.dot_dimension_numbers<[1], [0], [0], [1], [0, 0, 1, 1], [], []>} : vector<8x8xf32>, vector<8x32xf32>, vector<8x32xf32> -> vector<8x32xf32>
    %85 = arith.addf %44, %84 : vector<8x32xf32>
    %c2 = arith.constant 2 : index
    %c0_63 = arith.constant 0 : index
    %c0_64 = arith.constant 0 : index
    %86 = vector.load %arg3[%c2, %c0_63, %c0_64] : memref<4x32x8xf32, #tpu.memory_space<vmem>>, vector<1x32x8xf32>
    %87 = vector.shape_cast %86 : vector<1x32x8xf32> to vector<32x8xf32>
    %cst_65 = arith.constant dense<0.000000e+00> : vector<8x8xf32>
    %88 = tpu.matmul %0, %87, %cst_65 {dimension_numbers = #tpu.dot_dimension_numbers<[1], [0], [0], [1], [0, 0, 1, 1], [], []>} : vector<8x32xf32>, vector<32x8xf32>, vector<8x8xf32> -> vector<8x8xf32>
    %c2_66 = arith.constant 2 : index
    %c0_67 = arith.constant 0 : index
    %c0_68 = arith.constant 0 : index
    %89 = vector.load %arg4[%c2_66, %c0_67, %c0_68] : memref<4x1x8xf32, #tpu.memory_space<vmem>>, vector<1x1x8xf32>
    %90 = vector.shape_cast %89 : vector<1x1x8xf32> to vector<1x8xf32>
    %91 = vector.broadcast %90 : vector<1x8xf32> to vector<8x8xf32>
    %92 = arith.addf %88, %91 : vector<8x8xf32>
    %c2_69 = arith.constant 2 : index
    %c0_70 = arith.constant 0 : index
    %c0_71 = arith.constant 0 : index
    %93 = vector.load %arg5[%c2_69, %c0_70, %c0_71] : memref<4x32x8xf32, #tpu.memory_space<vmem>>, vector<1x32x8xf32>
    %94 = vector.shape_cast %93 : vector<1x32x8xf32> to vector<32x8xf32>
    %cst_72 = arith.constant dense<0.000000e+00> : vector<8x8xf32>
    %95 = tpu.matmul %0, %94, %cst_72 {dimension_numbers = #tpu.dot_dimension_numbers<[1], [0], [0], [1], [0, 0, 1, 1], [], []>} : vector<8x32xf32>, vector<32x8xf32>, vector<8x8xf32> -> vector<8x8xf32>
    %c2_73 = arith.constant 2 : index
    %c0_74 = arith.constant 0 : index
    %c0_75 = arith.constant 0 : index
    %96 = vector.load %arg6[%c2_73, %c0_74, %c0_75] : memref<4x1x8xf32, #tpu.memory_space<vmem>>, vector<1x1x8xf32>
    %97 = vector.shape_cast %96 : vector<1x1x8xf32> to vector<1x8xf32>
    %98 = vector.broadcast %97 : vector<1x8xf32> to vector<8x8xf32>
    %99 = arith.addf %95, %98 : vector<8x8xf32>
    %c2_76 = arith.constant 2 : index
    %c0_77 = arith.constant 0 : index
    %c0_78 = arith.constant 0 : index
    %100 = vector.load %arg7[%c2_76, %c0_77, %c0_78] : memref<4x32x8xf32, #tpu.memory_space<vmem>>, vector<1x32x8xf32>
    %101 = vector.shape_cast %100 : vector<1x32x8xf32> to vector<32x8xf32>
    %cst_79 = arith.constant dense<0.000000e+00> : vector<8x8xf32>
    %102 = tpu.matmul %0, %101, %cst_79 {dimension_numbers = #tpu.dot_dimension_numbers<[1], [0], [0], [1], [0, 0, 1, 1], [], []>} : vector<8x32xf32>, vector<32x8xf32>, vector<8x8xf32> -> vector<8x8xf32>
    %c2_80 = arith.constant 2 : index
    %c0_81 = arith.constant 0 : index
    %c0_82 = arith.constant 0 : index
    %103 = vector.load %arg8[%c2_80, %c0_81, %c0_82] : memref<4x1x8xf32, #tpu.memory_space<vmem>>, vector<1x1x8xf32>
    %104 = vector.shape_cast %103 : vector<1x1x8xf32> to vector<1x8xf32>
    %105 = vector.broadcast %104 : vector<1x8xf32> to vector<8x8xf32>
    %106 = arith.addf %102, %105 : vector<8x8xf32>
    %107 = tpu.transpose %99, [1, 0] : vector<8x8xf32> -> vector<8x8xf32>
    %cst_83 = arith.constant dense<0.000000e+00> : vector<8x8xf32>
    %108 = tpu.matmul %92, %107, %cst_83 {dimension_numbers = #tpu.dot_dimension_numbers<[1], [0], [0], [1], [0, 0, 1, 1], [], []>} : vector<8x8xf32>, vector<8x8xf32>, vector<8x8xf32> -> vector<8x8xf32>
    %cst_84 = arith.constant 0.353553385 : f32
    %109 = vector.broadcast %cst_84 : f32 to vector<8x8xf32>
    %110 = arith.mulf %108, %109 : vector<8x8xf32>
    %111 = vector.broadcast %2 : vector<1x8xf32> to vector<8x8xf32>
    %112 = arith.addf %110, %111 : vector<8x8xf32>
    %cst_85 = arith.constant dense<0xFF800000> : vector<8xf32>
    %113 = vector.multi_reduction <maximumf>, %112, %cst_85 [1] : vector<8x8xf32> to vector<8xf32>
    %114 = vector.shape_cast %113 : vector<8xf32> to vector<8x1xf32>
    %115 = vector.broadcast %114 : vector<8x1xf32> to vector<8x8xf32>
    %116 = arith.subf %112, %115 : vector<8x8xf32>
    %117 = math.exp %116 : vector<8x8xf32>
    %cst_86 = arith.constant dense<0.000000e+00> : vector<8xf32>
    %118 = vector.multi_reduction <add>, %117, %cst_86 [1] : vector<8x8xf32> to vector<8xf32>
    %119 = vector.shape_cast %118 : vector<8xf32> to vector<8x1xf32>
    %120 = vector.broadcast %119 : vector<8x1xf32> to vector<8x8xf32>
    %121 = arith.divf %117, %120 : vector<8x8xf32>
    %cst_87 = arith.constant dense<0.000000e+00> : vector<8x8xf32>
    %122 = tpu.matmul %121, %106, %cst_87 {dimension_numbers = #tpu.dot_dimension_numbers<[1], [0], [0], [1], [0, 0, 1, 1], [], []>} : vector<8x8xf32>, vector<8x8xf32>, vector<8x8xf32> -> vector<8x8xf32>
    %c2_88 = arith.constant 2 : index
    %c0_89 = arith.constant 0 : index
    %c0_90 = arith.constant 0 : index
    %123 = vector.load %arg9[%c2_88, %c0_89, %c0_90] : memref<4x8x32xf32, #tpu.memory_space<vmem>>, vector<1x8x32xf32>
    %124 = vector.shape_cast %123 : vector<1x8x32xf32> to vector<8x32xf32>
    %cst_91 = arith.constant dense<0.000000e+00> : vector<8x32xf32>
    %125 = tpu.matmul %122, %124, %cst_91 {dimension_numbers = #tpu.dot_dimension_numbers<[1], [0], [0], [1], [0, 0, 1, 1], [], []>} : vector<8x8xf32>, vector<8x32xf32>, vector<8x32xf32> -> vector<8x32xf32>
    %126 = arith.addf %85, %125 : vector<8x32xf32>
    %c3 = arith.constant 3 : index
    %c0_92 = arith.constant 0 : index
    %c0_93 = arith.constant 0 : index
    %127 = vector.load %arg3[%c3, %c0_92, %c0_93] : memref<4x32x8xf32, #tpu.memory_space<vmem>>, vector<1x32x8xf32>
    %128 = vector.shape_cast %127 : vector<1x32x8xf32> to vector<32x8xf32>
    %cst_94 = arith.constant dense<0.000000e+00> : vector<8x8xf32>
    %129 = tpu.matmul %0, %128, %cst_94 {dimension_numbers = #tpu.dot_dimension_numbers<[1], [0], [0], [1], [0, 0, 1, 1], [], []>} : vector<8x32xf32>, vector<32x8xf32>, vector<8x8xf32> -> vector<8x8xf32>
    %c3_95 = arith.constant 3 : index
    %c0_96 = arith.constant 0 : index
    %c0_97 = arith.constant 0 : index
    %130 = vector.load %arg4[%c3_95, %c0_96, %c0_97] : memref<4x1x8xf32, #tpu.memory_space<vmem>>, vector<1x1x8xf32>
    %131 = vector.shape_cast %130 : vector<1x1x8xf32> to vector<1x8xf32>
    %132 = vector.broadcast %131 : vector<1x8xf32> to vector<8x8xf32>
    %133 = arith.addf %129, %132 : vector<8x8xf32>
    %c3_98 = arith.constant 3 : index
    %c0_99 = arith.constant 0 : index
    %c0_100 = arith.constant 0 : index
    %134 = vector.load %arg5[%c3_98, %c0_99, %c0_100] : memref<4x32x8xf32, #tpu.memory_space<vmem>>, vector<1x32x8xf32>
    %135 = vector.shape_cast %134 : vector<1x32x8xf32> to vector<32x8xf32>
    %cst_101 = arith.constant dense<0.000000e+00> : vector<8x8xf32>
    %136 = tpu.matmul %0, %135, %cst_101 {dimension_numbers = #tpu.dot_dimension_numbers<[1], [0], [0], [1], [0, 0, 1, 1], [], []>} : vector<8x32xf32>, vector<32x8xf32>, vector<8x8xf32> -> vector<8x8xf32>
    %c3_102 = arith.constant 3 : index
    %c0_103 = arith.constant 0 : index
    %c0_104 = arith.constant 0 : index
    %137 = vector.load %arg6[%c3_102, %c0_103, %c0_104] : memref<4x1x8xf32, #tpu.memory_space<vmem>>, vector<1x1x8xf32>
    %138 = vector.shape_cast %137 : vector<1x1x8xf32> to vector<1x8xf32>
    %139 = vector.broadcast %138 : vector<1x8xf32> to vector<8x8xf32>
    %140 = arith.addf %136, %139 : vector<8x8xf32>
    %c3_105 = arith.constant 3 : index
    %c0_106 = arith.constant 0 : index
    %c0_107 = arith.constant 0 : index
    %141 = vector.load %arg7[%c3_105, %c0_106, %c0_107] : memref<4x32x8xf32, #tpu.memory_space<vmem>>, vector<1x32x8xf32>
    %142 = vector.shape_cast %141 : vector<1x32x8xf32> to vector<32x8xf32>
    %cst_108 = arith.constant dense<0.000000e+00> : vector<8x8xf32>
    %143 = tpu.matmul %0, %142, %cst_108 {dimension_numbers = #tpu.dot_dimension_numbers<[1], [0], [0], [1], [0, 0, 1, 1], [], []>} : vector<8x32xf32>, vector<32x8xf32>, vector<8x8xf32> -> vector<8x8xf32>
    %c3_109 = arith.constant 3 : index
    %c0_110 = arith.constant 0 : index
    %c0_111 = arith.constant 0 : index
    %144 = vector.load %arg8[%c3_109, %c0_110, %c0_111] : memref<4x1x8xf32, #tpu.memory_space<vmem>>, vector<1x1x8xf32>
    %145 = vector.shape_cast %144 : vector<1x1x8xf32> to vector<1x8xf32>
    %146 = vector.broadcast %145 : vector<1x8xf32> to vector<8x8xf32>
    %147 = arith.addf %143, %146 : vector<8x8xf32>
    %148 = tpu.transpose %140, [1, 0] : vector<8x8xf32> -> vector<8x8xf32>
    %cst_112 = arith.constant dense<0.000000e+00> : vector<8x8xf32>
    %149 = tpu.matmul %133, %148, %cst_112 {dimension_numbers = #tpu.dot_dimension_numbers<[1], [0], [0], [1], [0, 0, 1, 1], [], []>} : vector<8x8xf32>, vector<8x8xf32>, vector<8x8xf32> -> vector<8x8xf32>
    %cst_113 = arith.constant 0.353553385 : f32
    %150 = vector.broadcast %cst_113 : f32 to vector<8x8xf32>
    %151 = arith.mulf %149, %150 : vector<8x8xf32>
    %152 = vector.broadcast %2 : vector<1x8xf32> to vector<8x8xf32>
    %153 = arith.addf %151, %152 : vector<8x8xf32>
    %cst_114 = arith.constant dense<0xFF800000> : vector<8xf32>
    %154 = vector.multi_reduction <maximumf>, %153, %cst_114 [1] : vector<8x8xf32> to vector<8xf32>
    %155 = vector.shape_cast %154 : vector<8xf32> to vector<8x1xf32>
    %156 = vector.broadcast %155 : vector<8x1xf32> to vector<8x8xf32>
    %157 = arith.subf %153, %156 : vector<8x8xf32>
    %158 = math.exp %157 : vector<8x8xf32>
    %cst_115 = arith.constant dense<0.000000e+00> : vector<8xf32>
    %159 = vector.multi_reduction <add>, %158, %cst_115 [1] : vector<8x8xf32> to vector<8xf32>
    %160 = vector.shape_cast %159 : vector<8xf32> to vector<8x1xf32>
    %161 = vector.broadcast %160 : vector<8x1xf32> to vector<8x8xf32>
    %162 = arith.divf %158, %161 : vector<8x8xf32>
    %cst_116 = arith.constant dense<0.000000e+00> : vector<8x8xf32>
    %163 = tpu.matmul %162, %147, %cst_116 {dimension_numbers = #tpu.dot_dimension_numbers<[1], [0], [0], [1], [0, 0, 1, 1], [], []>} : vector<8x8xf32>, vector<8x8xf32>, vector<8x8xf32> -> vector<8x8xf32>
    %c3_117 = arith.constant 3 : index
    %c0_118 = arith.constant 0 : index
    %c0_119 = arith.constant 0 : index
    %164 = vector.load %arg9[%c3_117, %c0_118, %c0_119] : memref<4x8x32xf32, #tpu.memory_space<vmem>>, vector<1x8x32xf32>
    %165 = vector.shape_cast %164 : vector<1x8x32xf32> to vector<8x32xf32>
    %cst_120 = arith.constant dense<0.000000e+00> : vector<8x32xf32>
    %166 = tpu.matmul %163, %165, %cst_120 {dimension_numbers = #tpu.dot_dimension_numbers<[1], [0], [0], [1], [0, 0, 1, 1], [], []>} : vector<8x8xf32>, vector<8x32xf32>, vector<8x32xf32> -> vector<8x32xf32>
    %167 = arith.addf %126, %166 : vector<8x32xf32>
    %c0_121 = arith.constant 0 : index
    %c0_122 = arith.constant 0 : index
    %168 = vector.load %arg10[%c0_121, %c0_122] : memref<1x32xf32, #tpu.memory_space<vmem>>, vector<1x32xf32>
    %169 = vector.broadcast %168 : vector<1x32xf32> to vector<8x32xf32>
    %170 = arith.addf %167, %169 : vector<8x32xf32>
    %171 = arith.addf %0, %170 : vector<8x32xf32>
    %c0_123 = arith.constant 0 : index
    %c0_124 = arith.constant 0 : index
    %172 = vector.load %arg11[%c0_123, %c0_124] : memref<1x32xf32, #tpu.memory_space<vmem>>, vector<1x32xf32>
    %c0_125 = arith.constant 0 : index
    %c0_126 = arith.constant 0 : index
    %173 = vector.load %arg12[%c0_125, %c0_126] : memref<1x32xf32, #tpu.memory_space<vmem>>, vector<1x32xf32>
    %cst_127 = arith.constant dense<0.000000e+00> : vector<8xf32>
    %174 = vector.multi_reduction <add>, %171, %cst_127 [1] : vector<8x32xf32> to vector<8xf32>
    %175 = vector.shape_cast %174 : vector<8xf32> to vector<8x1xf32>
    %cst_128 = arith.constant 3.200000e+01 : f32
    %176 = vector.broadcast %cst_128 : f32 to vector<8x1xf32>
    %177 = arith.divf %175, %176 : vector<8x1xf32>
    %178 = vector.broadcast %177 : vector<8x1xf32> to vector<8x32xf32>
    %179 = arith.subf %171, %178 : vector<8x32xf32>
    %180 = arith.mulf %179, %179 : vector<8x32xf32>
    %cst_129 = arith.constant dense<0.000000e+00> : vector<8xf32>
    %181 = vector.multi_reduction <add>, %180, %cst_129 [1] : vector<8x32xf32> to vector<8xf32>
    %182 = vector.shape_cast %181 : vector<8xf32> to vector<8x1xf32>
    %cst_130 = arith.constant 3.200000e+01 : f32
    %183 = vector.broadcast %cst_130 : f32 to vector<8x1xf32>
    %184 = arith.divf %182, %183 : vector<8x1xf32>
    %185 = vector.broadcast %177 : vector<8x1xf32> to vector<8x32xf32>
    %186 = arith.subf %171, %185 : vector<8x32xf32>
    %cst_131 = arith.constant 9.99999996E-13 : f32
    %187 = vector.broadcast %cst_131 : f32 to vector<8x1xf32>
    %188 = arith.addf %184, %187 : vector<8x1xf32>
    %189 = math.rsqrt %188 : vector<8x1xf32>
    %190 = vector.broadcast %189 : vector<8x1xf32> to vector<8x32xf32>
    %191 = arith.mulf %186, %190 : vector<8x32xf32>
    %192 = vector.broadcast %172 : vector<1x32xf32> to vector<8x32xf32>
    %193 = arith.mulf %191, %192 : vector<8x32xf32>
    %194 = vector.broadcast %173 : vector<1x32xf32> to vector<8x32xf32>
    %195 = arith.addf %193, %194 : vector<8x32xf32>
    %c0_132 = arith.constant 0 : index
    %c0_133 = arith.constant 0 : index
    %196 = vector.load %arg13[%c0_132, %c0_133] : memref<32x64xf32, #tpu.memory_space<vmem>>, vector<32x64xf32>
    %cst_134 = arith.constant dense<0.000000e+00> : vector<8x64xf32>
    %197 = tpu.matmul %195, %196, %cst_134 {dimension_numbers = #tpu.dot_dimension_numbers<[1], [0], [0], [1], [0, 0, 1, 1], [], []>} : vector<8x32xf32>, vector<32x64xf32>, vector<8x64xf32> -> vector<8x64xf32>
    %c0_135 = arith.constant 0 : index
    %c0_136 = arith.constant 0 : index
    %198 = vector.load %arg14[%c0_135, %c0_136] : memref<1x64xf32, #tpu.memory_space<vmem>>, vector<1x64xf32>
    %199 = vector.broadcast %198 : vector<1x64xf32> to vector<8x64xf32>
    %200 = arith.addf %197, %199 : vector<8x64xf32>
    %201 = arith.mulf %200, %200 : vector<8x64xf32>
    %202 = arith.mulf %200, %201 : vector<8x64xf32>
    %cst_137 = arith.constant 4.471500e-02 : f32
    %203 = vector.broadcast %cst_137 : f32 to vector<8x64xf32>
    %204 = arith.mulf %203, %202 : vector<8x64xf32>
    %205 = arith.addf %200, %204 : vector<8x64xf32>
    %cst_138 = arith.constant 0.797884583 : f32
    %206 = vector.broadcast %cst_138 : f32 to vector<8x64xf32>
    %207 = arith.mulf %206, %205 : vector<8x64xf32>
    %208 = math.tanh %207 : vector<8x64xf32>
    %cst_139 = arith.constant 1.000000e+00 : f32
    %209 = vector.broadcast %cst_139 : f32 to vector<8x64xf32>
    %210 = arith.addf %209, %208 : vector<8x64xf32>
    %cst_140 = arith.constant 5.000000e-01 : f32
    %211 = vector.broadcast %cst_140 : f32 to vector<8x64xf32>
    %212 = arith.mulf %211, %210 : vector<8x64xf32>
    %213 = arith.mulf %200, %212 : vector<8x64xf32>
    %c0_141 = arith.constant 0 : index
    %c0_142 = arith.constant 0 : index
    %214 = vector.load %arg15[%c0_141, %c0_142] : memref<64x32xf32, #tpu.memory_space<vmem>>, vector<64x32xf32>
    %cst_143 = arith.constant dense<0.000000e+00> : vector<8x32xf32>
    %215 = tpu.matmul %213, %214, %cst_143 {dimension_numbers = #tpu.dot_dimension_numbers<[1], [0], [0], [1], [0, 0, 1, 1], [], []>} : vector<8x64xf32>, vector<64x32xf32>, vector<8x32xf32> -> vector<8x32xf32>
    %c0_144 = arith.constant 0 : index
    %c0_145 = arith.constant 0 : index
    %216 = vector.load %arg16[%c0_144, %c0_145] : memref<1x32xf32, #tpu.memory_space<vmem>>, vector<1x32xf32>
    %217 = vector.broadcast %216 : vector<1x32xf32> to vector<8x32xf32>
    %218 = arith.addf %215, %217 : vector<8x32xf32>
    %219 = arith.addf %195, %218 : vector<8x32xf32>
    %c0_146 = arith.constant 0 : index
    %c0_147 = arith.constant 0 : index
    %220 = vector.load %arg17[%c0_146, %c0_147] : memref<1x32xf32, #tpu.memory_space<vmem>>, vector<1x32xf32>
    %c0_148 = arith.constant 0 : index
    %c0_149 = arith.constant 0 : index
    %221 = vector.load %arg18[%c0_148, %c0_149] : memref<1x32xf32, #tpu.memory_space<vmem>>, vector<1x32xf32>
    %cst_150 = arith.constant dense<0.000000e+00> : vector<8xf32>
    %222 = vector.multi_reduction <add>, %219, %cst_150 [1] : vector<8x32xf32> to vector<8xf32>
    %223 = vector.shape_cast %222 : vector<8xf32> to vector<8x1xf32>
    %cst_151 = arith.constant 3.200000e+01 : f32
    %224 = vector.broadcast %cst_151 : f32 to vector<8x1xf32>
    %225 = arith.divf %223, %224 : vector<8x1xf32>
    %226 = vector.broadcast %225 : vector<8x1xf32> to vector<8x32xf32>
    %227 = arith.subf %219, %226 : vector<8x32xf32>
    %228 = arith.mulf %227, %227 : vector<8x32xf32>
    %cst_152 = arith.constant dense<0.000000e+00> : vector<8xf32>
    %229 = vector.multi_reduction <add>, %228, %cst_152 [1] : vector<8x32xf32> to vector<8xf32>
    %230 = vector.shape_cast %229 : vector<8xf32> to vector<8x1xf32>
    %cst_153 = arith.constant 3.200000e+01 : f32
    %231 = vector.broadcast %cst_153 : f32 to vector<8x1xf32>
    %232 = arith.divf %230, %231 : vector<8x1xf32>
    %233 = vector.broadcast %225 : vector<8x1xf32> to vector<8x32xf32>
    %234 = arith.subf %219, %233 : vector<8x32xf32>
    %cst_154 = arith.constant 9.99999996E-13 : f32
    %235 = vector.broadcast %cst_154 : f32 to vector<8x1xf32>
    %236 = arith.addf %232, %235 : vector<8x1xf32>
    %237 = math.rsqrt %236 : vector<8x1xf32>
    %238 = vector.broadcast %237 : vector<8x1xf32> to vector<8x32xf32>
    %239 = arith.mulf %234, %238 : vector<8x32xf32>
    %240 = vector.broadcast %220 : vector<1x32xf32> to vector<8x32xf32>
    %241 = arith.mulf %239, %240 : vector<8x32xf32>
    %242 = vector.broadcast %221 : vector<1x32xf32> to vector<8x32xf32>
    %243 = arith.addf %241, %242 : vector<8x32xf32>
    %c0_155 = arith.constant 0 : index
    %c0_156 = arith.constant 0 : index
    %244 = vector.load %arg19[%c0_155, %c0_156] : memref<8x32xf32, #tpu.memory_space<vmem>>, vector<8x32xf32>
    tpu.vector_store %arg19[%c0_155, %c0_156], %243 {strides = array<i32>} : memref<8x32xf32, #tpu.memory_space<vmem>>, vector<8x32xf32>,
    return
  }
  func.func @transform_0(%arg0: i32) -> (i32, i32) {
    %c0_i32 = arith.constant 0 : i32
    %c0_i32_0 = arith.constant 0 : i32
    return %arg0, %c0_i32 : i32, i32
  }
  func.func @transform_1(%arg0: i32) -> (i32, i32, i32) {
    %c0_i32 = arith.constant 0 : i32
    %c0_i32_0 = arith.constant 0 : i32
    %c0_i32_1 = arith.constant 0 : i32
    return %arg0, %c0_i32, %c0_i32_0 : i32, i32, i32
  }
  func.func @transform_2(%arg0: i32) -> (i32, i32, i32) {
    %c0_i32 = arith.constant 0 : i32
    %c0_i32_0 = arith.constant 0 : i32
    %c0_i32_1 = arith.constant 0 : i32
    %c0_i32_2 = arith.constant 0 : i32
    return %c0_i32, %c0_i32_0, %c0_i32_1 : i32, i32, i32
  }
  func.func @transform_3(%arg0: i32) -> (i32, i32, i32) {
    %c0_i32 = arith.constant 0 : i32
    %c0_i32_0 = arith.constant 0 : i32
    %c0_i32_1 = arith.constant 0 : i32
    %c0_i32_2 = arith.constant 0 : i32
    return %c0_i32, %c0_i32_0, %c0_i32_1 : i32, i32, i32
  }
  func.func @transform_4(%arg0: i32) -> (i32, i32, i32) {
    %c0_i32 = arith.constant 0 : i32
    %c0_i32_0 = arith.constant 0 : i32
    %c0_i32_1 = arith.constant 0 : i32
    %c0_i32_2 = arith.constant 0 : i32
    return %c0_i32, %c0_i32_0, %c0_i32_1 : i32, i32, i32
  }
  func.func @transform_5(%arg0: i32) -> (i32, i32, i32) {
    %c0_i32 = arith.constant 0 : i32
    %c0_i32_0 = arith.constant 0 : i32
    %c0_i32_1 = arith.constant 0 : i32
    %c0_i32_2 = arith.constant 0 : i32
    return %c0_i32, %c0_i32_0, %c0_i32_1 : i32, i32, i32
  }
  func.func @transform_6(%arg0: i32) -> (i32, i32, i32) {
    %c0_i32 = arith.constant 0 : i32
    %c0_i32_0 = arith.constant 0 : i32
    %c0_i32_1 = arith.constant 0 : i32
    %c0_i32_2 = arith.constant 0 : i32
    return %c0_i32, %c0_i32_0, %c0_i32_1 : i32, i32, i32
  }
  func.func @transform_7(%arg0: i32) -> (i32, i32, i32) {
    %c0_i32 = arith.constant 0 : i32
    %c0_i32_0 = arith.constant 0 : i32
    %c0_i32_1 = arith.constant 0 : i32
    %c0_i32_2 = arith.constant 0 : i32
    return %c0_i32, %c0_i32_0, %c0_i32_1 : i32, i32, i32
  }
  func.func @transform_8(%arg0: i32) -> (i32, i32, i32) {
    %c0_i32 = arith.constant 0 : i32
    %c0_i32_0 = arith.constant 0 : i32
    %c0_i32_1 = arith.constant 0 : i32
    %c0_i32_2 = arith.constant 0 : i32
    return %c0_i32, %c0_i32_0, %c0_i32_1 : i32, i32, i32
  }
  func.func @transform_9(%arg0: i32) -> (i32, i32) {
    %c0_i32 = arith.constant 0 : i32
    %c0_i32_0 = arith.constant 0 : i32
    %c0_i32_1 = arith.constant 0 : i32
    return %c0_i32, %c0_i32_0 : i32, i32
  }
  func.func @transform_10(%arg0: i32) -> (i32, i32) {
    %c0_i32 = arith.constant 0 : i32
    %c0_i32_0 = arith.constant 0 : i32
    %c0_i32_1 = arith.constant 0 : i32
    return %c0_i32, %c0_i32_0 : i32, i32
  }
  func.func @transform_11(%arg0: i32) -> (i32, i32) {
    %c0_i32 = arith.constant 0 : i32
    %c0_i32_0 = arith.constant 0 : i32
    %c0_i32_1 = arith.constant 0 : i32
    return %c0_i32, %c0_i32_0 : i32, i32
  }
  func.func @transform_12(%arg0: i32) -> (i32, i32) {
    %c0_i32 = arith.constant 0 : i32
    %c0_i32_0 = arith.constant 0 : i32
    %c0_i32_1 = arith.constant 0 : i32
    return %c0_i32, %c0_i32_0 : i32, i32
  }
  func.func @transform_13(%arg0: i32) -> (i32, i32) {
    %c0_i32 = arith.constant 0 : i32
    %c0_i32_0 = arith.constant 0 : i32
    %c0_i32_1 = arith.constant 0 : i32
    return %c0_i32, %c0_i32_0 : i32, i32
  }
  func.func @transform_14(%arg0: i32) -> (i32, i32) {
    %c0_i32 = arith.constant 0 : i32
    %c0_i32_0 = arith.constant 0 : i32
    %c0_i32_1 = arith.constant 0 : i32
    return %c0_i32, %c0_i32_0 : i32, i32
  }
  func.func @transform_15(%arg0: i32) -> (i32, i32) {
    %c0_i32 = arith.constant 0 : i32
    %c0_i32_0 = arith.constant 0 : i32
    %c0_i32_1 = arith.constant 0 : i32
    return %c0_i32, %c0_i32_0 : i32, i32
  }
  func.func @transform_16(%arg0: i32) -> (i32, i32) {
    %c0_i32 = arith.constant 0 : i32
    %c0_i32_0 = arith.constant 0 : i32
    %c0_i32_1 = arith.constant 0 : i32
    return %c0_i32, %c0_i32_0 : i32, i32
  }
  func.func @transform_17(%arg0: i32) -> (i32, i32) {
    %c0_i32 = arith.constant 0 : i32
    %c0_i32_0 = arith.constant 0 : i32
    %c0_i32_1 = arith.constant 0 : i32
    return %c0_i32, %c0_i32_0 : i32, i32
  }
  func.func @transform_18(%arg0: i32) -> (i32, i32) {
    %c0_i32 = arith.constant 0 : i32
    %c0_i32_0 = arith.constant 0 : i32
    return %arg0, %c0_i32 : i32, i32
  }
}

module attributes {stable_mosaic.version = 11 : i64} {
  func.func @bilstm_kernel(%arg0: i32, %arg1: memref<8x2x32xf32, #tpu.memory_space<vmem>>, %arg2: memref<32x512xf32, #tpu.memory_space<vmem>>, %arg3: memref<128x512xf32, #tpu.memory_space<vmem>>, %arg4: memref<1x512xf32, #tpu.memory_space<vmem>>, %arg5: memref<32x512xf32, #tpu.memory_space<vmem>>, %arg6: memref<128x512xf32, #tpu.memory_space<vmem>>, %arg7: memref<1x512xf32, #tpu.memory_space<vmem>>, %arg8: memref<8x2x128xf32, #tpu.memory_space<vmem>>, %arg9: memref<8x2x128xf32, #tpu.memory_space<vmem>>, %arg10: memref<2x128xf32, #tpu.memory_space<vmem>>, %arg11: memref<2x128xf32, #tpu.memory_space<vmem>>, %arg12: memref<2x128xf32, #tpu.memory_space<vmem>>, %arg13: memref<2x128xf32, #tpu.memory_space<vmem>>) attributes {dimension_semantics = [#tpu.dimension_semantics<arbitrary>], iteration_bounds = array<i64: 1>, scalar_prefetch = 0 : i64, scratch_operands = 4 : i64, tpu.core_type = #tpu.core_type<tc>, window_params = [{pipeline_mode = #tpu.pipeline_mode<synchronous>, transform_indices = @transform_0, window_bounds = array<i64: 8, 2, 32>}, {pipeline_mode = #tpu.pipeline_mode<synchronous>, transform_indices = @transform_1, window_bounds = array<i64: 32, 512>}, {pipeline_mode = #tpu.pipeline_mode<synchronous>, transform_indices = @transform_2, window_bounds = array<i64: 128, 512>}, {pipeline_mode = #tpu.pipeline_mode<synchronous>, transform_indices = @transform_3, window_bounds = array<i64: 1, 512>}, {pipeline_mode = #tpu.pipeline_mode<synchronous>, transform_indices = @transform_4, window_bounds = array<i64: 32, 512>}, {pipeline_mode = #tpu.pipeline_mode<synchronous>, transform_indices = @transform_5, window_bounds = array<i64: 128, 512>}, {pipeline_mode = #tpu.pipeline_mode<synchronous>, transform_indices = @transform_6, window_bounds = array<i64: 1, 512>}, {pipeline_mode = #tpu.pipeline_mode<synchronous>, transform_indices = @transform_7, window_bounds = array<i64: 8, 2, 128>}, {pipeline_mode = #tpu.pipeline_mode<synchronous>, transform_indices = @transform_8, window_bounds = array<i64: 8, 2, 128>}]} {
    %cst = arith.constant 0.000000e+00 : f32
    %0 = vector.broadcast %cst : f32 to vector<2x128xf32>
    %c0 = arith.constant 0 : index
    %c0_0 = arith.constant 0 : index
    %1 = vector.load %arg10[%c0, %c0_0] : memref<2x128xf32, #tpu.memory_space<vmem>>, vector<2x128xf32>
    tpu.vector_store %arg10[%c0, %c0_0], %0 {strides = array<i32>} : memref<2x128xf32, #tpu.memory_space<vmem>>, vector<2x128xf32>,
    %cst_1 = arith.constant 0.000000e+00 : f32
    %2 = vector.broadcast %cst_1 : f32 to vector<2x128xf32>
    %c0_2 = arith.constant 0 : index
    %c0_3 = arith.constant 0 : index
    %3 = vector.load %arg11[%c0_2, %c0_3] : memref<2x128xf32, #tpu.memory_space<vmem>>, vector<2x128xf32>
    tpu.vector_store %arg11[%c0_2, %c0_3], %2 {strides = array<i32>} : memref<2x128xf32, #tpu.memory_space<vmem>>, vector<2x128xf32>,
    %cst_4 = arith.constant 0.000000e+00 : f32
    %4 = vector.broadcast %cst_4 : f32 to vector<2x128xf32>
    %c0_5 = arith.constant 0 : index
    %c0_6 = arith.constant 0 : index
    %5 = vector.load %arg12[%c0_5, %c0_6] : memref<2x128xf32, #tpu.memory_space<vmem>>, vector<2x128xf32>
    tpu.vector_store %arg12[%c0_5, %c0_6], %4 {strides = array<i32>} : memref<2x128xf32, #tpu.memory_space<vmem>>, vector<2x128xf32>,
    %cst_7 = arith.constant 0.000000e+00 : f32
    %6 = vector.broadcast %cst_7 : f32 to vector<2x128xf32>
    %c0_8 = arith.constant 0 : index
    %c0_9 = arith.constant 0 : index
    %7 = vector.load %arg13[%c0_8, %c0_9] : memref<2x128xf32, #tpu.memory_space<vmem>>, vector<2x128xf32>
    tpu.vector_store %arg13[%c0_8, %c0_9], %6 {strides = array<i32>} : memref<2x128xf32, #tpu.memory_space<vmem>>, vector<2x128xf32>,
    %c0_10 = arith.constant 0 : index
    %c0_11 = arith.constant 0 : index
    %8 = vector.load %arg2[%c0_10, %c0_11] : memref<32x512xf32, #tpu.memory_space<vmem>>, vector<32x512xf32>
    %c0_12 = arith.constant 0 : index
    %c0_13 = arith.constant 0 : index
    %9 = vector.load %arg3[%c0_12, %c0_13] : memref<128x512xf32, #tpu.memory_space<vmem>>, vector<128x512xf32>
    %c0_14 = arith.constant 0 : index
    %c0_15 = arith.constant 0 : index
    %10 = vector.load %arg4[%c0_14, %c0_15] : memref<1x512xf32, #tpu.memory_space<vmem>>, vector<1x512xf32>
    %c0_16 = arith.constant 0 : index
    %c0_17 = arith.constant 0 : index
    %11 = vector.load %arg5[%c0_16, %c0_17] : memref<32x512xf32, #tpu.memory_space<vmem>>, vector<32x512xf32>
    %c0_18 = arith.constant 0 : index
    %c0_19 = arith.constant 0 : index
    %12 = vector.load %arg6[%c0_18, %c0_19] : memref<128x512xf32, #tpu.memory_space<vmem>>, vector<128x512xf32>
    %c0_20 = arith.constant 0 : index
    %c0_21 = arith.constant 0 : index
    %13 = vector.load %arg7[%c0_20, %c0_21] : memref<1x512xf32, #tpu.memory_space<vmem>>, vector<1x512xf32>
    %c0_i32 = arith.constant 0 : i32
    %c8_i32 = arith.constant 8 : i32
    %14 = arith.addi %c0_i32, %c8_i32 : i32
    %c1_i32 = arith.constant 1 : i32
    scf.for %arg14 = %c0_i32 to %14 step %c1_i32  : i32 {
      %15 = arith.index_cast %arg14 : i32 to index
      %c0_23 = arith.constant 0 : index
      %c0_24 = arith.constant 0 : index
      %16 = vector.load %arg1[%15, %c0_23, %c0_24] : memref<8x2x32xf32, #tpu.memory_space<vmem>>, vector<1x2x32xf32>
      %17 = vector.shape_cast %16 : vector<1x2x32xf32> to vector<2x32xf32>
      %c0_25 = arith.constant 0 : index
      %c0_26 = arith.constant 0 : index
      %18 = vector.load %arg10[%c0_25, %c0_26] : memref<2x128xf32, #tpu.memory_space<vmem>>, vector<2x128xf32>
      %c0_27 = arith.constant 0 : index
      %c0_28 = arith.constant 0 : index
      %19 = vector.load %arg11[%c0_27, %c0_28] : memref<2x128xf32, #tpu.memory_space<vmem>>, vector<2x128xf32>
      %cst_29 = arith.constant dense<0.000000e+00> : vector<2x512xf32>
      %20 = tpu.matmul %17, %8, %cst_29 {dimension_numbers = #tpu.dot_dimension_numbers<[1], [0], [0], [1], [0, 0, 1, 1], [], []>} : vector<2x32xf32>, vector<32x512xf32>, vector<2x512xf32> -> vector<2x512xf32>
      %21 = vector.broadcast %10 : vector<1x512xf32> to vector<2x512xf32>
      %22 = arith.addf %20, %21 : vector<2x512xf32>
      %cst_30 = arith.constant dense<0.000000e+00> : vector<2x512xf32>
      %23 = tpu.matmul %18, %9, %cst_30 {dimension_numbers = #tpu.dot_dimension_numbers<[1], [0], [0], [1], [0, 0, 1, 1], [], []>} : vector<2x128xf32>, vector<128x512xf32>, vector<2x512xf32> -> vector<2x512xf32>
      %24 = arith.addf %22, %23 : vector<2x512xf32>
      %25 = vector.extract_strided_slice %24 {offsets = [0, 0], sizes = [2, 128], strides = [1, 1]} : vector<2x512xf32> to vector<2x128xf32>
      %26 = arith.negf %25 : vector<2x128xf32>
      %27 = math.exp %26 : vector<2x128xf32>
      %cst_31 = arith.constant 1.000000e+00 : f32
      %28 = vector.broadcast %cst_31 : f32 to vector<2x128xf32>
      %29 = arith.addf %28, %27 : vector<2x128xf32>
      %30 = arith.divf %28, %29 : vector<2x128xf32>
      %31 = vector.extract_strided_slice %24 {offsets = [0, 128], sizes = [2, 128], strides = [1, 1]} : vector<2x512xf32> to vector<2x128xf32>
      %32 = arith.negf %31 : vector<2x128xf32>
      %33 = math.exp %32 : vector<2x128xf32>
      %cst_32 = arith.constant 1.000000e+00 : f32
      %34 = vector.broadcast %cst_32 : f32 to vector<2x128xf32>
      %35 = arith.addf %34, %33 : vector<2x128xf32>
      %36 = arith.divf %34, %35 : vector<2x128xf32>
      %37 = vector.extract_strided_slice %24 {offsets = [0, 256], sizes = [2, 128], strides = [1, 1]} : vector<2x512xf32> to vector<2x128xf32>
      %38 = math.tanh %37 : vector<2x128xf32>
      %39 = vector.extract_strided_slice %24 {offsets = [0, 384], sizes = [2, 128], strides = [1, 1]} : vector<2x512xf32> to vector<2x128xf32>
      %40 = arith.negf %39 : vector<2x128xf32>
      %41 = math.exp %40 : vector<2x128xf32>
      %cst_33 = arith.constant 1.000000e+00 : f32
      %42 = vector.broadcast %cst_33 : f32 to vector<2x128xf32>
      %43 = arith.addf %42, %41 : vector<2x128xf32>
      %44 = arith.divf %42, %43 : vector<2x128xf32>
      %45 = arith.mulf %36, %19 : vector<2x128xf32>
      %46 = arith.mulf %30, %38 : vector<2x128xf32>
      %47 = arith.addf %45, %46 : vector<2x128xf32>
      %48 = math.tanh %47 : vector<2x128xf32>
      %49 = arith.mulf %44, %48 : vector<2x128xf32>
      %c0_34 = arith.constant 0 : index
      %c0_35 = arith.constant 0 : index
      %50 = vector.load %arg10[%c0_34, %c0_35] : memref<2x128xf32, #tpu.memory_space<vmem>>, vector<2x128xf32>
      tpu.vector_store %arg10[%c0_34, %c0_35], %49 {strides = array<i32>} : memref<2x128xf32, #tpu.memory_space<vmem>>, vector<2x128xf32>,
      %c0_36 = arith.constant 0 : index
      %c0_37 = arith.constant 0 : index
      %51 = vector.load %arg11[%c0_36, %c0_37] : memref<2x128xf32, #tpu.memory_space<vmem>>, vector<2x128xf32>
      tpu.vector_store %arg11[%c0_36, %c0_37], %47 {strides = array<i32>} : memref<2x128xf32, #tpu.memory_space<vmem>>, vector<2x128xf32>,
      %52 = arith.index_cast %arg14 : i32 to index
      %c0_38 = arith.constant 0 : index
      %c0_39 = arith.constant 0 : index
      %53 = vector.load %arg8[%52, %c0_38, %c0_39] : memref<8x2x128xf32, #tpu.memory_space<vmem>>, vector<1x2x128xf32>
      %54 = vector.shape_cast %53 : vector<1x2x128xf32> to vector<2x128xf32>
      %55 = vector.shape_cast %49 : vector<2x128xf32> to vector<1x2x128xf32>
      tpu.vector_store %arg8[%52, %c0_38, %c0_39], %55 {strides = array<i32>} : memref<8x2x128xf32, #tpu.memory_space<vmem>>, vector<1x2x128xf32>,
      %c7_i32 = arith.constant 7 : i32
      %56 = arith.subi %c7_i32, %arg14 : i32
      %57 = arith.index_cast %56 : i32 to index
      %c0_40 = arith.constant 0 : index
      %c0_41 = arith.constant 0 : index
      %58 = vector.load %arg1[%57, %c0_40, %c0_41] : memref<8x2x32xf32, #tpu.memory_space<vmem>>, vector<1x2x32xf32>
      %59 = vector.shape_cast %58 : vector<1x2x32xf32> to vector<2x32xf32>
      %c0_42 = arith.constant 0 : index
      %c0_43 = arith.constant 0 : index
      %60 = vector.load %arg12[%c0_42, %c0_43] : memref<2x128xf32, #tpu.memory_space<vmem>>, vector<2x128xf32>
      %c0_44 = arith.constant 0 : index
      %c0_45 = arith.constant 0 : index
      %61 = vector.load %arg13[%c0_44, %c0_45] : memref<2x128xf32, #tpu.memory_space<vmem>>, vector<2x128xf32>
      %cst_46 = arith.constant dense<0.000000e+00> : vector<2x512xf32>
      %62 = tpu.matmul %59, %11, %cst_46 {dimension_numbers = #tpu.dot_dimension_numbers<[1], [0], [0], [1], [0, 0, 1, 1], [], []>} : vector<2x32xf32>, vector<32x512xf32>, vector<2x512xf32> -> vector<2x512xf32>
      %63 = vector.broadcast %13 : vector<1x512xf32> to vector<2x512xf32>
      %64 = arith.addf %62, %63 : vector<2x512xf32>
      %cst_47 = arith.constant dense<0.000000e+00> : vector<2x512xf32>
      %65 = tpu.matmul %60, %12, %cst_47 {dimension_numbers = #tpu.dot_dimension_numbers<[1], [0], [0], [1], [0, 0, 1, 1], [], []>} : vector<2x128xf32>, vector<128x512xf32>, vector<2x512xf32> -> vector<2x512xf32>
      %66 = arith.addf %64, %65 : vector<2x512xf32>
      %67 = vector.extract_strided_slice %66 {offsets = [0, 0], sizes = [2, 128], strides = [1, 1]} : vector<2x512xf32> to vector<2x128xf32>
      %68 = arith.negf %67 : vector<2x128xf32>
      %69 = math.exp %68 : vector<2x128xf32>
      %cst_48 = arith.constant 1.000000e+00 : f32
      %70 = vector.broadcast %cst_48 : f32 to vector<2x128xf32>
      %71 = arith.addf %70, %69 : vector<2x128xf32>
      %72 = arith.divf %70, %71 : vector<2x128xf32>
      %73 = vector.extract_strided_slice %66 {offsets = [0, 128], sizes = [2, 128], strides = [1, 1]} : vector<2x512xf32> to vector<2x128xf32>
      %74 = arith.negf %73 : vector<2x128xf32>
      %75 = math.exp %74 : vector<2x128xf32>
      %cst_49 = arith.constant 1.000000e+00 : f32
      %76 = vector.broadcast %cst_49 : f32 to vector<2x128xf32>
      %77 = arith.addf %76, %75 : vector<2x128xf32>
      %78 = arith.divf %76, %77 : vector<2x128xf32>
      %79 = vector.extract_strided_slice %66 {offsets = [0, 256], sizes = [2, 128], strides = [1, 1]} : vector<2x512xf32> to vector<2x128xf32>
      %80 = math.tanh %79 : vector<2x128xf32>
      %81 = vector.extract_strided_slice %66 {offsets = [0, 384], sizes = [2, 128], strides = [1, 1]} : vector<2x512xf32> to vector<2x128xf32>
      %82 = arith.negf %81 : vector<2x128xf32>
      %83 = math.exp %82 : vector<2x128xf32>
      %cst_50 = arith.constant 1.000000e+00 : f32
      %84 = vector.broadcast %cst_50 : f32 to vector<2x128xf32>
      %85 = arith.addf %84, %83 : vector<2x128xf32>
      %86 = arith.divf %84, %85 : vector<2x128xf32>
      %87 = arith.mulf %78, %61 : vector<2x128xf32>
      %88 = arith.mulf %72, %80 : vector<2x128xf32>
      %89 = arith.addf %87, %88 : vector<2x128xf32>
      %90 = math.tanh %89 : vector<2x128xf32>
      %91 = arith.mulf %86, %90 : vector<2x128xf32>
      %c0_51 = arith.constant 0 : index
      %c0_52 = arith.constant 0 : index
      %92 = vector.load %arg12[%c0_51, %c0_52] : memref<2x128xf32, #tpu.memory_space<vmem>>, vector<2x128xf32>
      tpu.vector_store %arg12[%c0_51, %c0_52], %91 {strides = array<i32>} : memref<2x128xf32, #tpu.memory_space<vmem>>, vector<2x128xf32>,
      %c0_53 = arith.constant 0 : index
      %c0_54 = arith.constant 0 : index
      %93 = vector.load %arg13[%c0_53, %c0_54] : memref<2x128xf32, #tpu.memory_space<vmem>>, vector<2x128xf32>
      tpu.vector_store %arg13[%c0_53, %c0_54], %89 {strides = array<i32>} : memref<2x128xf32, #tpu.memory_space<vmem>>, vector<2x128xf32>,
      %94 = arith.index_cast %56 : i32 to index
      %c0_55 = arith.constant 0 : index
      %c0_56 = arith.constant 0 : index
      %95 = vector.load %arg9[%94, %c0_55, %c0_56] : memref<8x2x128xf32, #tpu.memory_space<vmem>>, vector<1x2x128xf32>
      %96 = vector.shape_cast %95 : vector<1x2x128xf32> to vector<2x128xf32>
      %97 = vector.shape_cast %91 : vector<2x128xf32> to vector<1x2x128xf32>
      tpu.vector_store %arg9[%94, %c0_55, %c0_56], %97 {strides = array<i32>} : memref<8x2x128xf32, #tpu.memory_space<vmem>>, vector<1x2x128xf32>,
    }
    %c8_i32_22 = arith.constant 8 : i32
    return
  }
  func.func @transform_0(%arg0: i32) -> (i32, i32, i32) {
    %c0_i32 = arith.constant 0 : i32
    %c0_i32_0 = arith.constant 0 : i32
    %c0_i32_1 = arith.constant 0 : i32
    %c0_i32_2 = arith.constant 0 : i32
    return %c0_i32, %c0_i32_0, %c0_i32_1 : i32, i32, i32
  }
  func.func @transform_1(%arg0: i32) -> (i32, i32) {
    %c0_i32 = arith.constant 0 : i32
    %c0_i32_0 = arith.constant 0 : i32
    %c0_i32_1 = arith.constant 0 : i32
    return %c0_i32, %c0_i32_0 : i32, i32
  }
  func.func @transform_2(%arg0: i32) -> (i32, i32) {
    %c0_i32 = arith.constant 0 : i32
    %c0_i32_0 = arith.constant 0 : i32
    %c0_i32_1 = arith.constant 0 : i32
    return %c0_i32, %c0_i32_0 : i32, i32
  }
  func.func @transform_3(%arg0: i32) -> (i32, i32) {
    %c0_i32 = arith.constant 0 : i32
    %c0_i32_0 = arith.constant 0 : i32
    %c0_i32_1 = arith.constant 0 : i32
    return %c0_i32, %c0_i32_0 : i32, i32
  }
  func.func @transform_4(%arg0: i32) -> (i32, i32) {
    %c0_i32 = arith.constant 0 : i32
    %c0_i32_0 = arith.constant 0 : i32
    %c0_i32_1 = arith.constant 0 : i32
    return %c0_i32, %c0_i32_0 : i32, i32
  }
  func.func @transform_5(%arg0: i32) -> (i32, i32) {
    %c0_i32 = arith.constant 0 : i32
    %c0_i32_0 = arith.constant 0 : i32
    %c0_i32_1 = arith.constant 0 : i32
    return %c0_i32, %c0_i32_0 : i32, i32
  }
  func.func @transform_6(%arg0: i32) -> (i32, i32) {
    %c0_i32 = arith.constant 0 : i32
    %c0_i32_0 = arith.constant 0 : i32
    %c0_i32_1 = arith.constant 0 : i32
    return %c0_i32, %c0_i32_0 : i32, i32
  }
  func.func @transform_7(%arg0: i32) -> (i32, i32, i32) {
    %c0_i32 = arith.constant 0 : i32
    %c0_i32_0 = arith.constant 0 : i32
    %c0_i32_1 = arith.constant 0 : i32
    %c0_i32_2 = arith.constant 0 : i32
    return %c0_i32, %c0_i32_0, %c0_i32_1 : i32, i32, i32
  }
  func.func @transform_8(%arg0: i32) -> (i32, i32, i32) {
    %c0_i32 = arith.constant 0 : i32
    %c0_i32_0 = arith.constant 0 : i32
    %c0_i32_1 = arith.constant 0 : i32
    %c0_i32_2 = arith.constant 0 : i32
    return %c0_i32, %c0_i32_0, %c0_i32_1 : i32, i32, i32
  }
}

module attributes {stable_mosaic.version = 11 : i64} {
  func.func @crf_kernel(%arg0: i32, %arg1: memref<8x2x128xf32, #tpu.memory_space<vmem>>, %arg2: memref<8x2x128xf32, #tpu.memory_space<vmem>>, %arg3: memref<128x16xf32, #tpu.memory_space<vmem>>, %arg4: memref<128x16xf32, #tpu.memory_space<vmem>>, %arg5: memref<1x16xf32, #tpu.memory_space<vmem>>, %arg6: memref<8x2x1xf32, #tpu.memory_space<vmem>>, %arg7: memref<16x16xf32, #tpu.memory_space<vmem>>, %arg8: memref<1x16xf32, #tpu.memory_space<vmem>>, %arg9: memref<1x16xf32, #tpu.memory_space<vmem>>, %arg10: memref<8x2x1xi32, #tpu.memory_space<vmem>>, %arg11: memref<8x2x16xf32, #tpu.memory_space<vmem>>, %arg12: memref<2x16xf32, #tpu.memory_space<vmem>>, %arg13: memref<8x2x16xi32, #tpu.memory_space<vmem>>) attributes {dimension_semantics = [#tpu.dimension_semantics<arbitrary>], iteration_bounds = array<i64: 1>, scalar_prefetch = 0 : i64, scratch_operands = 2 : i64, tpu.core_type = #tpu.core_type<tc>, window_params = [{pipeline_mode = #tpu.pipeline_mode<synchronous>, transform_indices = @transform_0, window_bounds = array<i64: 8, 2, 128>}, {pipeline_mode = #tpu.pipeline_mode<synchronous>, transform_indices = @transform_1, window_bounds = array<i64: 8, 2, 128>}, {pipeline_mode = #tpu.pipeline_mode<synchronous>, transform_indices = @transform_2, window_bounds = array<i64: 128, 16>}, {pipeline_mode = #tpu.pipeline_mode<synchronous>, transform_indices = @transform_3, window_bounds = array<i64: 128, 16>}, {pipeline_mode = #tpu.pipeline_mode<synchronous>, transform_indices = @transform_4, window_bounds = array<i64: 1, 16>}, {pipeline_mode = #tpu.pipeline_mode<synchronous>, transform_indices = @transform_5, window_bounds = array<i64: 8, 2, 1>}, {pipeline_mode = #tpu.pipeline_mode<synchronous>, transform_indices = @transform_6, window_bounds = array<i64: 16, 16>}, {pipeline_mode = #tpu.pipeline_mode<synchronous>, transform_indices = @transform_7, window_bounds = array<i64: 1, 16>}, {pipeline_mode = #tpu.pipeline_mode<synchronous>, transform_indices = @transform_8, window_bounds = array<i64: 1, 16>}, {pipeline_mode = #tpu.pipeline_mode<synchronous>, transform_indices = @transform_9, window_bounds = array<i64: 8, 2, 1>}, {pipeline_mode = #tpu.pipeline_mode<synchronous>, transform_indices = @transform_10, window_bounds = array<i64: 8, 2, 16>}]} {
    %0 = tpu.iota {dimensions = array<i32: 1>} : vector<2x16xi32>
    %1 = tpu.iota {dimensions = array<i32: 2>} : vector<2x16x16xi32>
    %c0 = arith.constant 0 : index
    %c0_0 = arith.constant 0 : index
    %2 = vector.load %arg7[%c0, %c0_0] : memref<16x16xf32, #tpu.memory_space<vmem>>, vector<16x16xf32>
    %3 = vector.shape_cast %2 : vector<16x16xf32> to vector<1x16x16xf32>
    %c0_1 = arith.constant 0 : index
    %c0_2 = arith.constant 0 : index
    %4 = vector.load %arg3[%c0_1, %c0_2] : memref<128x16xf32, #tpu.memory_space<vmem>>, vector<128x16xf32>
    %c0_3 = arith.constant 0 : index
    %c0_4 = arith.constant 0 : index
    %5 = vector.load %arg4[%c0_3, %c0_4] : memref<128x16xf32, #tpu.memory_space<vmem>>, vector<128x16xf32>
    %c0_5 = arith.constant 0 : index
    %c0_6 = arith.constant 0 : index
    %6 = vector.load %arg5[%c0_5, %c0_6] : memref<1x16xf32, #tpu.memory_space<vmem>>, vector<1x16xf32>
    %c0_7 = arith.constant 0 : index
    %c0_8 = arith.constant 0 : index
    %c0_9 = arith.constant 0 : index
    %7 = vector.load %arg1[%c0_7, %c0_8, %c0_9] : memref<8x2x128xf32, #tpu.memory_space<vmem>>, vector<1x2x128xf32>
    %8 = vector.shape_cast %7 : vector<1x2x128xf32> to vector<2x128xf32>
    %cst = arith.constant dense<0.000000e+00> : vector<2x16xf32>
    %9 = tpu.matmul %8, %4, %cst {dimension_numbers = #tpu.dot_dimension_numbers<[1], [0], [0], [1], [0, 0, 1, 1], [], []>} : vector<2x128xf32>, vector<128x16xf32>, vector<2x16xf32> -> vector<2x16xf32>
    %c0_10 = arith.constant 0 : index
    %c0_11 = arith.constant 0 : index
    %c0_12 = arith.constant 0 : index
    %10 = vector.load %arg2[%c0_10, %c0_11, %c0_12] : memref<8x2x128xf32, #tpu.memory_space<vmem>>, vector<1x2x128xf32>
    %11 = vector.shape_cast %10 : vector<1x2x128xf32> to vector<2x128xf32>
    %cst_13 = arith.constant dense<0.000000e+00> : vector<2x16xf32>
    %12 = tpu.matmul %11, %5, %cst_13 {dimension_numbers = #tpu.dot_dimension_numbers<[1], [0], [0], [1], [0, 0, 1, 1], [], []>} : vector<2x128xf32>, vector<128x16xf32>, vector<2x16xf32> -> vector<2x16xf32>
    %13 = arith.addf %9, %12 : vector<2x16xf32>
    %14 = vector.broadcast %6 : vector<1x16xf32> to vector<2x16xf32>
    %15 = arith.addf %13, %14 : vector<2x16xf32>
    %c0_14 = arith.constant 0 : index
    %c0_15 = arith.constant 0 : index
    %c0_16 = arith.constant 0 : index
    %16 = vector.load %arg11[%c0_14, %c0_15, %c0_16] : memref<8x2x16xf32, #tpu.memory_space<vmem>>, vector<1x2x16xf32>
    %17 = vector.shape_cast %16 : vector<1x2x16xf32> to vector<2x16xf32>
    %18 = vector.shape_cast %15 : vector<2x16xf32> to vector<1x2x16xf32>
    tpu.vector_store %arg11[%c0_14, %c0_15, %c0_16], %18 {strides = array<i32>} : memref<8x2x16xf32, #tpu.memory_space<vmem>>, vector<1x2x16xf32>,
    %c0_17 = arith.constant 0 : index
    %c0_18 = arith.constant 0 : index
    %19 = vector.load %arg8[%c0_17, %c0_18] : memref<1x16xf32, #tpu.memory_space<vmem>>, vector<1x16xf32>
    %20 = vector.broadcast %19 : vector<1x16xf32> to vector<2x16xf32>
    %21 = arith.addf %20, %15 : vector<2x16xf32>
    %c0_19 = arith.constant 0 : index
    %c0_20 = arith.constant 0 : index
    %22 = vector.load %arg12[%c0_19, %c0_20] : memref<2x16xf32, #tpu.memory_space<vmem>>, vector<2x16xf32>
    tpu.vector_store %arg12[%c0_19, %c0_20], %21 {strides = array<i32>} : memref<2x16xf32, #tpu.memory_space<vmem>>, vector<2x16xf32>,
    %c0_21 = arith.constant 0 : index
    %c0_22 = arith.constant 0 : index
    %c0_23 = arith.constant 0 : index
    %23 = vector.load %arg13[%c0_21, %c0_22, %c0_23] : memref<8x2x16xi32, #tpu.memory_space<vmem>>, vector<1x2x16xi32>
    %24 = vector.shape_cast %23 : vector<1x2x16xi32> to vector<2x16xi32>
    %25 = vector.shape_cast %0 : vector<2x16xi32> to vector<1x2x16xi32>
    tpu.vector_store %arg13[%c0_21, %c0_22, %c0_23], %25 {strides = array<i32>} : memref<8x2x16xi32, #tpu.memory_space<vmem>>, vector<1x2x16xi32>,
    %c1_i32 = arith.constant 1 : i32
    %c7_i32 = arith.constant 7 : i32
    %26 = arith.addi %c1_i32, %c7_i32 : i32
    %c1_i32_24 = arith.constant 1 : i32
    scf.for %arg14 = %c1_i32 to %26 step %c1_i32_24  : i32 {
      %41 = arith.index_cast %arg14 : i32 to index
      %c0_34 = arith.constant 0 : index
      %c0_35 = arith.constant 0 : index
      %42 = vector.load %arg1[%41, %c0_34, %c0_35] : memref<8x2x128xf32, #tpu.memory_space<vmem>>, vector<1x2x128xf32>
      %43 = vector.shape_cast %42 : vector<1x2x128xf32> to vector<2x128xf32>
      %cst_36 = arith.constant dense<0.000000e+00> : vector<2x16xf32>
      %44 = tpu.matmul %43, %4, %cst_36 {dimension_numbers = #tpu.dot_dimension_numbers<[1], [0], [0], [1], [0, 0, 1, 1], [], []>} : vector<2x128xf32>, vector<128x16xf32>, vector<2x16xf32> -> vector<2x16xf32>
      %45 = arith.index_cast %arg14 : i32 to index
      %c0_37 = arith.constant 0 : index
      %c0_38 = arith.constant 0 : index
      %46 = vector.load %arg2[%45, %c0_37, %c0_38] : memref<8x2x128xf32, #tpu.memory_space<vmem>>, vector<1x2x128xf32>
      %47 = vector.shape_cast %46 : vector<1x2x128xf32> to vector<2x128xf32>
      %cst_39 = arith.constant dense<0.000000e+00> : vector<2x16xf32>
      %48 = tpu.matmul %47, %5, %cst_39 {dimension_numbers = #tpu.dot_dimension_numbers<[1], [0], [0], [1], [0, 0, 1, 1], [], []>} : vector<2x128xf32>, vector<128x16xf32>, vector<2x16xf32> -> vector<2x16xf32>
      %49 = arith.addf %44, %48 : vector<2x16xf32>
      %50 = vector.broadcast %6 : vector<1x16xf32> to vector<2x16xf32>
      %51 = arith.addf %49, %50 : vector<2x16xf32>
      %52 = arith.index_cast %arg14 : i32 to index
      %c0_40 = arith.constant 0 : index
      %c0_41 = arith.constant 0 : index
      %53 = vector.load %arg11[%52, %c0_40, %c0_41] : memref<8x2x16xf32, #tpu.memory_space<vmem>>, vector<1x2x16xf32>
      %54 = vector.shape_cast %53 : vector<1x2x16xf32> to vector<2x16xf32>
      %55 = vector.shape_cast %51 : vector<2x16xf32> to vector<1x2x16xf32>
      tpu.vector_store %arg11[%52, %c0_40, %c0_41], %55 {strides = array<i32>} : memref<8x2x16xf32, #tpu.memory_space<vmem>>, vector<1x2x16xf32>,
      %c0_42 = arith.constant 0 : index
      %c0_43 = arith.constant 0 : index
      %56 = vector.load %arg12[%c0_42, %c0_43] : memref<2x16xf32, #tpu.memory_space<vmem>>, vector<2x16xf32>
      %57 = vector.shape_cast %56 : vector<2x16xf32> to vector<2x1x16xf32>
      %58 = vector.broadcast %57 : vector<2x1x16xf32> to vector<2x16x16xf32>
      %59 = vector.broadcast %3 : vector<1x16x16xf32> to vector<2x16x16xf32>
      %60 = arith.addf %58, %59 : vector<2x16x16xf32>
      %cst_44 = arith.constant dense<0xFF800000> : vector<2x16xf32>
      %61 = vector.multi_reduction <maximumf>, %60, %cst_44 [2] : vector<2x16x16xf32> to vector<2x16xf32>
      %62 = vector.shape_cast %61 : vector<2x16xf32> to vector<2x16x1xf32>
      %63 = vector.broadcast %62 : vector<2x16x1xf32> to vector<2x16x16xf32>
      %64 = arith.cmpf oge, %60, %63 : vector<2x16x16xf32>
      %c16_i32_45 = arith.constant 16 : i32
      %65 = vector.broadcast %c16_i32_45 : i32 to vector<2x16x16xi32>
      %66 = arith.select %64, %1, %65 : vector<2x16x16xi1>, vector<2x16x16xi32>
      %cst_46 = arith.constant dense<2147483647> : vector<2x16xi32>
      %67 = vector.multi_reduction <minsi>, %66, %cst_46 [2] : vector<2x16x16xi32> to vector<2x16xi32>
      %68 = arith.addf %61, %51 : vector<2x16xf32>
      %69 = arith.index_cast %arg14 : i32 to index
      %c0_47 = arith.constant 0 : index
      %c0_48 = arith.constant 0 : index
      %70 = vector.load %arg6[%69, %c0_47, %c0_48] : memref<8x2x1xf32, #tpu.memory_space<vmem>>, vector<1x2x1xf32>
      %71 = vector.shape_cast %70 : vector<1x2x1xf32> to vector<2x1xf32>
      %cst_49 = arith.constant 5.000000e-01 : f32
      %72 = vector.broadcast %cst_49 : f32 to vector<2x1xf32>
      %73 = arith.cmpf ogt, %71, %72 : vector<2x1xf32>
      %c0_50 = arith.constant 0 : index
      %c0_51 = arith.constant 0 : index
      %74 = vector.load %arg12[%c0_50, %c0_51] : memref<2x16xf32, #tpu.memory_space<vmem>>, vector<2x16xf32>
      %75 = vector.shape_cast %73 : vector<2x1xi1> to vector<2x1xi1>
      %76 = vector.broadcast %75 : vector<2x1xi1> to vector<2x16xi1>
      %77 = arith.select %76, %68, %74 : vector<2x16xi1>, vector<2x16xf32>
      %c0_52 = arith.constant 0 : index
      %c0_53 = arith.constant 0 : index
      %78 = vector.load %arg12[%c0_52, %c0_53] : memref<2x16xf32, #tpu.memory_space<vmem>>, vector<2x16xf32>
      tpu.vector_store %arg12[%c0_52, %c0_53], %77 {strides = array<i32>} : memref<2x16xf32, #tpu.memory_space<vmem>>, vector<2x16xf32>,
      %79 = vector.shape_cast %73 : vector<2x1xi1> to vector<2x1xi1>
      %80 = vector.broadcast %79 : vector<2x1xi1> to vector<2x16xi1>
      %81 = arith.select %80, %67, %0 : vector<2x16xi1>, vector<2x16xi32>
      %82 = arith.index_cast %arg14 : i32 to index
      %c0_54 = arith.constant 0 : index
      %c0_55 = arith.constant 0 : index
      %83 = vector.load %arg13[%82, %c0_54, %c0_55] : memref<8x2x16xi32, #tpu.memory_space<vmem>>, vector<1x2x16xi32>
      %84 = vector.shape_cast %83 : vector<1x2x16xi32> to vector<2x16xi32>
      %85 = vector.shape_cast %81 : vector<2x16xi32> to vector<1x2x16xi32>
      tpu.vector_store %arg13[%82, %c0_54, %c0_55], %85 {strides = array<i32>} : memref<8x2x16xi32, #tpu.memory_space<vmem>>, vector<1x2x16xi32>,
    }
    %c7_i32_25 = arith.constant 7 : i32
    %c0_26 = arith.constant 0 : index
    %c0_27 = arith.constant 0 : index
    %27 = vector.load %arg12[%c0_26, %c0_27] : memref<2x16xf32, #tpu.memory_space<vmem>>, vector<2x16xf32>
    %c0_28 = arith.constant 0 : index
    %c0_29 = arith.constant 0 : index
    %28 = vector.load %arg9[%c0_28, %c0_29] : memref<1x16xf32, #tpu.memory_space<vmem>>, vector<1x16xf32>
    %29 = vector.broadcast %28 : vector<1x16xf32> to vector<2x16xf32>
    %30 = arith.addf %27, %29 : vector<2x16xf32>
    %cst_30 = arith.constant dense<0xFF800000> : vector<2xf32>
    %31 = vector.multi_reduction <maximumf>, %30, %cst_30 [1] : vector<2x16xf32> to vector<2xf32>
    %32 = vector.shape_cast %31 : vector<2xf32> to vector<2x1xf32>
    %33 = vector.broadcast %32 : vector<2x1xf32> to vector<2x16xf32>
    %34 = arith.cmpf oge, %30, %33 : vector<2x16xf32>
    %c16_i32 = arith.constant 16 : i32
    %35 = vector.broadcast %c16_i32 : i32 to vector<2x16xi32>
    %36 = arith.select %34, %0, %35 : vector<2x16xi1>, vector<2x16xi32>
    %cst_31 = arith.constant dense<2147483647> : vector<2xi32>
    %37 = vector.multi_reduction <minsi>, %36, %cst_31 [1] : vector<2x16xi32> to vector<2xi32>
    %38 = vector.shape_cast %37 : vector<2xi32> to vector<2x1xi32>
    %c0_i32 = arith.constant 0 : i32
    %c8_i32 = arith.constant 8 : i32
    %39 = arith.addi %c0_i32, %c8_i32 : i32
    %c1_i32_32 = arith.constant 1 : i32
    %40 = scf.for %arg14 = %c0_i32 to %39 step %c1_i32_32 iter_args(%arg15 = %38) -> (vector<2x1xi32>)  : i32 {
      %c7_i32_34 = arith.constant 7 : i32
      %41 = arith.subi %c7_i32_34, %arg14 : i32
      %42 = arith.index_cast %41 : i32 to index
      %c0_35 = arith.constant 0 : index
      %c0_36 = arith.constant 0 : index
      %43 = vector.load %arg10[%42, %c0_35, %c0_36] : memref<8x2x1xi32, #tpu.memory_space<vmem>>, vector<1x2x1xi32>
      %44 = vector.shape_cast %43 : vector<1x2x1xi32> to vector<2x1xi32>
      %45 = vector.shape_cast %arg15 : vector<2x1xi32> to vector<1x2x1xi32>
      tpu.vector_store %arg10[%42, %c0_35, %c0_36], %45 {strides = array<i32>} : memref<8x2x1xi32, #tpu.memory_space<vmem>>, vector<1x2x1xi32>,
      %46 = vector.broadcast %arg15 : vector<2x1xi32> to vector<2x16xi32>
      %47 = arith.cmpi eq, %0, %46 : vector<2x16xi32>
      %48 = arith.index_cast %41 : i32 to index
      %c0_37 = arith.constant 0 : index
      %c0_38 = arith.constant 0 : index
      %49 = vector.load %arg13[%48, %c0_37, %c0_38] : memref<8x2x16xi32, #tpu.memory_space<vmem>>, vector<1x2x16xi32>
      %50 = vector.shape_cast %49 : vector<1x2x16xi32> to vector<2x16xi32>
      %c0_i32_39 = arith.constant 0 : i32
      %51 = vector.broadcast %c0_i32_39 : i32 to vector<2x16xi32>
      %52 = arith.select %47, %50, %51 : vector<2x16xi1>, vector<2x16xi32>
      %cst_40 = arith.constant dense<0> : vector<2xi32>
      %53 = vector.multi_reduction <add>, %52, %cst_40 [1] : vector<2x16xi32> to vector<2xi32>
      %54 = vector.shape_cast %53 : vector<2xi32> to vector<2x1xi32>
      scf.yield %54 : vector<2x1xi32>
    }
    %c8_i32_33 = arith.constant 8 : i32
    return
  }
  func.func @transform_0(%arg0: i32) -> (i32, i32, i32) {
    %c0_i32 = arith.constant 0 : i32
    %c0_i32_0 = arith.constant 0 : i32
    %c0_i32_1 = arith.constant 0 : i32
    %c0_i32_2 = arith.constant 0 : i32
    return %c0_i32, %c0_i32_0, %c0_i32_1 : i32, i32, i32
  }
  func.func @transform_1(%arg0: i32) -> (i32, i32, i32) {
    %c0_i32 = arith.constant 0 : i32
    %c0_i32_0 = arith.constant 0 : i32
    %c0_i32_1 = arith.constant 0 : i32
    %c0_i32_2 = arith.constant 0 : i32
    return %c0_i32, %c0_i32_0, %c0_i32_1 : i32, i32, i32
  }
  func.func @transform_2(%arg0: i32) -> (i32, i32) {
    %c0_i32 = arith.constant 0 : i32
    %c0_i32_0 = arith.constant 0 : i32
    %c0_i32_1 = arith.constant 0 : i32
    return %c0_i32, %c0_i32_0 : i32, i32
  }
  func.func @transform_3(%arg0: i32) -> (i32, i32) {
    %c0_i32 = arith.constant 0 : i32
    %c0_i32_0 = arith.constant 0 : i32
    %c0_i32_1 = arith.constant 0 : i32
    return %c0_i32, %c0_i32_0 : i32, i32
  }
  func.func @transform_4(%arg0: i32) -> (i32, i32) {
    %c0_i32 = arith.constant 0 : i32
    %c0_i32_0 = arith.constant 0 : i32
    %c0_i32_1 = arith.constant 0 : i32
    return %c0_i32, %c0_i32_0 : i32, i32
  }
  func.func @transform_5(%arg0: i32) -> (i32, i32, i32) {
    %c0_i32 = arith.constant 0 : i32
    %c0_i32_0 = arith.constant 0 : i32
    %c0_i32_1 = arith.constant 0 : i32
    %c0_i32_2 = arith.constant 0 : i32
    return %c0_i32, %c0_i32_0, %c0_i32_1 : i32, i32, i32
  }
  func.func @transform_6(%arg0: i32) -> (i32, i32) {
    %c0_i32 = arith.constant 0 : i32
    %c0_i32_0 = arith.constant 0 : i32
    %c0_i32_1 = arith.constant 0 : i32
    return %c0_i32, %c0_i32_0 : i32, i32
  }
  func.func @transform_7(%arg0: i32) -> (i32, i32) {
    %c0_i32 = arith.constant 0 : i32
    %c0_i32_0 = arith.constant 0 : i32
    %c0_i32_1 = arith.constant 0 : i32
    return %c0_i32, %c0_i32_0 : i32, i32
  }
  func.func @transform_8(%arg0: i32) -> (i32, i32) {
    %c0_i32 = arith.constant 0 : i32
    %c0_i32_0 = arith.constant 0 : i32
    %c0_i32_1 = arith.constant 0 : i32
    return %c0_i32, %c0_i32_0 : i32, i32
  }
  func.func @transform_9(%arg0: i32) -> (i32, i32, i32) {
    %c0_i32 = arith.constant 0 : i32
    %c0_i32_0 = arith.constant 0 : i32
    %c0_i32_1 = arith.constant 0 : i32
    %c0_i32_2 = arith.constant 0 : i32
    return %c0_i32, %c0_i32_0, %c0_i32_1 : i32, i32, i32
  }
  func.func @transform_10(%arg0: i32) -> (i32, i32, i32) {
    %c0_i32 = arith.constant 0 : i32
    %c0_i32_0 = arith.constant 0 : i32
    %c0_i32_1 = arith.constant 0 : i32
    %c0_i32_2 = arith.constant 0 : i32
    return %c0_i32, %c0_i32_0, %c0_i32_1 : i32, i32, i32
  }
}

</mosaic_0001>

<llo_original>
// kernel: _forward.5
$region0: #{_forward.5}
  #allocation0 [shape = 'u32[]', space=smem, size = 0x4, offset = 0x4, fixed_abs, tag = 'smem constant byte address 0x4 - core index']
  #allocation1 [shape = 'u32[144,128]{1,0:T(1,128)}', space=vmem, size = 0x12000, scoped, tag = 'internal scratch']
  %s0 = inlined_call_operand.vmem [shape: f32[16,32], index: 0, kind: input, shape index: {}]
  %s1 = inlined_call_operand.vmem [shape: f32[1,32], index: 1, kind: input, shape index: {}]
  %s2 = inlined_call_operand.vmem [shape: f32[1,32], index: 2, kind: input, shape index: {}]
  %s3 = inlined_call_operand.vmem [shape: f32[16,32], index: 3, kind: output, shape index: {}]
  %s4 = sld [smem:[#allocation0]]
  $region22: #{_forward.5} parent=0
    _
  %s6 = ssub.s32 1, %s4
  %s7 = scalar_select 0, %s6, %s4
  // Predicated region
  $region2: #{_forward.5} parent=0 // pred_check
    _
  $region3: #{_forward.5} parent=0 // pred_check_branch
    %9 = sbr.rel (0) target = $region5
  $region4: #{_forward.5} parent=0 // pred_region
    _
  $region5: #{_forward.5} parent=0 // pred_fallthru
    _
  // Predicated region
  $region6: #{_forward.5} parent=0 // pred_check
    _
  $region7: #{_forward.5} parent=0 // pred_check_branch
    %11 = sbr.rel (0) target = $region9
  $region8: #{_forward.5} parent=0 // pred_region
    _
  $region9: #{_forward.5} parent=0 // pred_fallthru
    _
  // Predicated region
  $region10: #{_forward.5} parent=0 // pred_check
    _
  $region11: #{_forward.5} parent=0 // pred_check_branch
    %13 = sbr.rel (0) target = $region13
  $region12: #{_forward.5} parent=0 // pred_region
    _
  $region13: #{_forward.5} parent=0 // pred_fallthru
    _
  %v14 = vld [vmem:[%s0] sm:$0xff]
  %v15 = vld [vmem:[%s0 + $0x8] sm:$0xff]
  %v16 = vld [vmem:[%s1] sm:$0x1]
  %v17 = vld [vmem:[%s2] sm:$0x1]
  %vm18 = vcmask 261120
  %v19 = vsel %vm18, %v14, 0.0
  %20 = vadd.xlane.f32.xlu0 %v19
  %v21 = vpop.xlane.xlu0 %20
  %v22 = vsel %vm18, %v15, 0.0
  %23 = vadd.xlane.f32.xlu0 %v22
  %v24 = vpop.xlane.xlu0 %23
  %v25 = vrcp.pop 32.0
  %v26 = vmul.f32 %v21, %v25
  %v27 = vmul.f32 %v24, %v25
  %v28 = vsub.f32 %v14, %v26
  %v29 = vsub.f32 %v15, %v27
  %v30 = vmul.f32 %v28, %v28
  %v31 = vmul.f32 %v29, %v29
  %v32 = vsel %vm18, %v30, 0.0
  %33 = vadd.xlane.f32.xlu0 %v32
  %v34 = vpop.xlane.xlu0 %33
  %v35 = vsel %vm18, %v31, 0.0
  %36 = vadd.xlane.f32.xlu0 %v35
  %v37 = vpop.xlane.xlu0 %36
  %v38 = vmul.f32 %v34, %v25
  %v39 = vmul.f32 %v37, %v25
  %v40 = vadd.f32 %v38, 1e-12
  %v41 = vadd.f32 %v39, 1e-12
  %v42 = vrsqrt.pop %v40
  %v43 = vrsqrt.pop %v41
  %v44 = vmul.f32 %v28, %v42
  %v45 = vmul.f32 %v29, %v43
  %v47 = vlaneseq
  %v48 = vshrl.u32 %v47, 7
  %v49 = vsub.s32 0, %v48
  %v50 = vrot.slane %v16, %v49
  %v52 = vmul.f32 %v44, %v50
  %v53 = vmul.f32 %v45, %v50
  %v55 = vlaneseq
  %v56 = vshrl.u32 %v55, 7
  %v57 = vsub.s32 0, %v56
  %v58 = vrot.slane %v17, %v57
  %v60 = vadd.f32 %v52, %v58
  %v61 = vadd.f32 %v53, %v58
  %62 = vst.msk [vmem:[%s3] sm:$0xff] %vm18, %v60
  %63 = vst.msk [vmem:[%s3 + $0x8] sm:$0xff] %vm18, %v61
  // Predicated region
  $region14: #{_forward.5} parent=0 // pred_check
    _
  $region15: #{_forward.5} parent=0 // pred_check_branch
    %65 = sbr.rel (0) target = $region17
  $region16: #{_forward.5} parent=0 // pred_region
    _
  $region17: #{_forward.5} parent=0 // pred_fallthru
    _
  // Predicated region
  $region18: #{_forward.5} parent=0 // pred_check
    _
  $region19: #{_forward.5} parent=0 // pred_check_branch
    %67 = sbr.rel (0) target = $region21
  $region20: #{_forward.5} parent=0 // pred_region
    _
  $region21: #{_forward.5} parent=0 // pred_fallthru
    _

// kernel: _forward.9
$region0: #{_forward.9}
  #allocation0 [shape = 'u32[]', space=smem, size = 0x4, offset = 0x4, fixed_abs, tag = 'smem constant byte address 0x4 - core index']
  #allocation1 [shape = 'u32[144,128]{1,0:T(1,128)}', space=vmem, size = 0x12000, scoped, tag = 'internal scratch']
  #allocation2 [shape = 'f32[2,16]{1,0:T(2,128)}', space=vmem, size = 0x400, scoped, tag = 'scratch operand']
  #allocation3 [shape = 's32[8,2,16]{2,1,0:T(2,128)}', space=vmem, size = 0x2000, scoped, tag = 'scratch operand']
  %s0 = inlined_call_operand.vmem [shape: f32[8,2,128], index: 0, kind: input, shape index: {}]
  %s1 = inlined_call_operand.vmem [shape: f32[8,2,128], index: 1, kind: input, shape index: {}]
  %s2 = inlined_call_operand.vmem [shape: f32[128,16], index: 2, kind: input, shape index: {}]
  %s3 = inlined_call_operand.vmem [shape: f32[128,16], index: 3, kind: input, shape index: {}]
  %s4 = inlined_call_operand.vmem [shape: f32[1,16], index: 4, kind: input, shape index: {}]
  %s5 = inlined_call_operand.vmem [shape: f32[8,2,1], index: 5, kind: input, shape index: {}]
  %s6 = inlined_call_operand.vmem [shape: f32[16,16], index: 6, kind: input, shape index: {}]
  %s7 = inlined_call_operand.vmem [shape: f32[1,16], index: 7, kind: input, shape index: {}]
  %s8 = inlined_call_operand.vmem [shape: f32[1,16], index: 8, kind: input, shape index: {}]
  %s9 = inlined_call_operand.vmem [shape: s32[8,2,1], index: 9, kind: output, shape index: {0}]
  %s10 = inlined_call_operand.vmem [shape: f32[8,2,16], index: 10, kind: output, shape index: {1}]
  %11 = xla_tuple %s9, %s10
  %s12 = sld [smem:[#allocation0]]
  $region68: #{_forward.9} parent=0
    _
  %s14 = ssub.s32 1, %s12
  %s15 = scalar_select 0, %s14, %s12
  // Predicated region
  $region2: #{_forward.9} parent=0 // pred_check
    _
  $region3: #{_forward.9} parent=0 // pred_check_branch
    %17 = sbr.rel (0) target = $region5
  $region4: #{_forward.9} parent=0 // pred_region
    _
  $region5: #{_forward.9} parent=0 // pred_fallthru
    _
  // Predicated region
  $region6: #{_forward.9} parent=0 // pred_check
    _
  $region7: #{_forward.9} parent=0 // pred_check_branch
    %19 = sbr.rel (0) target = $region9
  $region8: #{_forward.9} parent=0 // pred_region
    _
  $region9: #{_forward.9} parent=0 // pred_fallthru
    _
  // Predicated region
  $region10: #{_forward.9} parent=0 // pred_check
    _
  $region11: #{_forward.9} parent=0 // pred_check_branch
    %21 = sbr.rel (0) target = $region13
  $region12: #{_forward.9} parent=0 // pred_region
    _
  $region13: #{_forward.9} parent=0 // pred_fallthru
    _
  // Predicated region
  $region14: #{_forward.9} parent=0 // pred_check
    _
  $region15: #{_forward.9} parent=0 // pred_check_branch
    %23 = sbr.rel (0) target = $region17
  $region16: #{_forward.9} parent=0 // pred_region
    _
  $region17: #{_forward.9} parent=0 // pred_fallthru
    _
  // Predicated region
  $region18: #{_forward.9} parent=0 // pred_check
    _
  $region19: #{_forward.9} parent=0 // pred_check_branch
    %25 = sbr.rel (0) target = $region21
  $region20: #{_forward.9} parent=0 // pred_region
    _
  $region21: #{_forward.9} parent=0 // pred_fallthru
    _
  // Predicated region
  $region22: #{_forward.9} parent=0 // pred_check
    _
  $region23: #{_forward.9} parent=0 // pred_check_branch
    %27 = sbr.rel (0) target = $region25
  $region24: #{_forward.9} parent=0 // pred_region
    _
  $region25: #{_forward.9} parent=0 // pred_fallthru
    _
  // Predicated region
  $region26: #{_forward.9} parent=0 // pred_check
    _
  $region27: #{_forward.9} parent=0 // pred_check_branch
    %29 = sbr.rel (0) target = $region29
  $region28: #{_forward.9} parent=0 // pred_region
    _
  $region29: #{_forward.9} parent=0 // pred_fallthru
    _
  // Predicated region
  $region30: #{_forward.9} parent=0 // pred_check
    _
  $region31: #{_forward.9} parent=0 // pred_check_branch
    %31 = sbr.rel (0) target = $region33
  $region32: #{_forward.9} parent=0 // pred_region
    _
  $region33: #{_forward.9} parent=0 // pred_fallthru
    _
  // Predicated region
  $region34: #{_forward.9} parent=0 // pred_check
    _
  $region35: #{_forward.9} parent=0 // pred_check_branch
    %33 = sbr.rel (0) target = $region37
  $region36: #{_forward.9} parent=0 // pred_region
    _
  $region37: #{_forward.9} parent=0 // pred_fallthru
    _
  %v34 = vlaneseq
  %v35 = vand.u32 %v34, 127
  %v36 = vld [vmem:[%s6] sm:$0xff]
  %v37 = vld [vmem:[%s6 + $0x8] sm:$0xff]
  %v38 = vld [vmem:[%s2] sm:$0xff]
  %v39 = vld [vmem:[%s2 + $0x8] sm:$0xff]
  %v40 = vld [vmem:[%s2 + $0x10] sm:$0xff]
  %v41 = vld [vmem:[%s2 + $0x18] sm:$0xff]
  %v42 = vld [vmem:[%s2 + $0x20] sm:$0xff]
  %v43 = vld [vmem:[%s2 + $0x28] sm:$0xff]
  %v44 = vld [vmem:[%s2 + $0x30] sm:$0xff]
  %v45 = vld [vmem:[%s2 + $0x38] sm:$0xff]
  %v46 = vld [vmem:[%s2 + $0x40] sm:$0xff]
  %v47 = vld [vmem:[%s2 + $0x48] sm:$0xff]
  %v48 = vld [vmem:[%s2 + $0x50] sm:$0xff]
  %v49 = vld [vmem:[%s2 + $0x58] sm:$0xff]
  %v50 = vld [vmem:[%s2 + $0x60] sm:$0xff]
  %v51 = vld [vmem:[%s2 + $0x68] sm:$0xff]
  %v52 = vld [vmem:[%s2 + $0x70] sm:$0xff]
  %v53 = vld [vmem:[%s2 + $0x78] sm:$0xff]
  %v54 = vld [vmem:[%s3] sm:$0xff]
  %v55 = vld [vmem:[%s3 + $0x8] sm:$0xff]
  %v56 = vld [vmem:[%s3 + $0x10] sm:$0xff]
  %v57 = vld [vmem:[%s3 + $0x18] sm:$0xff]
  %v58 = vld [vmem:[%s3 + $0x20] sm:$0xff]
  %v59 = vld [vmem:[%s3 + $0x28] sm:$0xff]
  %v60 = vld [vmem:[%s3 + $0x30] sm:$0xff]
  %v61 = vld [vmem:[%s3 + $0x38] sm:$0xff]
  %v62 = vld [vmem:[%s3 + $0x40] sm:$0xff]
  %v63 = vld [vmem:[%s3 + $0x48] sm:$0xff]
  %v64 = vld [vmem:[%s3 + $0x50] sm:$0xff]
  %v65 = vld [vmem:[%s3 + $0x58] sm:$0xff]
  %v66 = vld [vmem:[%s3 + $0x60] sm:$0xff]
  %v67 = vld [vmem:[%s3 + $0x68] sm:$0xff]
  %v68 = vld [vmem:[%s3 + $0x70] sm:$0xff]
  %v69 = vld [vmem:[%s3 + $0x78] sm:$0xff]
  %v70 = vld [vmem:[%s4] sm:$0x1]
  %v71 = vld [vmem:[%s0] sm:$0x3]
  %v72 = vld [vmem:[%s1] sm:$0x3]
  %73 = vmatprep.subr.mxu0 0.0
  %74 = vmatpush1.msra.mxu0 %v54
  %75 = vmatprep.subr.mxu0 0.0
  %76 = vmatpush1.msra.mxu0 %v55
  %77 = vmatprep.subr.mxu0 0.0
  %78 = vmatpush1.msra.mxu0 %v56
  %79 = vmatprep.subr.mxu0 0.0
  %80 = vmatpush1.msra.mxu0 %v57
  %81 = vmatprep.subr.mxu0 0.0
  %82 = vmatpush1.msra.mxu0 %v58
  %83 = vmatprep.subr.mxu0 0.0
  %84 = vmatpush1.msra.mxu0 %v59
  %85 = vmatprep.subr.mxu0 0.0
  %86 = vmatpush1.msra.mxu0 %v60
  %87 = vmatprep.subr.mxu0 0.0
  %88 = vmatpush1.msra.mxu0 %v61
  %89 = vmatprep.subr.mxu0 0.0
  %90 = vmatpush1.msra.mxu0 %v62
  %91 = vmatprep.subr.mxu0 0.0
  %92 = vmatpush1.msra.mxu0 %v63
  %93 = vmatprep.subr.mxu0 0.0
  %94 = vmatpush1.msra.mxu0 %v64
  %95 = vmatprep.subr.mxu0 0.0
  %96 = vmatpush1.msra.mxu0 %v65
  %97 = vmatprep.subr.mxu0 0.0
  %98 = vmatpush1.msra.mxu0 %v66
  %99 = vmatprep.subr.mxu0 0.0
  %100 = vmatpush1.msra.mxu0 %v67
  %101 = vmatprep.subr.mxu0 0.0
  %102 = vmatpush1.msra.mxu0 %v68
  %103 = vmatprep.subr.mxu0 0.0
  %104 = vmatpush1.msra.mxu0 %v69
  %105 = vmatprep.subr.mxu0 0.0
  %106 = vmatpush1.msra.mxu0 0.0
  %107 = vmatprep.subr.mxu0 0.0
  %108 = vmatpush1.msra.mxu0 0.0
  %109 = vmatprep.subr.mxu0 0.0
  %110 = vmatpush1.msra.mxu0 0.0
  %111 = vmatprep.subr.mxu0 0.0
  %112 = vmatpush1.msra.mxu0 0.0
  %113 = vmatprep.subr.mxu0 0.0
  %114 = vmatpush1.msra.mxu0 0.0
  %115 = vmatprep.subr.mxu0 0.0
  %116 = vmatpush1.msra.mxu0 0.0
  %117 = vmatprep.subr.mxu0 0.0
  %118 = vmatpush1.msra.mxu0 0.0
  %119 = vmatprep.subr.mxu0 0.0
  %120 = vmatpush1.msra.mxu0 0.0
  %121 = vmatprep.subr.mxu0 0.0
  %122 = vmatpush1.msra.mxu0 0.0
  %123 = vmatprep.subr.mxu0 0.0
  %124 = vmatpush1.msra.mxu0 0.0
  %125 = vmatprep.subr.mxu0 0.0
  %126 = vmatpush1.msra.mxu0 0.0
  %127 = vmatprep.subr.mxu0 0.0
  %128 = vmatpush1.msra.mxu0 0.0
  %129 = vmatprep.subr.mxu0 0.0
  %130 = vmatpush1.msra.mxu0 0.0
  %131 = vmatprep.subr.mxu0 0.0
  %132 = vmatpush1.msra.mxu0 0.0
  %133 = vmatprep.subr.mxu0 0.0
  %134 = vmatpush1.msra.mxu0 0.0
  %135 = vmatprep.subr.mxu0 0.0
  %136 = vmatpush1.msra.mxu0 0.0
  %137 = vmatprep.mubr.f32.mxu0 0.0
  %138 = vmatmul.mubr.f32.gmra.mrb[0].mxu0 %v72
  %v139 = vpop.f32.mrb[0].mxu0
  %v140 = vadd.f32 0.0, %v139
  %v141 = vpop.f32.mrb[0].mxu0
  %142 = vdwg.mxu0
  %143 = vmatprep.subr.mxu0 0.0
  %144 = vmatpush1.msra.mxu0 %v38
  %145 = vmatprep.subr.mxu0 0.0
  %146 = vmatpush1.msra.mxu0 %v39
  %147 = vmatprep.subr.mxu0 0.0
  %148 = vmatpush1.msra.mxu0 %v40
  %149 = vmatprep.subr.mxu0 0.0
  %150 = vmatpush1.msra.mxu0 %v41
  %151 = vmatprep.subr.mxu0 0.0
  %152 = vmatpush1.msra.mxu0 %v42
  %153 = vmatprep.subr.mxu0 0.0
  %154 = vmatpush1.msra.mxu0 %v43
  %155 = vmatprep.subr.mxu0 0.0
  %156 = vmatpush1.msra.mxu0 %v44
  %157 = vmatprep.subr.mxu0 0.0
  %158 = vmatpush1.msra.mxu0 %v45
  %159 = vmatprep.subr.mxu0 0.0
  %160 = vmatpush1.msra.mxu0 %v46
  %161 = vmatprep.subr.mxu0 0.0
  %162 = vmatpush1.msra.mxu0 %v47
  %163 = vmatprep.subr.mxu0 0.0
  %164 = vmatpush1.msra.mxu0 %v48
  %165 = vmatprep.subr.mxu0 0.0
  %166 = vmatpush1.msra.mxu0 %v49
  %167 = vmatprep.subr.mxu0 0.0
  %168 = vmatpush1.msra.mxu0 %v50
  %169 = vmatprep.subr.mxu0 0.0
  %170 = vmatpush1.msra.mxu0 %v51
  %171 = vmatprep.subr.mxu0 0.0
  %172 = vmatpush1.msra.mxu0 %v52
  %173 = vmatprep.subr.mxu0 0.0
  %174 = vmatpush1.msra.mxu0 %v53
  %175 = vmatprep.subr.mxu0 0.0
  %176 = vmatpush1.msra.mxu0 0.0
  %177 = vmatprep.subr.mxu0 0.0
  %178 = vmatpush1.msra.mxu0 0.0
  %179 = vmatprep.subr.mxu0 0.0
  %180 = vmatpush1.msra.mxu0 0.0
  %181 = vmatprep.subr.mxu0 0.0
  %182 = vmatpush1.msra.mxu0 0.0
  %183 = vmatprep.subr.mxu0 0.0
  %184 = vmatpush1.msra.mxu0 0.0
  %185 = vmatprep.subr.mxu0 0.0
  %186 = vmatpush1.msra.mxu0 0.0
  %187 = vmatprep.subr.mxu0 0.0
  %188 = vmatpush1.msra.mxu0 0.0
  %189 = vmatprep.subr.mxu0 0.0
  %190 = vmatpush1.msra.mxu0 0.0
  %191 = vmatprep.subr.mxu0 0.0
  %192 = vmatpush1.msra.mxu0 0.0
  %193 = vmatprep.subr.mxu0 0.0
  %194 = vmatpush1.msra.mxu0 0.0
  %195 = vmatprep.subr.mxu0 0.0
  %196 = vmatpush1.msra.mxu0 0.0
  %197 = vmatprep.subr.mxu0 0.0
  %198 = vmatpush1.msra.mxu0 0.0
  %199 = vmatprep.subr.mxu0 0.0
  %200 = vmatpush1.msra.mxu0 0.0
  %201 = vmatprep.subr.mxu0 0.0
  %202 = vmatpush1.msra.mxu0 0.0
  %203 = vmatprep.subr.mxu0 0.0
  %204 = vmatpush1.msra.mxu0 0.0
  %205 = vmatprep.subr.mxu0 0.0
  %206 = vmatpush1.msra.mxu0 0.0
  %207 = vmatprep.mubr.f32.mxu0 0.0
  %208 = vmatmul.mubr.f32.gmra.mrb[0].mxu0 %v71
  %v209 = vpop.f32.mrb[0].mxu0
  %v210 = vadd.f32 %v140, %v209
  %v211 = vpop.f32.mrb[0].mxu0
  %212 = vdwg.mxu0
  %v214 = vlaneseq
  %v215 = vshrl.u32 %v214, 7
  %v216 = vsub.s32 0, %v215
  %v217 = vrot.slane %v70, %v216
  %v219 = vadd.f32 %v210, %v217
  %vm220 = vcmask 123904
  %221 = vst.msk [vmem:[%s10] sm:$0x3] %vm220, %v219
  %v222 = vld [vmem:[%s7] sm:$0x1]
  %v224 = vlaneseq
  %v225 = vshrl.u32 %v224, 7
  %v226 = vsub.s32 0, %v225
  %v227 = vrot.slane %v222, %v226
  %v229 = vadd.f32 %v227, %v219
  %230 = vst.msk [vmem:[#allocation2] sm:$0x3] %vm220, %v229
  %231 = vst.msk [vmem:[#allocation3] sm:$0x3] %vm220, %v35
  loop: start=1, step=1, limit=8
  $region38: #{_forward.9} parent=0 // loop_pre_header
    _
  $region39: #{_forward.9} parent=0 // loop_header
    %s233 = sphi 1, %s237
    %p234 = scmp.ge.s32.totalorder %s233, 8
  $region40: #{_forward.9} parent=0 // loop_header_branch
    %236 = sbr.rel (%p234) target = $region44
  $region41: #{_forward.9} parent=0 // loop_body
    %s238 = smul.u32 %s233, 2
    %s239 = scalar_lea.vmem %s0, %s238
    %v240 = vld [vmem:[%s239] sm:$0x3]
    %s241 = scalar_lea.vmem %s1, %s238
    %v242 = vld [vmem:[%s241] sm:$0x3]
    %243 = vmatprep.subr.mxu0 0.0
    %244 = vmatpush1.msra.mxu0 %v54
    %245 = vmatprep.subr.mxu0 0.0
    %246 = vmatpush1.msra.mxu0 %v55
    %247 = vmatprep.subr.mxu0 0.0
    %248 = vmatpush1.msra.mxu0 %v56
    %249 = vmatprep.subr.mxu0 0.0
    %250 = vmatpush1.msra.mxu0 %v57
    %251 = vmatprep.subr.mxu0 0.0
    %252 = vmatpush1.msra.mxu0 %v58
    %253 = vmatprep.subr.mxu0 0.0
    %254 = vmatpush1.msra.mxu0 %v59
    %255 = vmatprep.subr.mxu0 0.0
    %256 = vmatpush1.msra.mxu0 %v60
    %257 = vmatprep.subr.mxu0 0.0
    %258 = vmatpush1.msra.mxu0 %v61
    %259 = vmatprep.subr.mxu0 0.0
    %260 = vmatpush1.msra.mxu0 %v62
    %261 = vmatprep.subr.mxu0 0.0
    %262 = vmatpush1.msra.mxu0 %v63
    %263 = vmatprep.subr.mxu0 0.0
    %264 = vmatpush1.msra.mxu0 %v64
    %265 = vmatprep.subr.mxu0 0.0
    %266 = vmatpush1.msra.mxu0 %v65
    %267 = vmatprep.subr.mxu0 0.0
    %268 = vmatpush1.msra.mxu0 %v66
    %269 = vmatprep.subr.mxu0 0.0
    %270 = vmatpush1.msra.mxu0 %v67
    %271 = vmatprep.subr.mxu0 0.0
    %272 = vmatpush1.msra.mxu0 %v68
    %273 = vmatprep.subr.mxu0 0.0
    %274 = vmatpush1.msra.mxu0 %v69
    %275 = vmatprep.subr.mxu0 0.0
    %276 = vmatpush1.msra.mxu0 0.0
    %277 = vmatprep.subr.mxu0 0.0
    %278 = vmatpush1.msra.mxu0 0.0
    %279 = vmatprep.subr.mxu0 0.0
    %280 = vmatpush1.msra.mxu0 0.0
    %281 = vmatprep.subr.mxu0 0.0
    %282 = vmatpush1.msra.mxu0 0.0
    %283 = vmatprep.subr.mxu0 0.0
    %284 = vmatpush1.msra.mxu0 0.0
    %285 = vmatprep.subr.mxu0 0.0
    %286 = vmatpush1.msra.mxu0 0.0
    %287 = vmatprep.subr.mxu0 0.0
    %288 = vmatpush1.msra.mxu0 0.0
    %289 = vmatprep.subr.mxu0 0.0
    %290 = vmatpush1.msra.mxu0 0.0
    %291 = vmatprep.subr.mxu0 0.0
    %292 = vmatpush1.msra.mxu0 0.0
    %293 = vmatprep.subr.mxu0 0.0
    %294 = vmatpush1.msra.mxu0 0.0
    %295 = vmatprep.subr.mxu0 0.0
    %296 = vmatpush1.msra.mxu0 0.0
    %297 = vmatprep.subr.mxu0 0.0
    %298 = vmatpush1.msra.mxu0 0.0
    %299 = vmatprep.subr.mxu0 0.0
    %300 = vmatpush1.msra.mxu0 0.0
    %301 = vmatprep.subr.mxu0 0.0
    %302 = vmatpush1.msra.mxu0 0.0
    %303 = vmatprep.subr.mxu0 0.0
    %304 = vmatpush1.msra.mxu0 0.0
    %305 = vmatprep.subr.mxu0 0.0
    %306 = vmatpush1.msra.mxu0 0.0
    %307 = vmatprep.mubr.f32.mxu0 0.0
    %308 = vmatmul.mubr.f32.gmra.mrb[0].mxu0 %v242
    %v309 = vpop.f32.mrb[0].mxu0
    %v310 = vadd.f32 0.0, %v309
    %v311 = vpop.f32.mrb[0].mxu0
    %312 = vdwg.mxu0
    %313 = vmatprep.subr.mxu0 0.0
    %314 = vmatpush1.msra.mxu0 %v38
    %315 = vmatprep.subr.mxu0 0.0
    %316 = vmatpush1.msra.mxu0 %v39
    %317 = vmatprep.subr.mxu0 0.0
    %318 = vmatpush1.msra.mxu0 %v40
    %319 = vmatprep.subr.mxu0 0.0
    %320 = vmatpush1.msra.mxu0 %v41
    %321 = vmatprep.subr.mxu0 0.0
    %322 = vmatpush1.msra.mxu0 %v42
    %323 = vmatprep.subr.mxu0 0.0
    %324 = vmatpush1.msra.mxu0 %v43
    %325 = vmatprep.subr.mxu0 0.0
    %326 = vmatpush1.msra.mxu0 %v44
    %327 = vmatprep.subr.mxu0 0.0
    %328 = vmatpush1.msra.mxu0 %v45
    %329 = vmatprep.subr.mxu0 0.0
    %330 = vmatpush1.msra.mxu0 %v46
    %331 = vmatprep.subr.mxu0 0.0
    %332 = vmatpush1.msra.mxu0 %v47
    %333 = vmatprep.subr.mxu0 0.0
    %334 = vmatpush1.msra.mxu0 %v48
    %335 = vmatprep.subr.mxu0 0.0
    %336 = vmatpush1.msra.mxu0 %v49
    %337 = vmatprep.subr.mxu0 0.0
    %338 = vmatpush1.msra.mxu0 %v50
    %339 = vmatprep.subr.mxu0 0.0
    %340 = vmatpush1.msra.mxu0 %v51
    %341 = vmatprep.subr.mxu0 0.0
    %342 = vmatpush1.msra.mxu0 %v52
    %343 = vmatprep.subr.mxu0 0.0
    %344 = vmatpush1.msra.mxu0 %v53
    %345 = vmatprep.subr.mxu0 0.0
    %346 = vmatpush1.msra.mxu0 0.0
    %347 = vmatprep.subr.mxu0 0.0
    %348 = vmatpush1.msra.mxu0 0.0
    %349 = vmatprep.subr.mxu0 0.0
    %350 = vmatpush1.msra.mxu0 0.0
    %351 = vmatprep.subr.mxu0 0.0
    %352 = vmatpush1.msra.mxu0 0.0
    %353 = vmatprep.subr.mxu0 0.0
    %354 = vmatpush1.msra.mxu0 0.0
    %355 = vmatprep.subr.mxu0 0.0
    %356 = vmatpush1.msra.mxu0 0.0
    %357 = vmatprep.subr.mxu0 0.0
    %358 = vmatpush1.msra.mxu0 0.0
    %359 = vmatprep.subr.mxu0 0.0
    %360 = vmatpush1.msra.mxu0 0.0
    %361 = vmatprep.subr.mxu0 0.0
    %362 = vmatpush1.msra.mxu0 0.0
    %363 = vmatprep.subr.mxu0 0.0
    %364 = vmatpush1.msra.mxu0 0.0
    %365 = vmatprep.subr.mxu0 0.0
    %366 = vmatpush1.msra.mxu0 0.0
    %367 = vmatprep.subr.mxu0 0.0
    %368 = vmatpush1.msra.mxu0 0.0
    %369 = vmatprep.subr.mxu0 0.0
    %370 = vmatpush1.msra.mxu0 0.0
    %371 = vmatprep.subr.mxu0 0.0
    %372 = vmatpush1.msra.mxu0 0.0
    %373 = vmatprep.subr.mxu0 0.0
    %374 = vmatpush1.msra.mxu0 0.0
    %375 = vmatprep.subr.mxu0 0.0
    %376 = vmatpush1.msra.mxu0 0.0
    %377 = vmatprep.mubr.f32.mxu0 0.0
    %378 = vmatmul.mubr.f32.gmra.mrb[0].mxu0 %v240
    %v379 = vpop.f32.mrb[0].mxu0
    %v380 = vadd.f32 %v310, %v379
    %v381 = vpop.f32.mrb[0].mxu0
    %382 = vdwg.mxu0
    %v383 = vadd.f32 %v380, %v217
    %s384 = scalar_lea.vmem %s10, %s238
    %385 = vst.msk [vmem:[%s384] sm:$0x3] %vm220, %v383
    %v386 = vld [vmem:[#allocation2] sm:$0x3]
    %v389 = vunpack.c.l.s4 1966171168
    %v390 = vunpack.c.0.s8 %v389
    %v391 = vlaneseq
    %v392 = vshrl.u32 %v391, 7
    %v393 = vsub.s32 %v390, %v392
    %v394 = vrot.slane %v386, %v393
    %v395 = vcombine.high %v394, %v394
    %v397 = vunpack.c.l.s4 1966171168
    %v398 = vunpack.c.0.s8 %v397
    %v399 = vlaneseq
    %v400 = vshrl.u32 %v399, 7
    %v401 = vsub.s32 %v398, %v400
    %v402 = vrot.slane %v394, %v401
    %v404 = vunpack.c.l.s4 1966171168
    %v405 = vunpack.c.0.s8 %v404
    %v406 = vlaneseq
    %v407 = vshrl.u32 %v406, 7
    %v408 = vsub.s32 %v405, %v407
    %v409 = vrot.slane %v395, %v408
    %v410 = vlaneseq
    %v411 = vshrl.u32 %v410, 7
    %v412 = vsub.s32 0, %v411
    %v413 = vrot.slane %v402, %v412
    %v414 = vlaneseq
    %v415 = vshrl.u32 %v414, 7
    %v416 = vsub.s32 0, %v415
    %v417 = vrot.slane %v409, %v416
    %v420 = vadd.f32 %v413, %v36
    %v421 = vadd.f32 %v413, %v37
    %v422 = vadd.f32 %v417, %v36
    %v423 = vadd.f32 %v417, %v37
    %vm424 = vcmask 130048
    %v425 = vsel %vm424, %v420, -inf
    %426 = vmax.xlane.f32.xlu0 %v425
    %v427 = vpop.xlane.xlu0 %426
    %v428 = vsel %vm424, %v421, -inf
    %429 = vmax.xlane.f32.xlu0 %v428
    %v430 = vpop.xlane.xlu0 %429
    %v431 = vsel %vm424, %v422, -inf
    %432 = vmax.xlane.f32.xlu0 %v431
    %v433 = vpop.xlane.xlu0 %432
    %v434 = vsel %vm424, %v423, -inf
    %435 = vmax.xlane.f32.xlu0 %v434
    %v436 = vpop.xlane.xlu0 %435
    %vm437 = vcmp.ge.f32.partialorder %v420, %v427
    %vm438 = vcmp.ge.f32.partialorder %v421, %v430
    %vm439 = vcmp.ge.f32.partialorder %v422, %v433
    %vm440 = vcmp.ge.f32.partialorder %v423, %v436
    %v441 = vsel %vm437, %v35, 16
    %v442 = vsel %vm438, %v35, 16
    %v443 = vsel %vm439, %v35, 16
    %v444 = vsel %vm440, %v35, 16
    %v445 = vsel %vm424, %v441, 2147483647
    %v446 = vand.u32 %v445, 65535
    %v447 = vshra.s32 %v445, 16
    %v448 = vcvt.s32.f32 %v446
    %v449 = vcvt.s32.f32 %v447
    %450 = vmin.xlane.f32.xlu0 %v449
    %v451 = vpop.xlane.xlu0 %450
    %vm452 = vcmp.eq.f32.partialorder %v449, %v451
    %v453 = vsel %vm452, %v448, inf
    %454 = vmin.xlane.f32.xlu0 %v453
    %v455 = vpop.xlane.xlu0 %454
    %v456 = vcvt.f32.s32 %v455
    %v457 = vcvt.f32.s32 %v451
    %v458 = vshll.u32 %v457, 16
    %v459 = vadd.s32 %v458, %v456
    %v460 = vsel %vm424, %v442, 2147483647
    %v461 = vand.u32 %v460, 65535
    %v462 = vshra.s32 %v460, 16
    %v463 = vcvt.s32.f32 %v461
    %v464 = vcvt.s32.f32 %v462
    %465 = vmin.xlane.f32.xlu0 %v464
    %v466 = vpop.xlane.xlu0 %465
    %vm467 = vcmp.eq.f32.partialorder %v464, %v466
    %v468 = vsel %vm467, %v463, inf
    %469 = vmin.xlane.f32.xlu0 %v468
    %v470 = vpop.xlane.xlu0 %469
    %v471 = vcvt.f32.s32 %v470
    %v472 = vcvt.f32.s32 %v466
    %v473 = vshll.u32 %v472, 16
    %v474 = vadd.s32 %v473, %v471
    %v475 = vsel %vm424, %v443, 2147483647
    %v476 = vand.u32 %v475, 65535
    %v477 = vshra.s32 %v475, 16
    %v478 = vcvt.s32.f32 %v476
    %v479 = vcvt.s32.f32 %v477
    %480 = vmin.xlane.f32.xlu0 %v479
    %v481 = vpop.xlane.xlu0 %480
    %vm482 = vcmp.eq.f32.partialorder %v479, %v481
    %v483 = vsel %vm482, %v478, inf
    %484 = vmin.xlane.f32.xlu0 %v483
    %v485 = vpop.xlane.xlu0 %484
    %v486 = vcvt.f32.s32 %v485
    %v487 = vcvt.f32.s32 %v481
    %v488 = vshll.u32 %v487, 16
    %v489 = vadd.s32 %v488, %v486
    %v490 = vsel %vm424, %v444, 2147483647
    %v491 = vand.u32 %v490, 65535
    %v492 = vshra.s32 %v490, 16
    %v493 = vcvt.s32.f32 %v491
    %v494 = vcvt.s32.f32 %v492
    %495 = vmin.xlane.f32.xlu0 %v494
    %v496 = vpop.xlane.xlu0 %495
    %vm497 = vcmp.eq.f32.partialorder %v494, %v496
    %v498 = vsel %vm497, %v493, inf
    %499 = vmin.xlane.f32.xlu0 %v498
    %v500 = vpop.xlane.xlu0 %499
    %v501 = vcvt.f32.s32 %v500
    %v502 = vcvt.f32.s32 %v496
    %v503 = vshll.u32 %v502, 16
    %v504 = vadd.s32 %v503, %v501
    %v506 = vlaneseq
    %v507 = vshrl.u32 %v506, 7
    %v508 = vsub.s32 0, %v507
    %v509 = vrot.slane %v383, %v508
    %511 = vbcast.lane.b32.xlu0 %v509, 256
    %v512 = vpop.permute.xlu0 %511
    %s514 = sor.u32 256, 8
    %515 = vbcast.lane.b32.xlu0 %v509, %s514
    %v516 = vpop.permute.xlu0 %515
    %v517 = vlaneseq
    %v518 = vshrl.u32 %v517, 7
    %v519 = vsub.s32 1, %v518
    %v520 = vrot.slane %v383, %v519
    %522 = vbcast.lane.b32.xlu0 %v520, 256
    %v523 = vpop.permute.xlu0 %522
    %s525 = sor.u32 256, 8
    %526 = vbcast.lane.b32.xlu0 %v520, %s525
    %v527 = vpop.permute.xlu0 %526
    %v532 = vadd.f32 %v427, %v512
    %v533 = vadd.f32 %v430, %v516
    %v534 = vadd.f32 %v433, %v523
    %v535 = vadd.f32 %v436, %v527
    %s536 = scalar_lea.vmem %s5, %s238
    %v537 = vld [vmem:[%s536] sm:$0x3]
    %vm538 = vcmp.gt.f32.partialorder %v537, 0.5
    %v539 = vsel %vm538, 1, 0
    %540 = vset.pattern.permute.xlu0 0
    %541 = vperm.xlu0 %540, %v539
    %v542 = vpop.permute.xlu0 %541
    %vm543 = vcmp.eq.s32.totalorder %v542, 1
    %548 = vset.pattern.permute.xlu0 0
    %549 = vperm.xlu0 %548, %v532
    %v550 = vpop.permute.xlu0 %549
    %551 = vset.pattern.permute.xlu0 0
    %552 = vperm.xlu0 %551, %v533
    %v553 = vpop.permute.xlu0 %552
    %554 = vset.pattern.permute.xlu0 0
    %555 = vperm.xlu0 %554, %v534
    %v556 = vpop.permute.xlu0 %555
    %557 = vset.pattern.permute.xlu0 0
    %558 = vperm.xlu0 %557, %v535
    %v559 = vpop.permute.xlu0 %558
    %v560 = vlaneseq
    %v561 = vshrl.u32 %v560, 7
    %v562 = vsub.s32 %v35, %v561
    %v563 = vrot.slane %v550, %v562
    %v564 = vadd.s32 %v35, 4294967288
    %v565 = vlaneseq
    %v566 = vshrl.u32 %v565, 7
    %v567 = vsub.s32 %v564, %v566
    %v568 = vrot.slane %v553, %v567
    %vm569 = vcmask 130112
    %v570 = vsel %vm569, %v568, %v563
    %v571 = vlaneseq
    %v572 = vshrl.u32 %v571, 7
    %v573 = vsub.s32 %v35, %v572
    %v574 = vrot.slane %v556, %v573
    %v575 = vlaneseq
    %v576 = vshrl.u32 %v575, 7
    %v577 = vsub.s32 %v564, %v576
    %v578 = vrot.slane %v559, %v577
    %v579 = vsel %vm569, %v578, %v574
    %vm580 = vcmask 1041409
    %v581 = vsel %vm580, %v579, %v570
    %v583 = vsel %vm543, %v581, %v386
    %584 = vst.msk [vmem:[#allocation2] sm:$0x3] %vm220, %v583
    %v585 = vlaneseq
    %v586 = vshrl.u32 %v585, 7
    %v587 = vsub.s32 %v35, %v586
    %v588 = vrot.slane %v459, %v587
    %v589 = vlaneseq
    %v590 = vshrl.u32 %v589, 7
    %v591 = vsub.s32 %v564, %v590
    %v592 = vrot.slane %v474, %v591
    %v593 = vsel %vm569, %v592, %v588
    %v594 = vlaneseq
    %v595 = vshrl.u32 %v594, 7
    %v596 = vsub.s32 %v35, %v595
    %v597 = vrot.slane %v489, %v596
    %v598 = vlaneseq
    %v599 = vshrl.u32 %v598, 7
    %v600 = vsub.s32 %v564, %v599
    %v601 = vrot.slane %v504, %v600
    %v602 = vsel %vm569, %v601, %v597
    %v603 = vsel %vm580, %v602, %v593
    %v604 = vsel %vm543, %v603, %v35
    %s605 = scalar_lea.vmem [#allocation3], %s238
    %606 = vst.msk [vmem:[%s605] sm:$0x3] %vm220, %v604
  $region42: #{_forward.9} parent=0 // loop_footer
    %s237 = sadd.s32 1, %s233
  $region43: #{_forward.9} parent=0 // loop_footer_branch
    %232 = sbr.rel target = $region39
  $region44: #{_forward.9} parent=0 // loop_exit
    _
  %v607 = vld [vmem:[#allocation2] sm:$0x3]
  %v608 = vld [vmem:[%s8] sm:$0x1]
  %v610 = vlaneseq
  %v611 = vshrl.u32 %v610, 7
  %v612 = vsub.s32 0, %v611
  %v613 = vrot.slane %v608, %v612
  %v615 = vadd.f32 %v607, %v613
  %v616 = vsel %vm220, %v615, -inf
  %617 = vmax.xlane.f32.xlu0 %v616
  %v618 = vpop.xlane.xlu0 %617
  %vm619 = vcmp.ge.f32.partialorder %v615, %v618
  %v620 = vsel %vm619, %v35, 16
  %v621 = vsel %vm220, %v620, 2147483647
  %v622 = vand.u32 %v621, 65535
  %v623 = vshra.s32 %v621, 16
  %v624 = vcvt.s32.f32 %v622
  %v625 = vcvt.s32.f32 %v623
  %626 = vmin.xlane.f32.xlu0 %v625
  %v627 = vpop.xlane.xlu0 %626
  %vm628 = vcmp.eq.f32.partialorder %v625, %v627
  %v629 = vsel %vm628, %v624, inf
  %630 = vmin.xlane.f32.xlu0 %v629
  %v631 = vpop.xlane.xlu0 %630
  %v632 = vcvt.f32.s32 %v631
  %v633 = vcvt.f32.s32 %v627
  %v634 = vshll.u32 %v633, 16
  %v635 = vadd.s32 %v634, %v632
  loop: start=0, step=1, limit=8
  $region45: #{_forward.9} parent=0 // loop_pre_header
    _
  $region46: #{_forward.9} parent=0 // loop_header
    %s637 = sphi 0, %s641
    %p638 = scmp.ge.s32.totalorder %s637, 8
    %v642 = vphi %v635, %v664
  $region47: #{_forward.9} parent=0 // loop_header_branch
    %640 = sbr.rel (%p638) target = $region51
  $region48: #{_forward.9} parent=0 // loop_body
    %s643 = ssub.s32 7, %s637
    %s644 = smul.u32 %s643, 2
    %s645 = scalar_lea.vmem %s9, %s644
    %vm646 = vcmask 1024
    %647 = vst.msk [vmem:[%s645] sm:$0x3] %vm646, %v642
    %vm648 = vcmp.eq.s32.totalorder %v35, %v642
    %s649 = scalar_lea.vmem [#allocation3], %s644
    %v650 = vld [vmem:[%s649] sm:$0x3]
    %v651 = vsel %vm648, %v650, 0
    %v652 = vsel %vm220, %v651, 0
    %v653 = vand.u32 %v652, 65535
    %v654 = vshrl.u32 %v652, 16
    %v655 = vcvt.s32.f32 %v653
    %v656 = vcvt.s32.f32 %v654
    %657 = vadd.xlane.f32.xlu0 %v655
    %v658 = vpop.xlane.xlu0 %657
    %659 = vadd.xlane.f32.xlu0 %v656
    %v660 = vpop.xlane.xlu0 %659
    %v661 = vcvt.f32.s32 %v658
    %v662 = vcvt.f32.s32 %v660
    %v663 = vshll.u32 %v662, 16
    %v664 = vadd.s32 %v663, %v661
  $region49: #{_forward.9} parent=0 // loop_footer
    %s641 = sadd.s32 1, %s637
  $region50: #{_forward.9} parent=0 // loop_footer_branch
    %636 = sbr.rel target = $region46
  $region51: #{_forward.9} parent=0 // loop_exit
    _
  // Predicated region
  $region52: #{_forward.9} parent=0 // pred_check
    _
  $region53: #{_forward.9} parent=0 // pred_check_branch
    %666 = sbr.rel (0) target = $region55
  $region54: #{_forward.9} parent=0 // pred_region
    _
  $region55: #{_forward.9} parent=0 // pred_fallthru
    _
  // Predicated region
  $region56: #{_forward.9} parent=0 // pred_check
    _
  $region57: #{_forward.9} parent=0 // pred_check_branch
    %668 = sbr.rel (0) target = $region59
  $region58: #{_forward.9} parent=0 // pred_region
    _
  $region59: #{_forward.9} parent=0 // pred_fallthru
    _
  // Predicated region
  $region60: #{_forward.9} parent=0 // pred_check
    _
  $region61: #{_forward.9} parent=0 // pred_check_branch
    %670 = sbr.rel (0) target = $region63
  $region62: #{_forward.9} parent=0 // pred_region
    _
  $region63: #{_forward.9} parent=0 // pred_fallthru
    _
  // Predicated region
  $region64: #{_forward.9} parent=0 // pred_check
    _
  $region65: #{_forward.9} parent=0 // pred_check_branch
    %672 = sbr.rel (0) target = $region67
  $region66: #{_forward.9} parent=0 // pred_region
    _
  $region67: #{_forward.9} parent=0 // pred_fallthru
    _

// kernel: _forward.8
$region0: #{_forward.8}
  #allocation0 [shape = 'u32[]', space=smem, size = 0x4, offset = 0x4, fixed_abs, tag = 'smem constant byte address 0x4 - core index']
  #allocation1 [shape = 'u32[144,128]{1,0:T(1,128)}', space=vmem, size = 0x12000, scoped, tag = 'internal scratch']
  #allocation2 [shape = 'f32[2,128]{1,0:T(2,128)}', space=vmem, size = 0x400, scoped, tag = 'scratch operand']
  #allocation3 [shape = 'f32[2,128]{1,0:T(2,128)}', space=vmem, size = 0x400, scoped, tag = 'scratch operand']
  #allocation4 [shape = 'f32[2,128]{1,0:T(2,128)}', space=vmem, size = 0x400, scoped, tag = 'scratch operand']
  #allocation5 [shape = 'f32[2,128]{1,0:T(2,128)}', space=vmem, size = 0x400, scoped, tag = 'scratch operand']
  %s0 = inlined_call_operand.vmem [shape: f32[8,2,32], index: 0, kind: input, shape index: {}]
  %s1 = inlined_call_operand.vmem [shape: f32[32,512], index: 1, kind: input, shape index: {}]
  %s2 = inlined_call_operand.vmem [shape: f32[128,512], index: 2, kind: input, shape index: {}]
  %s3 = inlined_call_operand.vmem [shape: f32[1,512], index: 3, kind: input, shape index: {}]
  %s4 = inlined_call_operand.vmem [shape: f32[32,512], index: 4, kind: input, shape index: {}]
  %s5 = inlined_call_operand.vmem [shape: f32[128,512], index: 5, kind: input, shape index: {}]
  %s6 = inlined_call_operand.vmem [shape: f32[1,512], index: 6, kind: input, shape index: {}]
  %s7 = inlined_call_operand.vmem [shape: f32[8,2,128], index: 7, kind: output, shape index: {0}]
  %s8 = inlined_call_operand.vmem [shape: f32[8,2,128], index: 8, kind: output, shape index: {1}]
  %9 = xla_tuple %s7, %s8
  %s10 = sld [smem:[#allocation0]]
  $region53: #{_forward.8} parent=0
    _
  %s12 = ssub.s32 1, %s10
  %s13 = scalar_select 0, %s12, %s10
  // Predicated region
  $region2: #{_forward.8} parent=0 // pred_check
    _
  $region3: #{_forward.8} parent=0 // pred_check_branch
    %15 = sbr.rel (0) target = $region5
  $region4: #{_forward.8} parent=0 // pred_region
    _
  $region5: #{_forward.8} parent=0 // pred_fallthru
    _
  // Predicated region
  $region6: #{_forward.8} parent=0 // pred_check
    _
  $region7: #{_forward.8} parent=0 // pred_check_branch
    %17 = sbr.rel (0) target = $region9
  $region8: #{_forward.8} parent=0 // pred_region
    _
  $region9: #{_forward.8} parent=0 // pred_fallthru
    _
  // Predicated region
  $region10: #{_forward.8} parent=0 // pred_check
    _
  $region11: #{_forward.8} parent=0 // pred_check_branch
    %19 = sbr.rel (0) target = $region13
  $region12: #{_forward.8} parent=0 // pred_region
    _
  $region13: #{_forward.8} parent=0 // pred_fallthru
    _
  // Predicated region
  $region14: #{_forward.8} parent=0 // pred_check
    _
  $region15: #{_forward.8} parent=0 // pred_check_branch
    %21 = sbr.rel (0) target = $region17
  $region16: #{_forward.8} parent=0 // pred_region
    _
  $region17: #{_forward.8} parent=0 // pred_fallthru
    _
  // Predicated region
  $region18: #{_forward.8} parent=0 // pred_check
    _
  $region19: #{_forward.8} parent=0 // pred_check_branch
    %23 = sbr.rel (0) target = $region21
  $region20: #{_forward.8} parent=0 // pred_region
    _
  $region21: #{_forward.8} parent=0 // pred_fallthru
    _
  // Predicated region
  $region22: #{_forward.8} parent=0 // pred_check
    _
  $region23: #{_forward.8} parent=0 // pred_check_branch
    %25 = sbr.rel (0) target = $region25
  $region24: #{_forward.8} parent=0 // pred_region
    _
  $region25: #{_forward.8} parent=0 // pred_fallthru
    _
  // Predicated region
  $region26: #{_forward.8} parent=0 // pred_check
    _
  $region27: #{_forward.8} parent=0 // pred_check_branch
    %27 = sbr.rel (0) target = $region29
  $region28: #{_forward.8} parent=0 // pred_region
    _
  $region29: #{_forward.8} parent=0 // pred_fallthru
    _
  %28 = vst [vmem:[#allocation2] sm:$0x3] 0.0
  %29 = vst [vmem:[#allocation3] sm:$0x3] 0.0
  %30 = vst [vmem:[#allocation4] sm:$0x3] 0.0
  %31 = vst [vmem:[#allocation5] sm:$0x3] 0.0
  %v32 = vld [vmem:[%s1] sm:$0xff]
  %v33 = vld [vmem:[%s1 + $0x8] sm:$0xff]
  %v34 = vld [vmem:[%s1 + $0x10] sm:$0xff]
  %v35 = vld [vmem:[%s1 + $0x18] sm:$0xff]
  %v36 = vld [vmem:[%s1 + $0x20] sm:$0xff]
  %v37 = vld [vmem:[%s1 + $0x28] sm:$0xff]
  %v38 = vld [vmem:[%s1 + $0x30] sm:$0xff]
  %v39 = vld [vmem:[%s1 + $0x38] sm:$0xff]
  %v40 = vld [vmem:[%s1 + $0x40] sm:$0xff]
  %v41 = vld [vmem:[%s1 + $0x48] sm:$0xff]
  %v42 = vld [vmem:[%s1 + $0x50] sm:$0xff]
  %v43 = vld [vmem:[%s1 + $0x58] sm:$0xff]
  %v44 = vld [vmem:[%s1 + $0x60] sm:$0xff]
  %v45 = vld [vmem:[%s1 + $0x68] sm:$0xff]
  %v46 = vld [vmem:[%s1 + $0x70] sm:$0xff]
  %v47 = vld [vmem:[%s1 + $0x78] sm:$0xff]
  %v48 = vld [vmem:[%s2] sm:$0xff]
  %v49 = vld [vmem:[%s2 + $0x8] sm:$0xff]
  %v50 = vld [vmem:[%s2 + $0x10] sm:$0xff]
  %v51 = vld [vmem:[%s2 + $0x18] sm:$0xff]
  %v52 = vld [vmem:[%s2 + $0x20] sm:$0xff]
  %v53 = vld [vmem:[%s2 + $0x28] sm:$0xff]
  %v54 = vld [vmem:[%s2 + $0x30] sm:$0xff]
  %v55 = vld [vmem:[%s2 + $0x38] sm:$0xff]
  %v56 = vld [vmem:[%s2 + $0x40] sm:$0xff]
  %v57 = vld [vmem:[%s2 + $0x48] sm:$0xff]
  %v58 = vld [vmem:[%s2 + $0x50] sm:$0xff]
  %v59 = vld [vmem:[%s2 + $0x58] sm:$0xff]
  %v60 = vld [vmem:[%s2 + $0x60] sm:$0xff]
  %v61 = vld [vmem:[%s2 + $0x68] sm:$0xff]
  %v62 = vld [vmem:[%s2 + $0x70] sm:$0xff]
  %v63 = vld [vmem:[%s2 + $0x78] sm:$0xff]
  %v64 = vld [vmem:[%s2 + $0x80] sm:$0xff]
  %v65 = vld [vmem:[%s2 + $0x88] sm:$0xff]
  %v66 = vld [vmem:[%s2 + $0x90] sm:$0xff]
  %v67 = vld [vmem:[%s2 + $0x98] sm:$0xff]
  %v68 = vld [vmem:[%s2 + $0xa0] sm:$0xff]
  %v69 = vld [vmem:[%s2 + $0xa8] sm:$0xff]
  %v70 = vld [vmem:[%s2 + $0xb0] sm:$0xff]
  %v71 = vld [vmem:[%s2 + $0xb8] sm:$0xff]
  %v72 = vld [vmem:[%s2 + $0xc0] sm:$0xff]
  %v73 = vld [vmem:[%s2 + $0xc8] sm:$0xff]
  %v74 = vld [vmem:[%s2 + $0xd0] sm:$0xff]
  %v75 = vld [vmem:[%s2 + $0xd8] sm:$0xff]
  %v76 = vld [vmem:[%s2 + $0xe0] sm:$0xff]
  %v77 = vld [vmem:[%s2 + $0xe8] sm:$0xff]
  %v78 = vld [vmem:[%s2 + $0xf0] sm:$0xff]
  %v79 = vld [vmem:[%s2 + $0xf8] sm:$0xff]
  %v80 = vld [vmem:[%s2 + $0x100] sm:$0xff]
  %v81 = vld [vmem:[%s2 + $0x108] sm:$0xff]
  %v82 = vld [vmem:[%s2 + $0x110] sm:$0xff]
  %v83 = vld [vmem:[%s2 + $0x118] sm:$0xff]
  %v84 = vld [vmem:[%s2 + $0x120] sm:$0xff]
  %v85 = vld [vmem:[%s2 + $0x128] sm:$0xff]
  %v86 = vld [vmem:[%s2 + $0x130] sm:$0xff]
  %v87 = vld [vmem:[%s2 + $0x138] sm:$0xff]
  %v88 = vld [vmem:[%s2 + $0x140] sm:$0xff]
  %v89 = vld [vmem:[%s2 + $0x148] sm:$0xff]
  %v90 = vld [vmem:[%s2 + $0x150] sm:$0xff]
  %v91 = vld [vmem:[%s2 + $0x158] sm:$0xff]
  %v92 = vld [vmem:[%s2 + $0x160] sm:$0xff]
  %v93 = vld [vmem:[%s2 + $0x168] sm:$0xff]
  %v94 = vld [vmem:[%s2 + $0x170] sm:$0xff]
  %v95 = vld [vmem:[%s2 + $0x178] sm:$0xff]
  %v96 = vld [vmem:[%s2 + $0x180] sm:$0xff]
  %v97 = vld [vmem:[%s2 + $0x188] sm:$0xff]
  %v98 = vld [vmem:[%s2 + $0x190] sm:$0xff]
  %v99 = vld [vmem:[%s2 + $0x198] sm:$0xff]
  %v100 = vld [vmem:[%s2 + $0x1a0] sm:$0xff]
  %v101 = vld [vmem:[%s2 + $0x1a8] sm:$0xff]
  %v102 = vld [vmem:[%s2 + $0x1b0] sm:$0xff]
  %v103 = vld [vmem:[%s2 + $0x1b8] sm:$0xff]
  %v104 = vld [vmem:[%s2 + $0x1c0] sm:$0xff]
  %v105 = vld [vmem:[%s2 + $0x1c8] sm:$0xff]
  %v106 = vld [vmem:[%s2 + $0x1d0] sm:$0xff]
  %v107 = vld [vmem:[%s2 + $0x1d8] sm:$0xff]
  %v108 = vld [vmem:[%s2 + $0x1e0] sm:$0xff]
  %v109 = vld [vmem:[%s2 + $0x1e8] sm:$0xff]
  %v110 = vld [vmem:[%s2 + $0x1f0] sm:$0xff]
  %v111 = vld [vmem:[%s2 + $0x1f8] sm:$0xff]
  %v112 = vld [vmem:[%s3] sm:$0xf]
  %v113 = vld [vmem:[%s4] sm:$0xff]
  %v114 = vld [vmem:[%s4 + $0x8] sm:$0xff]
  %v115 = vld [vmem:[%s4 + $0x10] sm:$0xff]
  %v116 = vld [vmem:[%s4 + $0x18] sm:$0xff]
  %v117 = vld [vmem:[%s4 + $0x20] sm:$0xff]
  %v118 = vld [vmem:[%s4 + $0x28] sm:$0xff]
  %v119 = vld [vmem:[%s4 + $0x30] sm:$0xff]
  %v120 = vld [vmem:[%s4 + $0x38] sm:$0xff]
  %v121 = vld [vmem:[%s4 + $0x40] sm:$0xff]
  %v122 = vld [vmem:[%s4 + $0x48] sm:$0xff]
  %v123 = vld [vmem:[%s4 + $0x50] sm:$0xff]
  %v124 = vld [vmem:[%s4 + $0x58] sm:$0xff]
  %v125 = vld [vmem:[%s4 + $0x60] sm:$0xff]
  %v126 = vld [vmem:[%s4 + $0x68] sm:$0xff]
  %v127 = vld [vmem:[%s4 + $0x70] sm:$0xff]
  %v128 = vld [vmem:[%s4 + $0x78] sm:$0xff]
  %v129 = vld [vmem:[%s5] sm:$0xff]
  %v130 = vld [vmem:[%s5 + $0x8] sm:$0xff]
  %v131 = vld [vmem:[%s5 + $0x10] sm:$0xff]
  %v132 = vld [vmem:[%s5 + $0x18] sm:$0xff]
  %v133 = vld [vmem:[%s5 + $0x20] sm:$0xff]
  %v134 = vld [vmem:[%s5 + $0x28] sm:$0xff]
  %v135 = vld [vmem:[%s5 + $0x30] sm:$0xff]
  %v136 = vld [vmem:[%s5 + $0x38] sm:$0xff]
  %v137 = vld [vmem:[%s5 + $0x40] sm:$0xff]
  %v138 = vld [vmem:[%s5 + $0x48] sm:$0xff]
  %v139 = vld [vmem:[%s5 + $0x50] sm:$0xff]
  %v140 = vld [vmem:[%s5 + $0x58] sm:$0xff]
  %v141 = vld [vmem:[%s5 + $0x60] sm:$0xff]
  %v142 = vld [vmem:[%s5 + $0x68] sm:$0xff]
  %v143 = vld [vmem:[%s5 + $0x70] sm:$0xff]
  %v144 = vld [vmem:[%s5 + $0x78] sm:$0xff]
  %v145 = vld [vmem:[%s5 + $0x80] sm:$0xff]
  %v146 = vld [vmem:[%s5 + $0x88] sm:$0xff]
  %v147 = vld [vmem:[%s5 + $0x90] sm:$0xff]
  %v148 = vld [vmem:[%s5 + $0x98] sm:$0xff]
  %v149 = vld [vmem:[%s5 + $0xa0] sm:$0xff]
  %v150 = vld [vmem:[%s5 + $0xa8] sm:$0xff]
  %v151 = vld [vmem:[%s5 + $0xb0] sm:$0xff]
  %v152 = vld [vmem:[%s5 + $0xb8] sm:$0xff]
  %v153 = vld [vmem:[%s5 + $0xc0] sm:$0xff]
  %v154 = vld [vmem:[%s5 + $0xc8] sm:$0xff]
  %v155 = vld [vmem:[%s5 + $0xd0] sm:$0xff]
  %v156 = vld [vmem:[%s5 + $0xd8] sm:$0xff]
  %v157 = vld [vmem:[%s5 + $0xe0] sm:$0xff]
  %v158 = vld [vmem:[%s5 + $0xe8] sm:$0xff]
  %v159 = vld [vmem:[%s5 + $0xf0] sm:$0xff]
  %v160 = vld [vmem:[%s5 + $0xf8] sm:$0xff]
  %v161 = vld [vmem:[%s5 + $0x100] sm:$0xff]
  %v162 = vld [vmem:[%s5 + $0x108] sm:$0xff]
  %v163 = vld [vmem:[%s5 + $0x110] sm:$0xff]
  %v164 = vld [vmem:[%s5 + $0x118] sm:$0xff]
  %v165 = vld [vmem:[%s5 + $0x120] sm:$0xff]
  %v166 = vld [vmem:[%s5 + $0x128] sm:$0xff]
  %v167 = vld [vmem:[%s5 + $0x130] sm:$0xff]
  %v168 = vld [vmem:[%s5 + $0x138] sm:$0xff]
  %v169 = vld [vmem:[%s5 + $0x140] sm:$0xff]
  %v170 = vld [vmem:[%s5 + $0x148] sm:$0xff]
  %v171 = vld [vmem:[%s5 + $0x150] sm:$0xff]
  %v172 = vld [vmem:[%s5 + $0x158] sm:$0xff]
  %v173 = vld [vmem:[%s5 + $0x160] sm:$0xff]
  %v174 = vld [vmem:[%s5 + $0x168] sm:$0xff]
  %v175 = vld [vmem:[%s5 + $0x170] sm:$0xff]
  %v176 = vld [vmem:[%s5 + $0x178] sm:$0xff]
  %v177 = vld [vmem:[%s5 + $0x180] sm:$0xff]
  %v178 = vld [vmem:[%s5 + $0x188] sm:$0xff]
  %v179 = vld [vmem:[%s5 + $0x190] sm:$0xff]
  %v180 = vld [vmem:[%s5 + $0x198] sm:$0xff]
  %v181 = vld [vmem:[%s5 + $0x1a0] sm:$0xff]
  %v182 = vld [vmem:[%s5 + $0x1a8] sm:$0xff]
  %v183 = vld [vmem:[%s5 + $0x1b0] sm:$0xff]
  %v184 = vld [vmem:[%s5 + $0x1b8] sm:$0xff]
  %v185 = vld [vmem:[%s5 + $0x1c0] sm:$0xff]
  %v186 = vld [vmem:[%s5 + $0x1c8] sm:$0xff]
  %v187 = vld [vmem:[%s5 + $0x1d0] sm:$0xff]
  %v188 = vld [vmem:[%s5 + $0x1d8] sm:$0xff]
  %v189 = vld [vmem:[%s5 + $0x1e0] sm:$0xff]
  %v190 = vld [vmem:[%s5 + $0x1e8] sm:$0xff]
  %v191 = vld [vmem:[%s5 + $0x1f0] sm:$0xff]
  %v192 = vld [vmem:[%s5 + $0x1f8] sm:$0xff]
  %v193 = vld [vmem:[%s6] sm:$0xf]
  loop: start=0, step=1, limit=8
  $region30: #{_forward.8} parent=0 // loop_pre_header
    _
  $region31: #{_forward.8} parent=0 // loop_header
    %s195 = sphi 0, %s199
    %p196 = scmp.ge.s32.totalorder %s195, 8
  $region32: #{_forward.8} parent=0 // loop_header_branch
    %198 = sbr.rel (%p196) target = $region36
  $region33: #{_forward.8} parent=0 // loop_body
    %s200 = smul.u32 %s195, 2
    %s201 = scalar_lea.vmem %s0, %s200
    %v202 = vld [vmem:[%s201] sm:$0x3]
    %v203 = vld [vmem:[#allocation2] sm:$0x3]
    %v204 = vld [vmem:[#allocation3] sm:$0x3]
    %v206 = vlaneseq
    %v207 = vshrl.u32 %v206, 7
    %v208 = vsub.s32 0, %v207
    %v209 = vrot.slane %v112, %v208
    %v210 = vlaneseq
    %v211 = vshrl.u32 %v210, 7
    %v212 = vsub.s32 1, %v211
    %v213 = vrot.slane %v112, %v212
    %v214 = vlaneseq
    %v215 = vshrl.u32 %v214, 7
    %v216 = vsub.s32 2, %v215
    %v217 = vrot.slane %v112, %v216
    %v218 = vlaneseq
    %v219 = vshrl.u32 %v218, 7
    %v220 = vsub.s32 3, %v219
    %v221 = vrot.slane %v112, %v220
    %vm226 = vcmask 261120
    %v228 = vsel %vm226, %v202, 0
    %230 = vmatprep.subr.mxu0 %v33
    %231 = vmatpush1.msra.mxu0 %v32
    %232 = vmatprep.subr.mxu0 %v37
    %233 = vmatpush1.msra.mxu0 %v36
    %234 = vmatprep.subr.mxu0 %v41
    %235 = vmatpush1.msra.mxu0 %v40
    %236 = vmatprep.subr.mxu0 %v45
    %237 = vmatpush1.msra.mxu0 %v44
    %238 = vmatprep.subr.mxu0 0.0
    %239 = vmatpush1.msra.mxu0 0.0
    %240 = vmatprep.subr.mxu0 0.0
    %241 = vmatpush1.msra.mxu0 0.0
    %242 = vmatprep.subr.mxu0 0.0
    %243 = vmatpush1.msra.mxu0 0.0
    %244 = vmatprep.subr.mxu0 0.0
    %245 = vmatpush1.msra.mxu0 0.0
    %246 = vmatprep.subr.mxu0 0.0
    %247 = vmatpush1.msra.mxu0 0.0
    %248 = vmatprep.subr.mxu0 0.0
    %249 = vmatpush1.msra.mxu0 0.0
    %250 = vmatprep.subr.mxu0 0.0
    %251 = vmatpush1.msra.mxu0 0.0
    %252 = vmatprep.subr.mxu0 0.0
    %253 = vmatpush1.msra.mxu0 0.0
    %254 = vmatprep.subr.mxu0 0.0
    %255 = vmatpush1.msra.mxu0 0.0
    %256 = vmatprep.subr.mxu0 0.0
    %257 = vmatpush1.msra.mxu0 0.0
    %258 = vmatprep.subr.mxu0 0.0
    %259 = vmatpush1.msra.mxu0 0.0
    %260 = vmatprep.subr.mxu0 0.0
    %261 = vmatpush1.msra.mxu0 0.0
    %262 = vmatprep.subr.mxu0 0.0
    %263 = vmatpush1.msra.mxu0 0.0
    %264 = vmatprep.subr.mxu0 0.0
    %265 = vmatpush1.msra.mxu0 0.0
    %266 = vmatprep.subr.mxu0 0.0
    %267 = vmatpush1.msra.mxu0 0.0
    %268 = vmatprep.subr.mxu0 0.0
    %269 = vmatpush1.msra.mxu0 0.0
    %270 = vmatprep.subr.mxu0 0.0
    %271 = vmatpush1.msra.mxu0 0.0
    %272 = vmatprep.subr.mxu0 0.0
    %273 = vmatpush1.msra.mxu0 0.0
    %274 = vmatprep.subr.mxu0 0.0
    %275 = vmatpush1.msra.mxu0 0.0
    %276 = vmatprep.subr.mxu0 0.0
    %277 = vmatpush1.msra.mxu0 0.0
    %278 = vmatprep.subr.mxu0 0.0
    %279 = vmatpush1.msra.mxu0 0.0
    %280 = vmatprep.subr.mxu0 0.0
    %281 = vmatpush1.msra.mxu0 0.0
    %282 = vmatprep.subr.mxu0 0.0
    %283 = vmatpush1.msra.mxu0 0.0
    %284 = vmatprep.subr.mxu0 0.0
    %285 = vmatpush1.msra.mxu0 0.0
    %286 = vmatprep.subr.mxu0 0.0
    %287 = vmatpush1.msra.mxu0 0.0
    %288 = vmatprep.subr.mxu0 0.0
    %289 = vmatpush1.msra.mxu0 0.0
    %290 = vmatprep.subr.mxu0 0.0
    %291 = vmatpush1.msra.mxu0 0.0
    %292 = vmatprep.subr.mxu0 0.0
    %293 = vmatpush1.msra.mxu0 0.0
    %294 = vmatprep.mubr.f32.mxu0 0.0
    %295 = vmatmul.mubr.f32.gmra.mrb[0].mxu0 %v228
    %v296 = vpop.f32.mrb[0].mxu0
    %v297 = vadd.f32 %v209, %v296
    %v298 = vpop.f32.mrb[0].mxu0
    %v299 = vadd.f32 %v213, %v298
    %300 = vdwg.mxu0
    %301 = vmatprep.subr.mxu0 %v35
    %302 = vmatpush1.msra.mxu0 %v34
    %303 = vmatprep.subr.mxu0 %v39
    %304 = vmatpush1.msra.mxu0 %v38
    %305 = vmatprep.subr.mxu0 %v43
    %306 = vmatpush1.msra.mxu0 %v42
    %307 = vmatprep.subr.mxu0 %v47
    %308 = vmatpush1.msra.mxu0 %v46
    %309 = vmatprep.subr.mxu0 0.0
    %310 = vmatpush1.msra.mxu0 0.0
    %311 = vmatprep.subr.mxu0 0.0
    %312 = vmatpush1.msra.mxu0 0.0
    %313 = vmatprep.subr.mxu0 0.0
    %314 = vmatpush1.msra.mxu0 0.0
    %315 = vmatprep.subr.mxu0 0.0
    %316 = vmatpush1.msra.mxu0 0.0
    %317 = vmatprep.subr.mxu0 0.0
    %318 = vmatpush1.msra.mxu0 0.0
    %319 = vmatprep.subr.mxu0 0.0
    %320 = vmatpush1.msra.mxu0 0.0
    %321 = vmatprep.subr.mxu0 0.0
    %322 = vmatpush1.msra.mxu0 0.0
    %323 = vmatprep.subr.mxu0 0.0
    %324 = vmatpush1.msra.mxu0 0.0
    %325 = vmatprep.subr.mxu0 0.0
    %326 = vmatpush1.msra.mxu0 0.0
    %327 = vmatprep.subr.mxu0 0.0
    %328 = vmatpush1.msra.mxu0 0.0
    %329 = vmatprep.subr.mxu0 0.0
    %330 = vmatpush1.msra.mxu0 0.0
    %331 = vmatprep.subr.mxu0 0.0
    %332 = vmatpush1.msra.mxu0 0.0
    %333 = vmatprep.subr.mxu0 0.0
    %334 = vmatpush1.msra.mxu0 0.0
    %335 = vmatprep.subr.mxu0 0.0
    %336 = vmatpush1.msra.mxu0 0.0
    %337 = vmatprep.subr.mxu0 0.0
    %338 = vmatpush1.msra.mxu0 0.0
    %339 = vmatprep.subr.mxu0 0.0
    %340 = vmatpush1.msra.mxu0 0.0
    %341 = vmatprep.subr.mxu0 0.0
    %342 = vmatpush1.msra.mxu0 0.0
    %343 = vmatprep.subr.mxu0 0.0
    %344 = vmatpush1.msra.mxu0 0.0
    %345 = vmatprep.subr.mxu0 0.0
    %346 = vmatpush1.msra.mxu0 0.0
    %347 = vmatprep.subr.mxu0 0.0
    %348 = vmatpush1.msra.mxu0 0.0
    %349 = vmatprep.subr.mxu0 0.0
    %350 = vmatpush1.msra.mxu0 0.0
    %351 = vmatprep.subr.mxu0 0.0
    %352 = vmatpush1.msra.mxu0 0.0
    %353 = vmatprep.subr.mxu0 0.0
    %354 = vmatpush1.msra.mxu0 0.0
    %355 = vmatprep.subr.mxu0 0.0
    %356 = vmatpush1.msra.mxu0 0.0
    %357 = vmatprep.subr.mxu0 0.0
    %358 = vmatpush1.msra.mxu0 0.0
    %359 = vmatprep.subr.mxu0 0.0
    %360 = vmatpush1.msra.mxu0 0.0
    %361 = vmatprep.subr.mxu0 0.0
    %362 = vmatpush1.msra.mxu0 0.0
    %363 = vmatprep.subr.mxu0 0.0
    %364 = vmatpush1.msra.mxu0 0.0
    %365 = vmatprep.mubr.f32.mxu0 0.0
    %366 = vmatmul.mubr.f32.gmra.mrb[0].mxu0 %v228
    %v367 = vpop.f32.mrb[0].mxu0
    %v368 = vadd.f32 %v217, %v367
    %v369 = vpop.f32.mrb[0].mxu0
    %v370 = vadd.f32 %v221, %v369
    %371 = vdwg.mxu0
    %372 = vmatprep.subr.mxu0 %v49
    %373 = vmatpush1.msra.mxu0 %v48
    %374 = vmatprep.subr.mxu0 %v53
    %375 = vmatpush1.msra.mxu0 %v52
    %376 = vmatprep.subr.mxu0 %v57
    %377 = vmatpush1.msra.mxu0 %v56
    %378 = vmatprep.subr.mxu0 %v61
    %379 = vmatpush1.msra.mxu0 %v60
    %380 = vmatprep.subr.mxu0 %v65
    %381 = vmatpush1.msra.mxu0 %v64
    %382 = vmatprep.subr.mxu0 %v69
    %383 = vmatpush1.msra.mxu0 %v68
    %384 = vmatprep.subr.mxu0 %v73
    %385 = vmatpush1.msra.mxu0 %v72
    %386 = vmatprep.subr.mxu0 %v77
    %387 = vmatpush1.msra.mxu0 %v76
    %388 = vmatprep.subr.mxu0 %v81
    %389 = vmatpush1.msra.mxu0 %v80
    %390 = vmatprep.subr.mxu0 %v85
    %391 = vmatpush1.msra.mxu0 %v84
    %392 = vmatprep.subr.mxu0 %v89
    %393 = vmatpush1.msra.mxu0 %v88
    %394 = vmatprep.subr.mxu0 %v93
    %395 = vmatpush1.msra.mxu0 %v92
    %396 = vmatprep.subr.mxu0 %v97
    %397 = vmatpush1.msra.mxu0 %v96
    %398 = vmatprep.subr.mxu0 %v101
    %399 = vmatpush1.msra.mxu0 %v100
    %400 = vmatprep.subr.mxu0 %v105
    %401 = vmatpush1.msra.mxu0 %v104
    %402 = vmatprep.subr.mxu0 %v109
    %403 = vmatpush1.msra.mxu0 %v108
    %404 = vmatprep.subr.mxu0 0.0
    %405 = vmatpush1.msra.mxu0 0.0
    %406 = vmatprep.subr.mxu0 0.0
    %407 = vmatpush1.msra.mxu0 0.0
    %408 = vmatprep.subr.mxu0 0.0
    %409 = vmatpush1.msra.mxu0 0.0
    %410 = vmatprep.subr.mxu0 0.0
    %411 = vmatpush1.msra.mxu0 0.0
    %412 = vmatprep.subr.mxu0 0.0
    %413 = vmatpush1.msra.mxu0 0.0
    %414 = vmatprep.subr.mxu0 0.0
    %415 = vmatpush1.msra.mxu0 0.0
    %416 = vmatprep.subr.mxu0 0.0
    %417 = vmatpush1.msra.mxu0 0.0
    %418 = vmatprep.subr.mxu0 0.0
    %419 = vmatpush1.msra.mxu0 0.0
    %420 = vmatprep.subr.mxu0 0.0
    %421 = vmatpush1.msra.mxu0 0.0
    %422 = vmatprep.subr.mxu0 0.0
    %423 = vmatpush1.msra.mxu0 0.0
    %424 = vmatprep.subr.mxu0 0.0
    %425 = vmatpush1.msra.mxu0 0.0
    %426 = vmatprep.subr.mxu0 0.0
    %427 = vmatpush1.msra.mxu0 0.0
    %428 = vmatprep.subr.mxu0 0.0
    %429 = vmatpush1.msra.mxu0 0.0
    %430 = vmatprep.subr.mxu0 0.0
    %431 = vmatpush1.msra.mxu0 0.0
    %432 = vmatprep.subr.mxu0 0.0
    %433 = vmatpush1.msra.mxu0 0.0
    %434 = vmatprep.subr.mxu0 0.0
    %435 = vmatpush1.msra.mxu0 0.0
    %436 = vmatprep.mubr.f32.mxu0 0.0
    %437 = vmatmul.mubr.f32.gmra.mrb[0].mxu0 %v203
    %v438 = vpop.f32.mrb[0].mxu0
    %v439 = vadd.f32 0.0, %v438
    %v440 = vpop.f32.mrb[0].mxu0
    %v441 = vadd.f32 0.0, %v440
    %442 = vdwg.mxu0
    %443 = vmatprep.subr.mxu0 %v51
    %444 = vmatpush1.msra.mxu0 %v50
    %445 = vmatprep.subr.mxu0 %v55
    %446 = vmatpush1.msra.mxu0 %v54
    %447 = vmatprep.subr.mxu0 %v59
    %448 = vmatpush1.msra.mxu0 %v58
    %449 = vmatprep.subr.mxu0 %v63
    %450 = vmatpush1.msra.mxu0 %v62
    %451 = vmatprep.subr.mxu0 %v67
    %452 = vmatpush1.msra.mxu0 %v66
    %453 = vmatprep.subr.mxu0 %v71
    %454 = vmatpush1.msra.mxu0 %v70
    %455 = vmatprep.subr.mxu0 %v75
    %456 = vmatpush1.msra.mxu0 %v74
    %457 = vmatprep.subr.mxu0 %v79
    %458 = vmatpush1.msra.mxu0 %v78
    %459 = vmatprep.subr.mxu0 %v83
    %460 = vmatpush1.msra.mxu0 %v82
    %461 = vmatprep.subr.mxu0 %v87
    %462 = vmatpush1.msra.mxu0 %v86
    %463 = vmatprep.subr.mxu0 %v91
    %464 = vmatpush1.msra.mxu0 %v90
    %465 = vmatprep.subr.mxu0 %v95
    %466 = vmatpush1.msra.mxu0 %v94
    %467 = vmatprep.subr.mxu0 %v99
    %468 = vmatpush1.msra.mxu0 %v98
    %469 = vmatprep.subr.mxu0 %v103
    %470 = vmatpush1.msra.mxu0 %v102
    %471 = vmatprep.subr.mxu0 %v107
    %472 = vmatpush1.msra.mxu0 %v106
    %473 = vmatprep.subr.mxu0 %v111
    %474 = vmatpush1.msra.mxu0 %v110
    %475 = vmatprep.subr.mxu0 0.0
    %476 = vmatpush1.msra.mxu0 0.0
    %477 = vmatprep.subr.mxu0 0.0
    %478 = vmatpush1.msra.mxu0 0.0
    %479 = vmatprep.subr.mxu0 0.0
    %480 = vmatpush1.msra.mxu0 0.0
    %481 = vmatprep.subr.mxu0 0.0
    %482 = vmatpush1.msra.mxu0 0.0
    %483 = vmatprep.subr.mxu0 0.0
    %484 = vmatpush1.msra.mxu0 0.0
    %485 = vmatprep.subr.mxu0 0.0
    %486 = vmatpush1.msra.mxu0 0.0
    %487 = vmatprep.subr.mxu0 0.0
    %488 = vmatpush1.msra.mxu0 0.0
    %489 = vmatprep.subr.mxu0 0.0
    %490 = vmatpush1.msra.mxu0 0.0
    %491 = vmatprep.subr.mxu0 0.0
    %492 = vmatpush1.msra.mxu0 0.0
    %493 = vmatprep.subr.mxu0 0.0
    %494 = vmatpush1.msra.mxu0 0.0
    %495 = vmatprep.subr.mxu0 0.0
    %496 = vmatpush1.msra.mxu0 0.0
    %497 = vmatprep.subr.mxu0 0.0
    %498 = vmatpush1.msra.mxu0 0.0
    %499 = vmatprep.subr.mxu0 0.0
    %500 = vmatpush1.msra.mxu0 0.0
    %501 = vmatprep.subr.mxu0 0.0
    %502 = vmatpush1.msra.mxu0 0.0
    %503 = vmatprep.subr.mxu0 0.0
    %504 = vmatpush1.msra.mxu0 0.0
    %505 = vmatprep.subr.mxu0 0.0
    %506 = vmatpush1.msra.mxu0 0.0
    %507 = vmatprep.mubr.f32.mxu0 0.0
    %508 = vmatmul.mubr.f32.gmra.mrb[0].mxu0 %v203
    %v509 = vpop.f32.mrb[0].mxu0
    %v510 = vadd.f32 0.0, %v509
    %v511 = vpop.f32.mrb[0].mxu0
    %v512 = vadd.f32 0.0, %v511
    %513 = vdwg.mxu0
    %v514 = vadd.f32 %v297, %v439
    %v515 = vadd.f32 %v299, %v441
    %v516 = vadd.f32 %v368, %v510
    %v517 = vadd.f32 %v370, %v512
    %v518 = vxor.u32 %v514, 2147483648
    %v519 = vmul.f32 %v518, 1.442695
    %v520 = vpow.pop %v519
    %v521 = vadd.f32 %v520, 1.0
    %v522 = vrcp.pop %v521
    %v523 = vmul.f32 1.0, %v522
    %v524 = vxor.u32 %v515, 2147483648
    %v525 = vmul.f32 %v524, 1.442695
    %v526 = vpow.pop %v525
    %v527 = vadd.f32 %v526, 1.0
    %v528 = vrcp.pop %v527
    %v529 = vmul.f32 1.0, %v528
    %v530 = vtanh.pop %v516
    %v531 = vxor.u32 %v517, 2147483648
    %v532 = vmul.f32 %v531, 1.442695
    %v533 = vpow.pop %v532
    %v534 = vadd.f32 %v533, 1.0
    %v535 = vrcp.pop %v534
    %v536 = vmul.f32 1.0, %v535
    %v537 = vmul.f32 %v529, %v204
    %v538 = vmul.f32 %v523, %v530
    %v539 = vadd.f32 %v537, %v538
    %v540 = vtanh.pop %v539
    %v541 = vmul.f32 %v536, %v540
    %542 = vst [vmem:[#allocation2] sm:$0x3] %v541
    %543 = vst [vmem:[#allocation3] sm:$0x3] %v539
    %s544 = scalar_lea.vmem %s7, %s200
    %545 = vst [vmem:[%s544] sm:$0x3] %v541
    %s546 = ssub.s32 7, %s195
    %s547 = smul.u32 %s546, 2
    %s548 = scalar_lea.vmem %s0, %s547
    %v549 = vld [vmem:[%s548] sm:$0x3]
    %v550 = vld [vmem:[#allocation4] sm:$0x3]
    %v551 = vld [vmem:[#allocation5] sm:$0x3]
    %v553 = vlaneseq
    %v554 = vshrl.u32 %v553, 7
    %v555 = vsub.s32 0, %v554
    %v556 = vrot.slane %v193, %v555
    %v557 = vlaneseq
    %v558 = vshrl.u32 %v557, 7
    %v559 = vsub.s32 1, %v558
    %v560 = vrot.slane %v193, %v559
    %v561 = vlaneseq
    %v562 = vshrl.u32 %v561, 7
    %v563 = vsub.s32 2, %v562
    %v564 = vrot.slane %v193, %v563
    %v565 = vlaneseq
    %v566 = vshrl.u32 %v565, 7
    %v567 = vsub.s32 3, %v566
    %v568 = vrot.slane %v193, %v567
    %v574 = vsel %vm226, %v549, 0
    %576 = vmatprep.subr.mxu0 %v114
    %577 = vmatpush1.msra.mxu0 %v113
    %578 = vmatprep.subr.mxu0 %v118
    %579 = vmatpush1.msra.mxu0 %v117
    %580 = vmatprep.subr.mxu0 %v122
    %581 = vmatpush1.msra.mxu0 %v121
    %582 = vmatprep.subr.mxu0 %v126
    %583 = vmatpush1.msra.mxu0 %v125
    %584 = vmatprep.subr.mxu0 0.0
    %585 = vmatpush1.msra.mxu0 0.0
    %586 = vmatprep.subr.mxu0 0.0
    %587 = vmatpush1.msra.mxu0 0.0
    %588 = vmatprep.subr.mxu0 0.0
    %589 = vmatpush1.msra.mxu0 0.0
    %590 = vmatprep.subr.mxu0 0.0
    %591 = vmatpush1.msra.mxu0 0.0
    %592 = vmatprep.subr.mxu0 0.0
    %593 = vmatpush1.msra.mxu0 0.0
    %594 = vmatprep.subr.mxu0 0.0
    %595 = vmatpush1.msra.mxu0 0.0
    %596 = vmatprep.subr.mxu0 0.0
    %597 = vmatpush1.msra.mxu0 0.0
    %598 = vmatprep.subr.mxu0 0.0
    %599 = vmatpush1.msra.mxu0 0.0
    %600 = vmatprep.subr.mxu0 0.0
    %601 = vmatpush1.msra.mxu0 0.0
    %602 = vmatprep.subr.mxu0 0.0
    %603 = vmatpush1.msra.mxu0 0.0
    %604 = vmatprep.subr.mxu0 0.0
    %605 = vmatpush1.msra.mxu0 0.0
    %606 = vmatprep.subr.mxu0 0.0
    %607 = vmatpush1.msra.mxu0 0.0
    %608 = vmatprep.subr.mxu0 0.0
    %609 = vmatpush1.msra.mxu0 0.0
    %610 = vmatprep.subr.mxu0 0.0
    %611 = vmatpush1.msra.mxu0 0.0
    %612 = vmatprep.subr.mxu0 0.0
    %613 = vmatpush1.msra.mxu0 0.0
    %614 = vmatprep.subr.mxu0 0.0
    %615 = vmatpush1.msra.mxu0 0.0
    %616 = vmatprep.subr.mxu0 0.0
    %617 = vmatpush1.msra.mxu0 0.0
    %618 = vmatprep.subr.mxu0 0.0
    %619 = vmatpush1.msra.mxu0 0.0
    %620 = vmatprep.subr.mxu0 0.0
    %621 = vmatpush1.msra.mxu0 0.0
    %622 = vmatprep.subr.mxu0 0.0
    %623 = vmatpush1.msra.mxu0 0.0
    %624 = vmatprep.subr.mxu0 0.0
    %625 = vmatpush1.msra.mxu0 0.0
    %626 = vmatprep.subr.mxu0 0.0
    %627 = vmatpush1.msra.mxu0 0.0
    %628 = vmatprep.subr.mxu0 0.0
    %629 = vmatpush1.msra.mxu0 0.0
    %630 = vmatprep.subr.mxu0 0.0
    %631 = vmatpush1.msra.mxu0 0.0
    %632 = vmatprep.subr.mxu0 0.0
    %633 = vmatpush1.msra.mxu0 0.0
    %634 = vmatprep.subr.mxu0 0.0
    %635 = vmatpush1.msra.mxu0 0.0
    %636 = vmatprep.subr.mxu0 0.0
    %637 = vmatpush1.msra.mxu0 0.0
    %638 = vmatprep.subr.mxu0 0.0
    %639 = vmatpush1.msra.mxu0 0.0
    %640 = vmatprep.mubr.f32.mxu0 0.0
    %641 = vmatmul.mubr.f32.gmra.mrb[0].mxu0 %v574
    %v642 = vpop.f32.mrb[0].mxu0
    %v643 = vadd.f32 %v556, %v642
    %v644 = vpop.f32.mrb[0].mxu0
    %v645 = vadd.f32 %v560, %v644
    %646 = vdwg.mxu0
    %647 = vmatprep.subr.mxu0 %v116
    %648 = vmatpush1.msra.mxu0 %v115
    %649 = vmatprep.subr.mxu0 %v120
    %650 = vmatpush1.msra.mxu0 %v119
    %651 = vmatprep.subr.mxu0 %v124
    %652 = vmatpush1.msra.mxu0 %v123
    %653 = vmatprep.subr.mxu0 %v128
    %654 = vmatpush1.msra.mxu0 %v127
    %655 = vmatprep.subr.mxu0 0.0
    %656 = vmatpush1.msra.mxu0 0.0
    %657 = vmatprep.subr.mxu0 0.0
    %658 = vmatpush1.msra.mxu0 0.0
    %659 = vmatprep.subr.mxu0 0.0
    %660 = vmatpush1.msra.mxu0 0.0
    %661 = vmatprep.subr.mxu0 0.0
    %662 = vmatpush1.msra.mxu0 0.0
    %663 = vmatprep.subr.mxu0 0.0
    %664 = vmatpush1.msra.mxu0 0.0
    %665 = vmatprep.subr.mxu0 0.0
    %666 = vmatpush1.msra.mxu0 0.0
    %667 = vmatprep.subr.mxu0 0.0
    %668 = vmatpush1.msra.mxu0 0.0
    %669 = vmatprep.subr.mxu0 0.0
    %670 = vmatpush1.msra.mxu0 0.0
    %671 = vmatprep.subr.mxu0 0.0
    %672 = vmatpush1.msra.mxu0 0.0
    %673 = vmatprep.subr.mxu0 0.0
    %674 = vmatpush1.msra.mxu0 0.0
    %675 = vmatprep.subr.mxu0 0.0
    %676 = vmatpush1.msra.mxu0 0.0
    %677 = vmatprep.subr.mxu0 0.0
    %678 = vmatpush1.msra.mxu0 0.0
    %679 = vmatprep.subr.mxu0 0.0
    %680 = vmatpush1.msra.mxu0 0.0
    %681 = vmatprep.subr.mxu0 0.0
    %682 = vmatpush1.msra.mxu0 0.0
    %683 = vmatprep.subr.mxu0 0.0
    %684 = vmatpush1.msra.mxu0 0.0
    %685 = vmatprep.subr.mxu0 0.0
    %686 = vmatpush1.msra.mxu0 0.0
    %687 = vmatprep.subr.mxu0 0.0
    %688 = vmatpush1.msra.mxu0 0.0
    %689 = vmatprep.subr.mxu0 0.0
    %690 = vmatpush1.msra.mxu0 0.0
    %691 = vmatprep.subr.mxu0 0.0
    %692 = vmatpush1.msra.mxu0 0.0
    %693 = vmatprep.subr.mxu0 0.0
    %694 = vmatpush1.msra.mxu0 0.0
    %695 = vmatprep.subr.mxu0 0.0
    %696 = vmatpush1.msra.mxu0 0.0
    %697 = vmatprep.subr.mxu0 0.0
    %698 = vmatpush1.msra.mxu0 0.0
    %699 = vmatprep.subr.mxu0 0.0
    %700 = vmatpush1.msra.mxu0 0.0
    %701 = vmatprep.subr.mxu0 0.0
    %702 = vmatpush1.msra.mxu0 0.0
    %703 = vmatprep.subr.mxu0 0.0
    %704 = vmatpush1.msra.mxu0 0.0
    %705 = vmatprep.subr.mxu0 0.0
    %706 = vmatpush1.msra.mxu0 0.0
    %707 = vmatprep.subr.mxu0 0.0
    %708 = vmatpush1.msra.mxu0 0.0
    %709 = vmatprep.subr.mxu0 0.0
    %710 = vmatpush1.msra.mxu0 0.0
    %711 = vmatprep.mubr.f32.mxu0 0.0
    %712 = vmatmul.mubr.f32.gmra.mrb[0].mxu0 %v574
    %v713 = vpop.f32.mrb[0].mxu0
    %v714 = vadd.f32 %v564, %v713
    %v715 = vpop.f32.mrb[0].mxu0
    %v716 = vadd.f32 %v568, %v715
    %717 = vdwg.mxu0
    %718 = vmatprep.subr.mxu0 %v130
    %719 = vmatpush1.msra.mxu0 %v129
    %720 = vmatprep.subr.mxu0 %v134
    %721 = vmatpush1.msra.mxu0 %v133
    %722 = vmatprep.subr.mxu0 %v138
    %723 = vmatpush1.msra.mxu0 %v137
    %724 = vmatprep.subr.mxu0 %v142
    %725 = vmatpush1.msra.mxu0 %v141
    %726 = vmatprep.subr.mxu0 %v146
    %727 = vmatpush1.msra.mxu0 %v145
    %728 = vmatprep.subr.mxu0 %v150
    %729 = vmatpush1.msra.mxu0 %v149
    %730 = vmatprep.subr.mxu0 %v154
    %731 = vmatpush1.msra.mxu0 %v153
    %732 = vmatprep.subr.mxu0 %v158
    %733 = vmatpush1.msra.mxu0 %v157
    %734 = vmatprep.subr.mxu0 %v162
    %735 = vmatpush1.msra.mxu0 %v161
    %736 = vmatprep.subr.mxu0 %v166
    %737 = vmatpush1.msra.mxu0 %v165
    %738 = vmatprep.subr.mxu0 %v170
    %739 = vmatpush1.msra.mxu0 %v169
    %740 = vmatprep.subr.mxu0 %v174
    %741 = vmatpush1.msra.mxu0 %v173
    %742 = vmatprep.subr.mxu0 %v178
    %743 = vmatpush1.msra.mxu0 %v177
    %744 = vmatprep.subr.mxu0 %v182
    %745 = vmatpush1.msra.mxu0 %v181
    %746 = vmatprep.subr.mxu0 %v186
    %747 = vmatpush1.msra.mxu0 %v185
    %748 = vmatprep.subr.mxu0 %v190
    %749 = vmatpush1.msra.mxu0 %v189
    %750 = vmatprep.subr.mxu0 0.0
    %751 = vmatpush1.msra.mxu0 0.0
    %752 = vmatprep.subr.mxu0 0.0
    %753 = vmatpush1.msra.mxu0 0.0
    %754 = vmatprep.subr.mxu0 0.0
    %755 = vmatpush1.msra.mxu0 0.0
    %756 = vmatprep.subr.mxu0 0.0
    %757 = vmatpush1.msra.mxu0 0.0
    %758 = vmatprep.subr.mxu0 0.0
    %759 = vmatpush1.msra.mxu0 0.0
    %760 = vmatprep.subr.mxu0 0.0
    %761 = vmatpush1.msra.mxu0 0.0
    %762 = vmatprep.subr.mxu0 0.0
    %763 = vmatpush1.msra.mxu0 0.0
    %764 = vmatprep.subr.mxu0 0.0
    %765 = vmatpush1.msra.mxu0 0.0
    %766 = vmatprep.subr.mxu0 0.0
    %767 = vmatpush1.msra.mxu0 0.0
    %768 = vmatprep.subr.mxu0 0.0
    %769 = vmatpush1.msra.mxu0 0.0
    %770 = vmatprep.subr.mxu0 0.0
    %771 = vmatpush1.msra.mxu0 0.0
    %772 = vmatprep.subr.mxu0 0.0
    %773 = vmatpush1.msra.mxu0 0.0
    %774 = vmatprep.subr.mxu0 0.0
    %775 = vmatpush1.msra.mxu0 0.0
    %776 = vmatprep.subr.mxu0 0.0
    %777 = vmatpush1.msra.mxu0 0.0
    %778 = vmatprep.subr.mxu0 0.0
    %779 = vmatpush1.msra.mxu0 0.0
    %780 = vmatprep.subr.mxu0 0.0
    %781 = vmatpush1.msra.mxu0 0.0
    %782 = vmatprep.mubr.f32.mxu0 0.0
    %783 = vmatmul.mubr.f32.gmra.mrb[0].mxu0 %v550
    %v784 = vpop.f32.mrb[0].mxu0
    %v785 = vadd.f32 0.0, %v784
    %v786 = vpop.f32.mrb[0].mxu0
    %v787 = vadd.f32 0.0, %v786
    %788 = vdwg.mxu0
    %789 = vmatprep.subr.mxu0 %v132
    %790 = vmatpush1.msra.mxu0 %v131
    %791 = vmatprep.subr.mxu0 %v136
    %792 = vmatpush1.msra.mxu0 %v135
    %793 = vmatprep.subr.mxu0 %v140
    %794 = vmatpush1.msra.mxu0 %v139
    %795 = vmatprep.subr.mxu0 %v144
    %796 = vmatpush1.msra.mxu0 %v143
    %797 = vmatprep.subr.mxu0 %v148
    %798 = vmatpush1.msra.mxu0 %v147
    %799 = vmatprep.subr.mxu0 %v152
    %800 = vmatpush1.msra.mxu0 %v151
    %801 = vmatprep.subr.mxu0 %v156
    %802 = vmatpush1.msra.mxu0 %v155
    %803 = vmatprep.subr.mxu0 %v160
    %804 = vmatpush1.msra.mxu0 %v159
    %805 = vmatprep.subr.mxu0 %v164
    %806 = vmatpush1.msra.mxu0 %v163
    %807 = vmatprep.subr.mxu0 %v168
    %808 = vmatpush1.msra.mxu0 %v167
    %809 = vmatprep.subr.mxu0 %v172
    %810 = vmatpush1.msra.mxu0 %v171
    %811 = vmatprep.subr.mxu0 %v176
    %812 = vmatpush1.msra.mxu0 %v175
    %813 = vmatprep.subr.mxu0 %v180
    %814 = vmatpush1.msra.mxu0 %v179
    %815 = vmatprep.subr.mxu0 %v184
    %816 = vmatpush1.msra.mxu0 %v183
    %817 = vmatprep.subr.mxu0 %v188
    %818 = vmatpush1.msra.mxu0 %v187
    %819 = vmatprep.subr.mxu0 %v192
    %820 = vmatpush1.msra.mxu0 %v191
    %821 = vmatprep.subr.mxu0 0.0
    %822 = vmatpush1.msra.mxu0 0.0
    %823 = vmatprep.subr.mxu0 0.0
    %824 = vmatpush1.msra.mxu0 0.0
    %825 = vmatprep.subr.mxu0 0.0
    %826 = vmatpush1.msra.mxu0 0.0
    %827 = vmatprep.subr.mxu0 0.0
    %828 = vmatpush1.msra.mxu0 0.0
    %829 = vmatprep.subr.mxu0 0.0
    %830 = vmatpush1.msra.mxu0 0.0
    %831 = vmatprep.subr.mxu0 0.0
    %832 = vmatpush1.msra.mxu0 0.0
    %833 = vmatprep.subr.mxu0 0.0
    %834 = vmatpush1.msra.mxu0 0.0
    %835 = vmatprep.subr.mxu0 0.0
    %836 = vmatpush1.msra.mxu0 0.0
    %837 = vmatprep.subr.mxu0 0.0
    %838 = vmatpush1.msra.mxu0 0.0
    %839 = vmatprep.subr.mxu0 0.0
    %840 = vmatpush1.msra.mxu0 0.0
    %841 = vmatprep.subr.mxu0 0.0
    %842 = vmatpush1.msra.mxu0 0.0
    %843 = vmatprep.subr.mxu0 0.0
    %844 = vmatpush1.msra.mxu0 0.0
    %845 = vmatprep.subr.mxu0 0.0
    %846 = vmatpush1.msra.mxu0 0.0
    %847 = vmatprep.subr.mxu0 0.0
    %848 = vmatpush1.msra.mxu0 0.0
    %849 = vmatprep.subr.mxu0 0.0
    %850 = vmatpush1.msra.mxu0 0.0
    %851 = vmatprep.subr.mxu0 0.0
    %852 = vmatpush1.msra.mxu0 0.0
    %853 = vmatprep.mubr.f32.mxu0 0.0
    %854 = vmatmul.mubr.f32.gmra.mrb[0].mxu0 %v550
    %v855 = vpop.f32.mrb[0].mxu0
    %v856 = vadd.f32 0.0, %v855
    %v857 = vpop.f32.mrb[0].mxu0
    %v858 = vadd.f32 0.0, %v857
    %859 = vdwg.mxu0
    %v860 = vadd.f32 %v643, %v785
    %v861 = vadd.f32 %v645, %v787
    %v862 = vadd.f32 %v714, %v856
    %v863 = vadd.f32 %v716, %v858
    %v864 = vxor.u32 %v860, 2147483648
    %v865 = vmul.f32 %v864, 1.442695
    %v866 = vpow.pop %v865
    %v867 = vadd.f32 %v866, 1.0
    %v868 = vrcp.pop %v867
    %v869 = vmul.f32 1.0, %v868
    %v870 = vxor.u32 %v861, 2147483648
    %v871 = vmul.f32 %v870, 1.442695
    %v872 = vpow.pop %v871
    %v873 = vadd.f32 %v872, 1.0
    %v874 = vrcp.pop %v873
    %v875 = vmul.f32 1.0, %v874
    %v876 = vtanh.pop %v862
    %v877 = vxor.u32 %v863, 2147483648
    %v878 = vmul.f32 %v877, 1.442695
    %v879 = vpow.pop %v878
    %v880 = vadd.f32 %v879, 1.0
    %v881 = vrcp.pop %v880
    %v882 = vmul.f32 1.0, %v881
    %v883 = vmul.f32 %v875, %v551
    %v884 = vmul.f32 %v869, %v876
    %v885 = vadd.f32 %v883, %v884
    %v886 = vtanh.pop %v885
    %v887 = vmul.f32 %v882, %v886
    %888 = vst [vmem:[#allocation4] sm:$0x3] %v887
    %889 = vst [vmem:[#allocation5] sm:$0x3] %v885
    %s890 = scalar_lea.vmem %s8, %s547
    %891 = vst [vmem:[%s890] sm:$0x3] %v887
  $region34: #{_forward.8} parent=0 // loop_footer
    %s199 = sadd.s32 1, %s195
  $region35: #{_forward.8} parent=0 // loop_footer_branch
    %194 = sbr.rel target = $region31
  $region36: #{_forward.8} parent=0 // loop_exit
    _
  // Predicated region
  $region37: #{_forward.8} parent=0 // pred_check
    _
  $region38: #{_forward.8} parent=0 // pred_check_branch
    %893 = sbr.rel (0) target = $region40
  $region39: #{_forward.8} parent=0 // pred_region
    _
  $region40: #{_forward.8} parent=0 // pred_fallthru
    _
  // Predicated region
  $region41: #{_forward.8} parent=0 // pred_check
    _
  $region42: #{_forward.8} parent=0 // pred_check_branch
    %895 = sbr.rel (0) target = $region44
  $region43: #{_forward.8} parent=0 // pred_region
    _
  $region44: #{_forward.8} parent=0 // pred_fallthru
    _
  // Predicated region
  $region45: #{_forward.8} parent=0 // pred_check
    _
  $region46: #{_forward.8} parent=0 // pred_check_branch
    %897 = sbr.rel (0) target = $region48
  $region47: #{_forward.8} parent=0 // pred_region
    _
  $region48: #{_forward.8} parent=0 // pred_fallthru
    _
  // Predicated region
  $region49: #{_forward.8} parent=0 // pred_check
    _
  $region50: #{_forward.8} parent=0 // pred_check_branch
    %899 = sbr.rel (0) target = $region52
  $region51: #{_forward.8} parent=0 // pred_region
    _
  $region52: #{_forward.8} parent=0 // pred_fallthru
    _

// kernel: _forward.6
$region0: #{_forward.6}
  #allocation0 [shape = 'u32[]', space=smem, size = 0x4, offset = 0x4, fixed_abs, tag = 'smem constant byte address 0x4 - core index']
  #allocation1 [shape = 'u32[144,128]{1,0:T(1,128)}', space=vmem, size = 0x12000, scoped, tag = 'internal scratch']
  %s0 = inlined_call_operand.vmem [shape: f32[16,32], index: 0, kind: input, shape index: {}]
  %s1 = inlined_call_operand.vmem [shape: f32[2,1,8], index: 1, kind: input, shape index: {}]
  %s2 = inlined_call_operand.vmem [shape: f32[4,32,8], index: 2, kind: input, shape index: {}]
  %s3 = inlined_call_operand.vmem [shape: f32[4,1,8], index: 3, kind: input, shape index: {}]
  %s4 = inlined_call_operand.vmem [shape: f32[4,32,8], index: 4, kind: input, shape index: {}]
  %s5 = inlined_call_operand.vmem [shape: f32[4,1,8], index: 5, kind: input, shape index: {}]
  %s6 = inlined_call_operand.vmem [shape: f32[4,32,8], index: 6, kind: input, shape index: {}]
  %s7 = inlined_call_operand.vmem [shape: f32[4,1,8], index: 7, kind: input, shape index: {}]
  %s8 = inlined_call_operand.vmem [shape: f32[4,8,32], index: 8, kind: input, shape index: {}]
  %s9 = inlined_call_operand.vmem [shape: f32[1,32], index: 9, kind: input, shape index: {}]
  %s10 = inlined_call_operand.vmem [shape: f32[1,32], index: 10, kind: input, shape index: {}]
  %s11 = inlined_call_operand.vmem [shape: f32[1,32], index: 11, kind: input, shape index: {}]
  %s12 = inlined_call_operand.vmem [shape: f32[32,64], index: 12, kind: input, shape index: {}]
  %s13 = inlined_call_operand.vmem [shape: f32[1,64], index: 13, kind: input, shape index: {}]
  %s14 = inlined_call_operand.vmem [shape: f32[64,32], index: 14, kind: input, shape index: {}]
  %s15 = inlined_call_operand.vmem [shape: f32[1,32], index: 15, kind: input, shape index: {}]
  %s16 = inlined_call_operand.vmem [shape: f32[1,32], index: 16, kind: input, shape index: {}]
  %s17 = inlined_call_operand.vmem [shape: f32[1,32], index: 17, kind: input, shape index: {}]
  %s18 = inlined_call_operand.vmem [shape: f32[16,32], index: 18, kind: output, shape index: {}]
  %s19 = sld [smem:[#allocation0]]
  $region105: #{_forward.6} parent=0
    _
  %s21 = ssub.s32 1, %s19
  %s22 = scalar_select 0, %s21, %s19
  loop: start=0, step=1, limit=4
  $region2: #{_forward.6} parent=0 // loop_pre_header
    _
  $region3: #{_forward.6} parent=0 // loop_header
    %s24 = sphi 0, %s28
    %p25 = scmp.ge.s32.totalorder %s24, 4
    %s34 = sphi 0, %s36
    %s37 = sphi 0, %s34
    %s38 = sphi 0, %s37
    %s54 = sphi 0, %s38
    %s60 = sphi 0, %s62
    %s63 = sphi 0, %s60
    %s64 = sphi 0, %s63
    %s80 = sphi 0, %s64
    %s84 = sphi 0, %s84
    %s86 = sphi 0, %s84
    %s87 = sphi 0, %s86
    %s101 = sphi 0, %s87
    %s105 = sphi 0, %s105
    %s107 = sphi 0, %s105
    %s108 = sphi 0, %s107
    %s122 = sphi 0, %s108
    %s126 = sphi 0, %s126
    %s128 = sphi 0, %s126
    %s129 = sphi 0, %s128
    %s143 = sphi 0, %s129
    %s147 = sphi 0, %s147
    %s149 = sphi 0, %s147
    %s150 = sphi 0, %s149
    %s164 = sphi 0, %s150
    %s168 = sphi 0, %s168
    %s170 = sphi 0, %s168
    %s171 = sphi 0, %s170
    %s185 = sphi 0, %s171
    %s189 = sphi 0, %s189
    %s191 = sphi 0, %s189
    %s192 = sphi 0, %s191
    %s206 = sphi 0, %s192
    %s210 = sphi 0, %s210
    %s212 = sphi 0, %s210
    %s213 = sphi 0, %s212
    %s227 = sphi 0, %s213
    %s231 = sphi 0, %s231
    %s233 = sphi 0, %s231
    %s234 = sphi 0, %s233
    %s248 = sphi 0, %s234
    %s252 = sphi 0, %s252
    %s254 = sphi 0, %s252
    %s255 = sphi 0, %s254
    %s269 = sphi 0, %s255
    %s273 = sphi 0, %s273
    %s275 = sphi 0, %s273
    %s276 = sphi 0, %s275
    %s290 = sphi 0, %s276
    %s294 = sphi 0, %s294
    %s296 = sphi 0, %s294
    %s297 = sphi 0, %s296
    %s311 = sphi 0, %s297
    %s315 = sphi 0, %s315
    %s317 = sphi 0, %s315
    %s318 = sphi 0, %s317
    %s332 = sphi 0, %s318
    %s336 = sphi 0, %s336
    %s338 = sphi 0, %s336
    %s339 = sphi 0, %s338
    %s353 = sphi 0, %s339
    %s357 = sphi 0, %s357
    %s359 = sphi 0, %s357
    %s360 = sphi 0, %s359
    %s374 = sphi 0, %s360
    %s378 = sphi 0, %s378
    %s380 = sphi 0, %s378
    %s381 = sphi 0, %s380
    %s395 = sphi 0, %s381
    %s399 = sphi 0, %s399
    %s401 = sphi 0, %s399
    %s402 = sphi 0, %s401
    %s416 = sphi 0, %s402
    %s422 = sphi 0, %s424
    %s425 = sphi 0, %s422
    %s426 = sphi 0, %s425
    %s442 = sphi 0, %s426
  $region4: #{_forward.6} parent=0 // loop_header_branch
    %27 = sbr.rel (%p25) target = $region8
  $region5: #{_forward.6} parent=0 // loop_body
    %s29 = ssub.s32 %s24, 1
    %s30 = ssub.s32 %s24, 2
    %s31 = sadd.s32 %s24, 1
    %s32 = ssub.s32 %s24, %s31
    %p33 = scmp.eq.s32.totalorder %s32, 0
    %s35 = sadd.s32 %s34, 1
    %s36 = scalar_select %p33, %s34, %s35
    %p39 = pneg %p33
    %p40 = scmp.eq.s32.totalorder %s24, 1
    %p41 = por %p39, %p40
    %p42 = scmp.ne.s32.totalorder %s34, %s37
    %p43 = scmp.eq.s32.totalorder %s24, 0
    %p44 = por %p42, %p43
    %p45 = scmp.ne.s32.totalorder %s34, %s37
    %p46 = scmp.eq.s32.totalorder %s29, 1
    %p47 = por %p45, %p46
    %p48 = scmp.ne.s32.totalorder %s37, %s38
    %p49 = scmp.eq.s32.totalorder %s29, 0
    %p50 = por %p48, %p49
    %p51 = scmp.ne.s32.totalorder %s37, %s38
    %p52 = scmp.eq.s32.totalorder %s30, 1
    %p53 = por %p51, %p52
    %p55 = scmp.ne.s32.totalorder %s38, %s54
    %p56 = scmp.eq.s32.totalorder %s30, 0
    %p57 = por %p55, %p56
    %s58 = ssub.s32 %s24, %s31
    %p59 = scmp.eq.s32.totalorder %s58, 0
    %s61 = sadd.s32 %s60, 1
    %s62 = scalar_select %p59, %s60, %s61
    %p65 = pneg %p59
    %p66 = scmp.eq.s32.totalorder %s24, 1
    %p67 = por %p65, %p66
    %p68 = scmp.ne.s32.totalorder %s60, %s63
    %p69 = scmp.eq.s32.totalorder %s24, 0
    %p70 = por %p68, %p69
    %p71 = scmp.ne.s32.totalorder %s60, %s63
    %p72 = scmp.eq.s32.totalorder %s29, 1
    %p73 = por %p71, %p72
    %p74 = scmp.ne.s32.totalorder %s63, %s64
    %p75 = scmp.eq.s32.totalorder %s29, 0
    %p76 = por %p74, %p75
    %p77 = scmp.ne.s32.totalorder %s63, %s64
    %p78 = scmp.eq.s32.totalorder %s30, 1
    %p79 = por %p77, %p78
    %p81 = scmp.ne.s32.totalorder %s64, %s80
    %p82 = scmp.eq.s32.totalorder %s30, 0
    %p83 = por %p81, %p82
    %s85 = sadd.s32 %s84, 1
    %p88 = scmp.eq.s32.totalorder %s24, 1
    %p89 = scmp.ne.s32.totalorder %s84, %s86
    %p90 = scmp.eq.s32.totalorder %s24, 0
    %p91 = por %p89, %p90
    %p92 = scmp.ne.s32.totalorder %s84, %s86
    %p93 = scmp.eq.s32.totalorder %s29, 1
    %p94 = por %p92, %p93
    %p95 = scmp.ne.s32.totalorder %s86, %s87
    %p96 = scmp.eq.s32.totalorder %s29, 0
    %p97 = por %p95, %p96
    %p98 = scmp.ne.s32.totalorder %s86, %s87
    %p99 = scmp.eq.s32.totalorder %s30, 1
    %p100 = por %p98, %p99
    %p102 = scmp.ne.s32.totalorder %s87, %s101
    %p103 = scmp.eq.s32.totalorder %s30, 0
    %p104 = por %p102, %p103
    %s106 = sadd.s32 %s105, 1
    %p109 = scmp.eq.s32.totalorder %s24, 1
    %p110 = scmp.ne.s32.totalorder %s105, %s107
    %p111 = scmp.eq.s32.totalorder %s24, 0
    %p112 = por %p110, %p111
    %p113 = scmp.ne.s32.totalorder %s105, %s107
    %p114 = scmp.eq.s32.totalorder %s29, 1
    %p115 = por %p113, %p114
    %p116 = scmp.ne.s32.totalorder %s107, %s108
    %p117 = scmp.eq.s32.totalorder %s29, 0
    %p118 = por %p116, %p117
    %p119 = scmp.ne.s32.totalorder %s107, %s108
    %p120 = scmp.eq.s32.totalorder %s30, 1
    %p121 = por %p119, %p120
    %p123 = scmp.ne.s32.totalorder %s108, %s122
    %p124 = scmp.eq.s32.totalorder %s30, 0
    %p125 = por %p123, %p124
    %s127 = sadd.s32 %s126, 1
    %p130 = scmp.eq.s32.totalorder %s24, 1
    %p131 = scmp.ne.s32.totalorder %s126, %s128
    %p132 = scmp.eq.s32.totalorder %s24, 0
    %p133 = por %p131, %p132
    %p134 = scmp.ne.s32.totalorder %s126, %s128
    %p135 = scmp.eq.s32.totalorder %s29, 1
    %p136 = por %p134, %p135
    %p137 = scmp.ne.s32.totalorder %s128, %s129
    %p138 = scmp.eq.s32.totalorder %s29, 0
    %p139 = por %p137, %p138
    %p140 = scmp.ne.s32.totalorder %s128, %s129
    %p141 = scmp.eq.s32.totalorder %s30, 1
    %p142 = por %p140, %p141
    %p144 = scmp.ne.s32.totalorder %s129, %s143
    %p145 = scmp.eq.s32.totalorder %s30, 0
    %p146 = por %p144, %p145
    %s148 = sadd.s32 %s147, 1
    %p151 = scmp.eq.s32.totalorder %s24, 1
    %p152 = scmp.ne.s32.totalorder %s147, %s149
    %p153 = scmp.eq.s32.totalorder %s24, 0
    %p154 = por %p152, %p153
    %p155 = scmp.ne.s32.totalorder %s147, %s149
    %p156 = scmp.eq.s32.totalorder %s29, 1
    %p157 = por %p155, %p156
    %p158 = scmp.ne.s32.totalorder %s149, %s150
    %p159 = scmp.eq.s32.totalorder %s29, 0
    %p160 = por %p158, %p159
    %p161 = scmp.ne.s32.totalorder %s149, %s150
    %p162 = scmp.eq.s32.totalorder %s30, 1
    %p163 = por %p161, %p162
    %p165 = scmp.ne.s32.totalorder %s150, %s164
    %p166 = scmp.eq.s32.totalorder %s30, 0
    %p167 = por %p165, %p166
    %s169 = sadd.s32 %s168, 1
    %p172 = scmp.eq.s32.totalorder %s24, 1
    %p173 = scmp.ne.s32.totalorder %s168, %s170
    %p174 = scmp.eq.s32.totalorder %s24, 0
    %p175 = por %p173, %p174
    %p176 = scmp.ne.s32.totalorder %s168, %s170
    %p177 = scmp.eq.s32.totalorder %s29, 1
    %p178 = por %p176, %p177
    %p179 = scmp.ne.s32.totalorder %s170, %s171
    %p180 = scmp.eq.s32.totalorder %s29, 0
    %p181 = por %p179, %p180
    %p182 = scmp.ne.s32.totalorder %s170, %s171
    %p183 = scmp.eq.s32.totalorder %s30, 1
    %p184 = por %p182, %p183
    %p186 = scmp.ne.s32.totalorder %s171, %s185
    %p187 = scmp.eq.s32.totalorder %s30, 0
    %p188 = por %p186, %p187
    %s190 = sadd.s32 %s189, 1
    %p193 = scmp.eq.s32.totalorder %s24, 1
    %p194 = scmp.ne.s32.totalorder %s189, %s191
    %p195 = scmp.eq.s32.totalorder %s24, 0
    %p196 = por %p194, %p195
    %p197 = scmp.ne.s32.totalorder %s189, %s191
    %p198 = scmp.eq.s32.totalorder %s29, 1
    %p199 = por %p197, %p198
    %p200 = scmp.ne.s32.totalorder %s191, %s192
    %p201 = scmp.eq.s32.totalorder %s29, 0
    %p202 = por %p200, %p201
    %p203 = scmp.ne.s32.totalorder %s191, %s192
    %p204 = scmp.eq.s32.totalorder %s30, 1
    %p205 = por %p203, %p204
    %p207 = scmp.ne.s32.totalorder %s192, %s206
    %p208 = scmp.eq.s32.totalorder %s30, 0
    %p209 = por %p207, %p208
    %s211 = sadd.s32 %s210, 1
    %p214 = scmp.eq.s32.totalorder %s24, 1
    %p215 = scmp.ne.s32.totalorder %s210, %s212
    %p216 = scmp.eq.s32.totalorder %s24, 0
    %p217 = por %p215, %p216
    %p218 = scmp.ne.s32.totalorder %s210, %s212
    %p219 = scmp.eq.s32.totalorder %s29, 1
    %p220 = por %p218, %p219
    %p221 = scmp.ne.s32.totalorder %s212, %s213
    %p222 = scmp.eq.s32.totalorder %s29, 0
    %p223 = por %p221, %p222
    %p224 = scmp.ne.s32.totalorder %s212, %s213
    %p225 = scmp.eq.s32.totalorder %s30, 1
    %p226 = por %p224, %p225
    %p228 = scmp.ne.s32.totalorder %s213, %s227
    %p229 = scmp.eq.s32.totalorder %s30, 0
    %p230 = por %p228, %p229
    %s232 = sadd.s32 %s231, 1
    %p235 = scmp.eq.s32.totalorder %s24, 1
    %p236 = scmp.ne.s32.totalorder %s231, %s233
    %p237 = scmp.eq.s32.totalorder %s24, 0
    %p238 = por %p236, %p237
    %p239 = scmp.ne.s32.totalorder %s231, %s233
    %p240 = scmp.eq.s32.totalorder %s29, 1
    %p241 = por %p239, %p240
    %p242 = scmp.ne.s32.totalorder %s233, %s234
    %p243 = scmp.eq.s32.totalorder %s29, 0
    %p244 = por %p242, %p243
    %p245 = scmp.ne.s32.totalorder %s233, %s234
    %p246 = scmp.eq.s32.totalorder %s30, 1
    %p247 = por %p245, %p246
    %p249 = scmp.ne.s32.totalorder %s234, %s248
    %p250 = scmp.eq.s32.totalorder %s30, 0
    %p251 = por %p249, %p250
    %s253 = sadd.s32 %s252, 1
    %p256 = scmp.eq.s32.totalorder %s24, 1
    %p257 = scmp.ne.s32.totalorder %s252, %s254
    %p258 = scmp.eq.s32.totalorder %s24, 0
    %p259 = por %p257, %p258
    %p260 = scmp.ne.s32.totalorder %s252, %s254
    %p261 = scmp.eq.s32.totalorder %s29, 1
    %p262 = por %p260, %p261
    %p263 = scmp.ne.s32.totalorder %s254, %s255
    %p264 = scmp.eq.s32.totalorder %s29, 0
    %p265 = por %p263, %p264
    %p266 = scmp.ne.s32.totalorder %s254, %s255
    %p267 = scmp.eq.s32.totalorder %s30, 1
    %p268 = por %p266, %p267
    %p270 = scmp.ne.s32.totalorder %s255, %s269
    %p271 = scmp.eq.s32.totalorder %s30, 0
    %p272 = por %p270, %p271
    %s274 = sadd.s32 %s273, 1
    %p277 = scmp.eq.s32.totalorder %s24, 1
    %p278 = scmp.ne.s32.totalorder %s273, %s275
    %p279 = scmp.eq.s32.totalorder %s24, 0
    %p280 = por %p278, %p279
    %p281 = scmp.ne.s32.totalorder %s273, %s275
    %p282 = scmp.eq.s32.totalorder %s29, 1
    %p283 = por %p281, %p282
    %p284 = scmp.ne.s32.totalorder %s275, %s276
    %p285 = scmp.eq.s32.totalorder %s29, 0
    %p286 = por %p284, %p285
    %p287 = scmp.ne.s32.totalorder %s275, %s276
    %p288 = scmp.eq.s32.totalorder %s30, 1
    %p289 = por %p287, %p288
    %p291 = scmp.ne.s32.totalorder %s276, %s290
    %p292 = scmp.eq.s32.totalorder %s30, 0
    %p293 = por %p291, %p292
    %s295 = sadd.s32 %s294, 1
    %p298 = scmp.eq.s32.totalorder %s24, 1
    %p299 = scmp.ne.s32.totalorder %s294, %s296
    %p300 = scmp.eq.s32.totalorder %s24, 0
    %p301 = por %p299, %p300
    %p302 = scmp.ne.s32.totalorder %s294, %s296
    %p303 = scmp.eq.s32.totalorder %s29, 1
    %p304 = por %p302, %p303
    %p305 = scmp.ne.s32.totalorder %s296, %s297
    %p306 = scmp.eq.s32.totalorder %s29, 0
    %p307 = por %p305, %p306
    %p308 = scmp.ne.s32.totalorder %s296, %s297
    %p309 = scmp.eq.s32.totalorder %s30, 1
    %p310 = por %p308, %p309
    %p312 = scmp.ne.s32.totalorder %s297, %s311
    %p313 = scmp.eq.s32.totalorder %s30, 0
    %p314 = por %p312, %p313
    %s316 = sadd.s32 %s315, 1
    %p319 = scmp.eq.s32.totalorder %s24, 1
    %p320 = scmp.ne.s32.totalorder %s315, %s317
    %p321 = scmp.eq.s32.totalorder %s24, 0
    %p322 = por %p320, %p321
    %p323 = scmp.ne.s32.totalorder %s315, %s317
    %p324 = scmp.eq.s32.totalorder %s29, 1
    %p325 = por %p323, %p324
    %p326 = scmp.ne.s32.totalorder %s317, %s318
    %p327 = scmp.eq.s32.totalorder %s29, 0
    %p328 = por %p326, %p327
    %p329 = scmp.ne.s32.totalorder %s317, %s318
    %p330 = scmp.eq.s32.totalorder %s30, 1
    %p331 = por %p329, %p330
    %p333 = scmp.ne.s32.totalorder %s318, %s332
    %p334 = scmp.eq.s32.totalorder %s30, 0
    %p335 = por %p333, %p334
    %s337 = sadd.s32 %s336, 1
    %p340 = scmp.eq.s32.totalorder %s24, 1
    %p341 = scmp.ne.s32.totalorder %s336, %s338
    %p342 = scmp.eq.s32.totalorder %s24, 0
    %p343 = por %p341, %p342
    %p344 = scmp.ne.s32.totalorder %s336, %s338
    %p345 = scmp.eq.s32.totalorder %s29, 1
    %p346 = por %p344, %p345
    %p347 = scmp.ne.s32.totalorder %s338, %s339
    %p348 = scmp.eq.s32.totalorder %s29, 0
    %p349 = por %p347, %p348
    %p350 = scmp.ne.s32.totalorder %s338, %s339
    %p351 = scmp.eq.s32.totalorder %s30, 1
    %p352 = por %p350, %p351
    %p354 = scmp.ne.s32.totalorder %s339, %s353
    %p355 = scmp.eq.s32.totalorder %s30, 0
    %p356 = por %p354, %p355
    %s358 = sadd.s32 %s357, 1
    %p361 = scmp.eq.s32.totalorder %s24, 1
    %p362 = scmp.ne.s32.totalorder %s357, %s359
    %p363 = scmp.eq.s32.totalorder %s24, 0
    %p364 = por %p362, %p363
    %p365 = scmp.ne.s32.totalorder %s357, %s359
    %p366 = scmp.eq.s32.totalorder %s29, 1
    %p367 = por %p365, %p366
    %p368 = scmp.ne.s32.totalorder %s359, %s360
    %p369 = scmp.eq.s32.totalorder %s29, 0
    %p370 = por %p368, %p369
    %p371 = scmp.ne.s32.totalorder %s359, %s360
    %p372 = scmp.eq.s32.totalorder %s30, 1
    %p373 = por %p371, %p372
    %p375 = scmp.ne.s32.totalorder %s360, %s374
    %p376 = scmp.eq.s32.totalorder %s30, 0
    %p377 = por %p375, %p376
    %s379 = sadd.s32 %s378, 1
    %p382 = scmp.eq.s32.totalorder %s24, 1
    %p383 = scmp.ne.s32.totalorder %s378, %s380
    %p384 = scmp.eq.s32.totalorder %s24, 0
    %p385 = por %p383, %p384
    %p386 = scmp.ne.s32.totalorder %s378, %s380
    %p387 = scmp.eq.s32.totalorder %s29, 1
    %p388 = por %p386, %p387
    %p389 = scmp.ne.s32.totalorder %s380, %s381
    %p390 = scmp.eq.s32.totalorder %s29, 0
    %p391 = por %p389, %p390
    %p392 = scmp.ne.s32.totalorder %s380, %s381
    %p393 = scmp.eq.s32.totalorder %s30, 1
    %p394 = por %p392, %p393
    %p396 = scmp.ne.s32.totalorder %s381, %s395
    %p397 = scmp.eq.s32.totalorder %s30, 0
    %p398 = por %p396, %p397
    %s400 = sadd.s32 %s399, 1
    %p403 = scmp.eq.s32.totalorder %s24, 1
    %p404 = scmp.ne.s32.totalorder %s399, %s401
    %p405 = scmp.eq.s32.totalorder %s24, 0
    %p406 = por %p404, %p405
    %p407 = scmp.ne.s32.totalorder %s399, %s401
    %p408 = scmp.eq.s32.totalorder %s29, 1
    %p409 = por %p407, %p408
    %p410 = scmp.ne.s32.totalorder %s401, %s402
    %p411 = scmp.eq.s32.totalorder %s29, 0
    %p412 = por %p410, %p411
    %p413 = scmp.ne.s32.totalorder %s401, %s402
    %p414 = scmp.eq.s32.totalorder %s30, 1
    %p415 = por %p413, %p414
    %p417 = scmp.ne.s32.totalorder %s402, %s416
    %p418 = scmp.eq.s32.totalorder %s30, 0
    %p419 = por %p417, %p418
    %s420 = ssub.s32 %s24, %s31
    %p421 = scmp.eq.s32.totalorder %s420, 0
    %s423 = sadd.s32 %s422, 1
    %s424 = scalar_select %p421, %s422, %s423
    %p427 = pneg %p421
    %p428 = scmp.eq.s32.totalorder %s24, 1
    %p429 = por %p427, %p428
    %p430 = scmp.ne.s32.totalorder %s422, %s425
    %p431 = scmp.eq.s32.totalorder %s24, 0
    %p432 = por %p430, %p431
    %p433 = scmp.ne.s32.totalorder %s422, %s425
    %p434 = scmp.eq.s32.totalorder %s29, 1
    %p435 = por %p433, %p434
    %p436 = scmp.ne.s32.totalorder %s425, %s426
    %p437 = scmp.eq.s32.totalorder %s29, 0
    %p438 = por %p436, %p437
    %p439 = scmp.ne.s32.totalorder %s425, %s426
    %p440 = scmp.eq.s32.totalorder %s30, 1
    %p441 = por %p439, %p440
    %p443 = scmp.ne.s32.totalorder %s426, %s442
    %p444 = scmp.eq.s32.totalorder %s30, 0
    %p445 = por %p443, %p444
    %p446 = scmp.le.s32.totalorder 1, %s24
    %p447 = scmp.lt.s32.totalorder %s24, 3
    %p448 = pnand %p446, %p447
    %p449 = pneg %p448
    // Predicated region
    $region9: #{_forward.6} parent=5 // pred_check
      _
    $region10: #{_forward.6} parent=5 // pred_check_branch
      %451 = sbr.rel (%p448) target = $region12
    $region11: #{_forward.6} parent=5 // pred_region
      %s452 = ssub.s32 %s24, 1
      // Predicated region
      $region13: #{_forward.6} parent=11 // pred_check
        %p453 = pneg %p97
      $region14: #{_forward.6} parent=11 // pred_check_branch
        %455 = sbr.rel (%p453) target = $region16
      $region15: #{_forward.6} parent=11 // pred_region
        _
      $region16: #{_forward.6} parent=11 // pred_fallthru
        _
      // Predicated region
      $region17: #{_forward.6} parent=11 // pred_check
        %p456 = pneg %p118
      $region18: #{_forward.6} parent=11 // pred_check_branch
        %458 = sbr.rel (%p456) target = $region20
      $region19: #{_forward.6} parent=11 // pred_region
        _
      $region20: #{_forward.6} parent=11 // pred_fallthru
        _
      // Predicated region
      $region21: #{_forward.6} parent=11 // pred_check
        %p459 = pneg %p139
      $region22: #{_forward.6} parent=11 // pred_check_branch
        %461 = sbr.rel (%p459) target = $region24
      $region23: #{_forward.6} parent=11 // pred_region
        _
      $region24: #{_forward.6} parent=11 // pred_fallthru
        _
      // Predicated region
      $region25: #{_forward.6} parent=11 // pred_check
        %p462 = pneg %p160
      $region26: #{_forward.6} parent=11 // pred_check_branch
        %464 = sbr.rel (%p462) target = $region28
      $region27: #{_forward.6} parent=11 // pred_region
        _
      $region28: #{_forward.6} parent=11 // pred_fallthru
        _
      // Predicated region
      $region29: #{_forward.6} parent=11 // pred_check
        %p465 = pneg %p181
      $region30: #{_forward.6} parent=11 // pred_check_branch
        %467 = sbr.rel (%p465) target = $region32
      $region31: #{_forward.6} parent=11 // pred_region
        _
      $region32: #{_forward.6} parent=11 // pred_fallthru
        _
      // Predicated region
      $region33: #{_forward.6} parent=11 // pred_check
        %p468 = pneg %p202
      $region34: #{_forward.6} parent=11 // pred_check_branch
        %470 = sbr.rel (%p468) target = $region36
      $region35: #{_forward.6} parent=11 // pred_region
        _
      $region36: #{_forward.6} parent=11 // pred_fallthru
        _
      // Predicated region
      $region37: #{_forward.6} parent=11 // pred_check
        %p471 = pneg %p223
      $region38: #{_forward.6} parent=11 // pred_check_branch
        %473 = sbr.rel (%p471) target = $region40
      $region39: #{_forward.6} parent=11 // pred_region
        _
      $region40: #{_forward.6} parent=11 // pred_fallthru
        _
      // Predicated region
      $region41: #{_forward.6} parent=11 // pred_check
        %p474 = pneg %p244
      $region42: #{_forward.6} parent=11 // pred_check_branch
        %476 = sbr.rel (%p474) target = $region44
      $region43: #{_forward.6} parent=11 // pred_region
        _
      $region44: #{_forward.6} parent=11 // pred_fallthru
        _
      // Predicated region
      $region45: #{_forward.6} parent=11 // pred_check
        %p477 = pneg %p265
      $region46: #{_forward.6} parent=11 // pred_check_branch
        %479 = sbr.rel (%p477) target = $region48
      $region47: #{_forward.6} parent=11 // pred_region
        _
      $region48: #{_forward.6} parent=11 // pred_fallthru
        _
      // Predicated region
      $region49: #{_forward.6} parent=11 // pred_check
        %p480 = pneg %p286
      $region50: #{_forward.6} parent=11 // pred_check_branch
        %482 = sbr.rel (%p480) target = $region52
      $region51: #{_forward.6} parent=11 // pred_region
        _
      $region52: #{_forward.6} parent=11 // pred_fallthru
        _
      // Predicated region
      $region53: #{_forward.6} parent=11 // pred_check
        %p483 = pneg %p307
      $region54: #{_forward.6} parent=11 // pred_check_branch
        %485 = sbr.rel (%p483) target = $region56
      $region55: #{_forward.6} parent=11 // pred_region
        _
      $region56: #{_forward.6} parent=11 // pred_fallthru
        _
      // Predicated region
      $region57: #{_forward.6} parent=11 // pred_check
        %p486 = pneg %p328
      $region58: #{_forward.6} parent=11 // pred_check_branch
        %488 = sbr.rel (%p486) target = $region60
      $region59: #{_forward.6} parent=11 // pred_region
        _
      $region60: #{_forward.6} parent=11 // pred_fallthru
        _
      // Predicated region
      $region61: #{_forward.6} parent=11 // pred_check
        %p489 = pneg %p349
      $region62: #{_forward.6} parent=11 // pred_check_branch
        %491 = sbr.rel (%p489) target = $region64
      $region63: #{_forward.6} parent=11 // pred_region
        _
      $region64: #{_forward.6} parent=11 // pred_fallthru
        _
      // Predicated region
      $region65: #{_forward.6} parent=11 // pred_check
        %p492 = pneg %p370
      $region66: #{_forward.6} parent=11 // pred_check_branch
        %494 = sbr.rel (%p492) target = $region68
      $region67: #{_forward.6} parent=11 // pred_region
        _
      $region68: #{_forward.6} parent=11 // pred_fallthru
        _
      // Predicated region
      $region69: #{_forward.6} parent=11 // pred_check
        %p495 = pneg %p391
      $region70: #{_forward.6} parent=11 // pred_check_branch
        %497 = sbr.rel (%p495) target = $region72
      $region71: #{_forward.6} parent=11 // pred_region
        _
      $region72: #{_forward.6} parent=11 // pred_fallthru
        _
      // Predicated region
      $region73: #{_forward.6} parent=11 // pred_check
        %p498 = pneg %p412
      $region74: #{_forward.6} parent=11 // pred_check_branch
        %500 = sbr.rel (%p498) target = $region76
      $region75: #{_forward.6} parent=11 // pred_region
        _
      $region76: #{_forward.6} parent=11 // pred_fallthru
        _
    $region12: #{_forward.6} parent=5 // pred_fallthru
      _
    %p501 = scmp.lt.s32.totalorder %s24, 2
    // Predicated region
    $region77: #{_forward.6} parent=5 // pred_check
      %p502 = pneg %p501
    $region78: #{_forward.6} parent=5 // pred_check_branch
      %504 = sbr.rel (%p502) target = $region80
    $region79: #{_forward.6} parent=5 // pred_region
      // Predicated region
      $region81: #{_forward.6} parent=79 // pred_check
        %p505 = pneg %p44
      $region82: #{_forward.6} parent=79 // pred_check_branch
        %507 = sbr.rel (%p505) target = $region84
      $region83: #{_forward.6} parent=79 // pred_region
        %p508 = scmp.lt.s32.totalorder %s24, 1
        %s509 = scalar_select %p508, %s24, 1
        %s510 = smul.addr %s509, 8
        %s511 = scalar_lea.vmem %s0, %s510
      $region84: #{_forward.6} parent=79 // pred_fallthru
        _
      // Predicated region
      $region85: #{_forward.6} parent=79 // pred_check
        %p512 = pneg %p70
      $region86: #{_forward.6} parent=79 // pred_check_branch
        %514 = sbr.rel (%p512) target = $region88
      $region87: #{_forward.6} parent=79 // pred_region
        %p515 = scmp.lt.s32.totalorder %s24, 1
        %s516 = scalar_select %p515, %s24, 1
        %s517 = scalar_lea.vmem %s1, %s516
      $region88: #{_forward.6} parent=79 // pred_fallthru
        _
    $region80: #{_forward.6} parent=5 // pred_fallthru
      _
    %p518 = scmp.le.s32.totalorder 1, %s24
    %p519 = scmp.lt.s32.totalorder %s24, 3
    %p520 = pnand %p518, %p519
    %p521 = pneg %p520
    // Predicated region
    $region89: #{_forward.6} parent=5 // pred_check
      _
    $region90: #{_forward.6} parent=5 // pred_check_branch
      %523 = sbr.rel (%p520) target = $region92
    $region91: #{_forward.6} parent=5 // pred_region
      %s524 = ssub.s32 %s24, 1
      %p525 = scmp.lt.s32.totalorder %s29, 1
      %s526 = scalar_select %p525, %s29, 1
      %s527 = smul.addr %s526, 8
      %s528 = scalar_lea.vmem %s0, %s527
      %p529 = pneg %p50
      %p530 = pneg %p47
      %p531 = scmp.lt.s32.totalorder %s29, 1
      %s532 = scalar_select %p531, %s29, 1
      %s533 = scalar_lea.vmem %s1, %s532
      %p534 = pneg %p76
      %p535 = pneg %p73
      %p536 = pneg %p97
      %p537 = pneg %p94
      %p538 = pneg %p118
      %p539 = pneg %p115
      %p540 = pneg %p139
      %p541 = pneg %p136
      %p542 = pneg %p160
      %p543 = pneg %p157
      %p544 = pneg %p181
      %p545 = pneg %p178
      %p546 = pneg %p202
      %p547 = pneg %p199
      %p548 = pneg %p223
      %p549 = pneg %p220
      %p550 = pneg %p244
      %p551 = pneg %p241
      %p552 = pneg %p265
      %p553 = pneg %p262
      %p554 = pneg %p286
      %p555 = pneg %p283
      %p556 = pneg %p307
      %p557 = pneg %p304
      %p558 = pneg %p328
      %p559 = pneg %p325
      %p560 = pneg %p349
      %p561 = pneg %p346
      %p562 = pneg %p370
      %p563 = pneg %p367
      %p564 = pneg %p391
      %p565 = pneg %p388
      %p566 = pneg %p412
      %p567 = pneg %p409
      %p568 = pneg %p438
      %p569 = pneg %p435
      %p570 = scmp.lt.s32.totalorder %s29, 1
      %s571 = scalar_select %p570, %s29, 1
      %s572 = smul.addr %s571, 8
      %s573 = scalar_lea.vmem %s18, %s572
      %p574 = scmp.lt.s32.totalorder %s29, 1
      %s575 = scalar_select %p574, %s29, 1
      %s576 = smul.addr %s575, 8
      %s577 = scalar_lea.vmem %s0, %s576
      %p578 = scmp.lt.s32.totalorder %s29, 1
      %s579 = scalar_select %p578, %s29, 1
      %s580 = scalar_lea.vmem %s1, %s579
      %p581 = scmp.lt.s32.totalorder %s29, 1
      %s582 = scalar_select %p581, %s29, 1
      %s583 = smul.addr %s582, 8
      %s584 = scalar_lea.vmem %s18, %s583
      %v585 = vld [vmem:[%s577] sm:$0xff]
      %v586 = vld [vmem:[%s580] sm:$0x1]
      %v587 = vld [vmem:[%s2] sm:$0xff]
      %v588 = vld [vmem:[%s2 + $0x8] sm:$0xff]
      %v589 = vld [vmem:[%s2 + $0x10] sm:$0xff]
      %v590 = vld [vmem:[%s2 + $0x18] sm:$0xff]
      %v591 = vld [vmem:[%s3] sm:$0x1]
      %v593 = vlaneseq
      %v594 = vshrl.u32 %v593, 7
      %v595 = vsub.s32 0, %v594
      %v596 = vrot.slane %v591, %v595
      %vm598 = vcmask 261120
      %v600 = vsel %vm598, %v585, 0
      %602 = vmatprep.subr.mxu0 0.0
      %603 = vmatpush1.msra.mxu0 %v587
      %604 = vmatprep.subr.mxu0 0.0
      %605 = vmatpush1.msra.mxu0 %v588
      %606 = vmatprep.subr.mxu0 0.0
      %607 = vmatpush1.msra.mxu0 %v589
      %608 = vmatprep.subr.mxu0 0.0
      %609 = vmatpush1.msra.mxu0 %v590
      %610 = vmatprep.subr.mxu0 0.0
      %611 = vmatpush1.msra.mxu0 0.0
      %612 = vmatprep.subr.mxu0 0.0
      %613 = vmatpush1.msra.mxu0 0.0
      %614 = vmatprep.subr.mxu0 0.0
      %615 = vmatpush1.msra.mxu0 0.0
      %616 = vmatprep.subr.mxu0 0.0
      %617 = vmatpush1.msra.mxu0 0.0
      %618 = vmatprep.subr.mxu0 0.0
      %619 = vmatpush1.msra.mxu0 0.0
      %620 = vmatprep.subr.mxu0 0.0
      %621 = vmatpush1.msra.mxu0 0.0
      %622 = vmatprep.subr.mxu0 0.0
      %623 = vmatpush1.msra.mxu0 0.0
      %624 = vmatprep.subr.mxu0 0.0
      %625 = vmatpush1.msra.mxu0 0.0
      %626 = vmatprep.subr.mxu0 0.0
      %627 = vmatpush1.msra.mxu0 0.0
      %628 = vmatprep.subr.mxu0 0.0
      %629 = vmatpush1.msra.mxu0 0.0
      %630 = vmatprep.subr.mxu0 0.0
      %631 = vmatpush1.msra.mxu0 0.0
      %632 = vmatprep.subr.mxu0 0.0
      %633 = vmatpush1.msra.mxu0 0.0
      %634 = vmatprep.subr.mxu0 0.0
      %635 = vmatpush1.msra.mxu0 0.0
      %636 = vmatprep.subr.mxu0 0.0
      %637 = vmatpush1.msra.mxu0 0.0
      %638 = vmatprep.subr.mxu0 0.0
      %639 = vmatpush1.msra.mxu0 0.0
      %640 = vmatprep.subr.mxu0 0.0
      %641 = vmatpush1.msra.mxu0 0.0
      %642 = vmatprep.subr.mxu0 0.0
      %643 = vmatpush1.msra.mxu0 0.0
      %644 = vmatprep.subr.mxu0 0.0
      %645 = vmatpush1.msra.mxu0 0.0
      %646 = vmatprep.subr.mxu0 0.0
      %647 = vmatpush1.msra.mxu0 0.0
      %648 = vmatprep.subr.mxu0 0.0
      %649 = vmatpush1.msra.mxu0 0.0
      %650 = vmatprep.subr.mxu0 0.0
      %651 = vmatpush1.msra.mxu0 0.0
      %652 = vmatprep.subr.mxu0 0.0
      %653 = vmatpush1.msra.mxu0 0.0
      %654 = vmatprep.subr.mxu0 0.0
      %655 = vmatpush1.msra.mxu0 0.0
      %656 = vmatprep.subr.mxu0 0.0
      %657 = vmatpush1.msra.mxu0 0.0
      %658 = vmatprep.subr.mxu0 0.0
      %659 = vmatpush1.msra.mxu0 0.0
      %660 = vmatprep.subr.mxu0 0.0
      %661 = vmatpush1.msra.mxu0 0.0
      %662 = vmatprep.subr.mxu0 0.0
      %663 = vmatpush1.msra.mxu0 0.0
      %664 = vmatprep.subr.mxu0 0.0
      %665 = vmatpush1.msra.mxu0 0.0
      %666 = vmatprep.mubr.f32.mxu0 0.0
      %667 = vmatmul.mubr.f32.gmra.mrb[0].mxu0 %v600
      %v668 = vpop.f32.mrb[0].mxu0
      %v669 = vadd.f32 %v596, %v668
      %v670 = vpop.f32.mrb[0].mxu0
      %671 = vdwg.mxu0
      %v672 = vld [vmem:[%s4] sm:$0xff]
      %v673 = vld [vmem:[%s4 + $0x8] sm:$0xff]
      %v674 = vld [vmem:[%s4 + $0x10] sm:$0xff]
      %v675 = vld [vmem:[%s4 + $0x18] sm:$0xff]
      %v676 = vld [vmem:[%s5] sm:$0x1]
      %v678 = vlaneseq
      %v679 = vshrl.u32 %v678, 7
      %v680 = vsub.s32 0, %v679
      %v681 = vrot.slane %v676, %v680
      %683 = vmatprep.subr.mxu0 0.0
      %684 = vmatpush1.msra.mxu0 %v672
      %685 = vmatprep.subr.mxu0 0.0
      %686 = vmatpush1.msra.mxu0 %v673
      %687 = vmatprep.subr.mxu0 0.0
      %688 = vmatpush1.msra.mxu0 %v674
      %689 = vmatprep.subr.mxu0 0.0
      %690 = vmatpush1.msra.mxu0 %v675
      %691 = vmatprep.subr.mxu0 0.0
      %692 = vmatpush1.msra.mxu0 0.0
      %693 = vmatprep.subr.mxu0 0.0
      %694 = vmatpush1.msra.mxu0 0.0
      %695 = vmatprep.subr.mxu0 0.0
      %696 = vmatpush1.msra.mxu0 0.0
      %697 = vmatprep.subr.mxu0 0.0
      %698 = vmatpush1.msra.mxu0 0.0
      %699 = vmatprep.subr.mxu0 0.0
      %700 = vmatpush1.msra.mxu0 0.0
      %701 = vmatprep.subr.mxu0 0.0
      %702 = vmatpush1.msra.mxu0 0.0
      %703 = vmatprep.subr.mxu0 0.0
      %704 = vmatpush1.msra.mxu0 0.0
      %705 = vmatprep.subr.mxu0 0.0
      %706 = vmatpush1.msra.mxu0 0.0
      %707 = vmatprep.subr.mxu0 0.0
      %708 = vmatpush1.msra.mxu0 0.0
      %709 = vmatprep.subr.mxu0 0.0
      %710 = vmatpush1.msra.mxu0 0.0
      %711 = vmatprep.subr.mxu0 0.0
      %712 = vmatpush1.msra.mxu0 0.0
      %713 = vmatprep.subr.mxu0 0.0
      %714 = vmatpush1.msra.mxu0 0.0
      %715 = vmatprep.subr.mxu0 0.0
      %716 = vmatpush1.msra.mxu0 0.0
      %717 = vmatprep.subr.mxu0 0.0
      %718 = vmatpush1.msra.mxu0 0.0
      %719 = vmatprep.subr.mxu0 0.0
      %720 = vmatpush1.msra.mxu0 0.0
      %721 = vmatprep.subr.mxu0 0.0
      %722 = vmatpush1.msra.mxu0 0.0
      %723 = vmatprep.subr.mxu0 0.0
      %724 = vmatpush1.msra.mxu0 0.0
      %725 = vmatprep.subr.mxu0 0.0
      %726 = vmatpush1.msra.mxu0 0.0
      %727 = vmatprep.subr.mxu0 0.0
      %728 = vmatpush1.msra.mxu0 0.0
      %729 = vmatprep.subr.mxu0 0.0
      %730 = vmatpush1.msra.mxu0 0.0
      %731 = vmatprep.subr.mxu0 0.0
      %732 = vmatpush1.msra.mxu0 0.0
      %733 = vmatprep.subr.mxu0 0.0
      %734 = vmatpush1.msra.mxu0 0.0
      %735 = vmatprep.subr.mxu0 0.0
      %736 = vmatpush1.msra.mxu0 0.0
      %737 = vmatprep.subr.mxu0 0.0
      %738 = vmatpush1.msra.mxu0 0.0
      %739 = vmatprep.subr.mxu0 0.0
      %740 = vmatpush1.msra.mxu0 0.0
      %741 = vmatprep.subr.mxu0 0.0
      %742 = vmatpush1.msra.mxu0 0.0
      %743 = vmatprep.subr.mxu0 0.0
      %744 = vmatpush1.msra.mxu0 0.0
      %745 = vmatprep.subr.mxu0 0.0
      %746 = vmatpush1.msra.mxu0 0.0
      %747 = vmatprep.mubr.f32.mxu0 0.0
      %748 = vmatmul.mubr.f32.gmra.mrb[0].mxu0 %v600
      %v749 = vpop.f32.mrb[0].mxu0
      %v750 = vadd.f32 %v681, %v749
      %v751 = vpop.f32.mrb[0].mxu0
      %752 = vdwg.mxu0
      %v753 = vld [vmem:[%s6] sm:$0xff]
      %v754 = vld [vmem:[%s6 + $0x8] sm:$0xff]
      %v755 = vld [vmem:[%s6 + $0x10] sm:$0xff]
      %v756 = vld [vmem:[%s6 + $0x18] sm:$0xff]
      %v757 = vld [vmem:[%s7] sm:$0x1]
      %v759 = vlaneseq
      %v760 = vshrl.u32 %v759, 7
      %v761 = vsub.s32 0, %v760
      %v762 = vrot.slane %v757, %v761
      %764 = vmatprep.subr.mxu0 0.0
      %765 = vmatpush1.msra.mxu0 %v753
      %766 = vmatprep.subr.mxu0 0.0
      %767 = vmatpush1.msra.mxu0 %v754
      %768 = vmatprep.subr.mxu0 0.0
      %769 = vmatpush1.msra.mxu0 %v755
      %770 = vmatprep.subr.mxu0 0.0
      %771 = vmatpush1.msra.mxu0 %v756
      %772 = vmatprep.subr.mxu0 0.0
      %773 = vmatpush1.msra.mxu0 0.0
      %774 = vmatprep.subr.mxu0 0.0
      %775 = vmatpush1.msra.mxu0 0.0
      %776 = vmatprep.subr.mxu0 0.0
      %777 = vmatpush1.msra.mxu0 0.0
      %778 = vmatprep.subr.mxu0 0.0
      %779 = vmatpush1.msra.mxu0 0.0
      %780 = vmatprep.subr.mxu0 0.0
      %781 = vmatpush1.msra.mxu0 0.0
      %782 = vmatprep.subr.mxu0 0.0
      %783 = vmatpush1.msra.mxu0 0.0
      %784 = vmatprep.subr.mxu0 0.0
      %785 = vmatpush1.msra.mxu0 0.0
      %786 = vmatprep.subr.mxu0 0.0
      %787 = vmatpush1.msra.mxu0 0.0
      %788 = vmatprep.subr.mxu0 0.0
      %789 = vmatpush1.msra.mxu0 0.0
      %790 = vmatprep.subr.mxu0 0.0
      %791 = vmatpush1.msra.mxu0 0.0
      %792 = vmatprep.subr.mxu0 0.0
      %793 = vmatpush1.msra.mxu0 0.0
      %794 = vmatprep.subr.mxu0 0.0
      %795 = vmatpush1.msra.mxu0 0.0
      %796 = vmatprep.subr.mxu0 0.0
      %797 = vmatpush1.msra.mxu0 0.0
      %798 = vmatprep.subr.mxu0 0.0
      %799 = vmatpush1.msra.mxu0 0.0
      %800 = vmatprep.subr.mxu0 0.0
      %801 = vmatpush1.msra.mxu0 0.0
      %802 = vmatprep.subr.mxu0 0.0
      %803 = vmatpush1.msra.mxu0 0.0
      %804 = vmatprep.subr.mxu0 0.0
      %805 = vmatpush1.msra.mxu0 0.0
      %806 = vmatprep.subr.mxu0 0.0
      %807 = vmatpush1.msra.mxu0 0.0
      %808 = vmatprep.subr.mxu0 0.0
      %809 = vmatpush1.msra.mxu0 0.0
      %810 = vmatprep.subr.mxu0 0.0
      %811 = vmatpush1.msra.mxu0 0.0
      %812 = vmatprep.subr.mxu0 0.0
      %813 = vmatpush1.msra.mxu0 0.0
      %814 = vmatprep.subr.mxu0 0.0
      %815 = vmatpush1.msra.mxu0 0.0
      %816 = vmatprep.subr.mxu0 0.0
      %817 = vmatpush1.msra.mxu0 0.0
      %818 = vmatprep.subr.mxu0 0.0
      %819 = vmatpush1.msra.mxu0 0.0
      %820 = vmatprep.subr.mxu0 0.0
      %821 = vmatpush1.msra.mxu0 0.0
      %822 = vmatprep.subr.mxu0 0.0
      %823 = vmatpush1.msra.mxu0 0.0
      %824 = vmatprep.subr.mxu0 0.0
      %825 = vmatpush1.msra.mxu0 0.0
      %826 = vmatprep.subr.mxu0 0.0
      %827 = vmatpush1.msra.mxu0 0.0
      %828 = vmatprep.mubr.f32.mxu0 0.0
      %829 = vmatmul.mubr.f32.gmra.mrb[0].mxu0 %v600
      %v830 = vpop.f32.mrb[0].mxu0
      %v831 = vadd.f32 %v762, %v830
      %v832 = vpop.f32.mrb[0].mxu0
      %833 = vdwg.mxu0
      %vm834 = vcmask 64512
      %v836 = vsel %vm834, %v669, 0
      %v839 = vsel %vm834, %v750, 0
      %841 = vmatprep.subr.mxu0 0.0
      %842 = vmatpush1.xpose.msra.mxu0 %v839
      %843 = vmatprep.subr.mxu0 0.0
      %844 = vmatpush1.xpose.msra.mxu0 0.0
      %845 = vmatprep.subr.mxu0 0.0
      %846 = vmatpush1.xpose.msra.mxu0 0.0
      %847 = vmatprep.subr.mxu0 0.0
      %848 = vmatpush1.xpose.msra.mxu0 0.0
      %849 = vmatprep.subr.mxu0 0.0
      %850 = vmatpush1.xpose.msra.mxu0 0.0
      %851 = vmatprep.subr.mxu0 0.0
      %852 = vmatpush1.xpose.msra.mxu0 0.0
      %853 = vmatprep.subr.mxu0 0.0
      %854 = vmatpush1.xpose.msra.mxu0 0.0
      %855 = vmatprep.subr.mxu0 0.0
      %856 = vmatpush1.xpose.msra.mxu0 0.0
      %857 = vmatprep.subr.mxu0 0.0
      %858 = vmatpush1.xpose.msra.mxu0 0.0
      %859 = vmatprep.subr.mxu0 0.0
      %860 = vmatpush1.xpose.msra.mxu0 0.0
      %861 = vmatprep.subr.mxu0 0.0
      %862 = vmatpush1.xpose.msra.mxu0 0.0
      %863 = vmatprep.subr.mxu0 0.0
      %864 = vmatpush1.xpose.msra.mxu0 0.0
      %865 = vmatprep.subr.mxu0 0.0
      %866 = vmatpush1.xpose.msra.mxu0 0.0
      %867 = vmatprep.subr.mxu0 0.0
      %868 = vmatpush1.xpose.msra.mxu0 0.0
      %869 = vmatprep.subr.mxu0 0.0
      %870 = vmatpush1.xpose.msra.mxu0 0.0
      %871 = vmatprep.subr.mxu0 0.0
      %872 = vmatpush1.xpose.msra.mxu0 0.0
      %873 = vmatprep.subr.mxu0 0.0
      %874 = vmatpush1.xpose.msra.mxu0 0.0
      %875 = vmatprep.subr.mxu0 0.0
      %876 = vmatpush1.xpose.msra.mxu0 0.0
      %877 = vmatprep.subr.mxu0 0.0
      %878 = vmatpush1.xpose.msra.mxu0 0.0
      %879 = vmatprep.subr.mxu0 0.0
      %880 = vmatpush1.xpose.msra.mxu0 0.0
      %881 = vmatprep.subr.mxu0 0.0
      %882 = vmatpush1.xpose.msra.mxu0 0.0
      %883 = vmatprep.subr.mxu0 0.0
      %884 = vmatpush1.xpose.msra.mxu0 0.0
      %885 = vmatprep.subr.mxu0 0.0
      %886 = vmatpush1.xpose.msra.mxu0 0.0
      %887 = vmatprep.subr.mxu0 0.0
      %888 = vmatpush1.xpose.msra.mxu0 0.0
      %889 = vmatprep.subr.mxu0 0.0
      %890 = vmatpush1.xpose.msra.mxu0 0.0
      %891 = vmatprep.subr.mxu0 0.0
      %892 = vmatpush1.xpose.msra.mxu0 0.0
      %893 = vmatprep.subr.mxu0 0.0
      %894 = vmatpush1.xpose.msra.mxu0 0.0
      %895 = vmatprep.subr.mxu0 0.0
      %896 = vmatpush1.xpose.msra.mxu0 0.0
      %897 = vmatprep.subr.mxu0 0.0
      %898 = vmatpush1.xpose.msra.mxu0 0.0
      %899 = vmatprep.subr.mxu0 0.0
      %900 = vmatpush1.xpose.msra.mxu0 0.0
      %901 = vmatprep.subr.mxu0 0.0
      %902 = vmatpush1.xpose.msra.mxu0 0.0
      %903 = vmatprep.subr.mxu0 0.0
      %904 = vmatpush1.xpose.msra.mxu0 0.0
      %905 = vmatprep.mubr.f32.mxu0 0.0
      %906 = vmatmul.mubr.f32.gmra.mrb[0].mxu0 %v836
      %v907 = vpop.f32.mrb[0].mxu0
      %v908 = vadd.f32 0.0, %v907
      %v909 = vpop.f32.mrb[0].mxu0
      %910 = vdwg.mxu0
      %v911 = vmul.f32 %v908, 0.35355338
      %v913 = vlaneseq
      %v914 = vshrl.u32 %v913, 7
      %v915 = vsub.s32 0, %v914
      %v916 = vrot.slane %v586, %v915
      %v918 = vadd.f32 %v911, %v916
      %v919 = vsel %vm834, %v918, -inf
      %920 = vmax.xlane.f32.xlu0 %v919
      %v921 = vpop.xlane.xlu0 %920
      %v922 = vsub.f32 %v918, %v921
      %v923 = vmul.f32 %v922, 1.442695
      %v924 = vpow.pop %v923
      %v925 = vsel %vm834, %v924, 0.0
      %926 = vadd.xlane.f32.xlu0 %v925
      %v927 = vpop.xlane.xlu0 %926
      %v928 = vrcp.pop %v927
      %v929 = vmul.f32 %v924, %v928
      %v931 = vsel %vm834, %v929, 0
      %933 = vmatprep.subr.mxu0 0.0
      %934 = vmatpush1.msra.mxu0 %v831
      %935 = vmatprep.subr.mxu0 0.0
      %936 = vmatpush1.msra.mxu0 0.0
      %937 = vmatprep.subr.mxu0 0.0
      %938 = vmatpush1.msra.mxu0 0.0
      %939 = vmatprep.subr.mxu0 0.0
      %940 = vmatpush1.msra.mxu0 0.0
      %941 = vmatprep.subr.mxu0 0.0
      %942 = vmatpush1.msra.mxu0 0.0
      %943 = vmatprep.subr.mxu0 0.0
      %944 = vmatpush1.msra.mxu0 0.0
      %945 = vmatprep.subr.mxu0 0.0
      %946 = vmatpush1.msra.mxu0 0.0
      %947 = vmatprep.subr.mxu0 0.0
      %948 = vmatpush1.msra.mxu0 0.0
      %949 = vmatprep.subr.mxu0 0.0
      %950 = vmatpush1.msra.mxu0 0.0
      %951 = vmatprep.subr.mxu0 0.0
      %952 = vmatpush1.msra.mxu0 0.0
      %953 = vmatprep.subr.mxu0 0.0
      %954 = vmatpush1.msra.mxu0 0.0
      %955 = vmatprep.subr.mxu0 0.0
      %956 = vmatpush1.msra.mxu0 0.0
      %957 = vmatprep.subr.mxu0 0.0
      %958 = vmatpush1.msra.mxu0 0.0
      %959 = vmatprep.subr.mxu0 0.0
      %960 = vmatpush1.msra.mxu0 0.0
      %961 = vmatprep.subr.mxu0 0.0
      %962 = vmatpush1.msra.mxu0 0.0
      %963 = vmatprep.subr.mxu0 0.0
      %964 = vmatpush1.msra.mxu0 0.0
      %965 = vmatprep.subr.mxu0 0.0
      %966 = vmatpush1.msra.mxu0 0.0
      %967 = vmatprep.subr.mxu0 0.0
      %968 = vmatpush1.msra.mxu0 0.0
      %969 = vmatprep.subr.mxu0 0.0
      %970 = vmatpush1.msra.mxu0 0.0
      %971 = vmatprep.subr.mxu0 0.0
      %972 = vmatpush1.msra.mxu0 0.0
      %973 = vmatprep.subr.mxu0 0.0
      %974 = vmatpush1.msra.mxu0 0.0
      %975 = vmatprep.subr.mxu0 0.0
      %976 = vmatpush1.msra.mxu0 0.0
      %977 = vmatprep.subr.mxu0 0.0
      %978 = vmatpush1.msra.mxu0 0.0
      %979 = vmatprep.subr.mxu0 0.0
      %980 = vmatpush1.msra.mxu0 0.0
      %981 = vmatprep.subr.mxu0 0.0
      %982 = vmatpush1.msra.mxu0 0.0
      %983 = vmatprep.subr.mxu0 0.0
      %984 = vmatpush1.msra.mxu0 0.0
      %985 = vmatprep.subr.mxu0 0.0
      %986 = vmatpush1.msra.mxu0 0.0
      %987 = vmatprep.subr.mxu0 0.0
      %988 = vmatpush1.msra.mxu0 0.0
      %989 = vmatprep.subr.mxu0 0.0
      %990 = vmatpush1.msra.mxu0 0.0
      %991 = vmatprep.subr.mxu0 0.0
      %992 = vmatpush1.msra.mxu0 0.0
      %993 = vmatprep.subr.mxu0 0.0
      %994 = vmatpush1.msra.mxu0 0.0
      %995 = vmatprep.subr.mxu0 0.0
      %996 = vmatpush1.msra.mxu0 0.0
      %997 = vmatprep.mubr.f32.mxu0 0.0
      %998 = vmatmul.mubr.f32.gmra.mrb[0].mxu0 %v931
      %v999 = vpop.f32.mrb[0].mxu0
      %v1000 = vadd.f32 0.0, %v999
      %v1001 = vpop.f32.mrb[0].mxu0
      %1002 = vdwg.mxu0
      %v1003 = vld [vmem:[%s8] sm:$0xff]
      %s1004 = scalar_lea.vmem %s2, 32
      %v1005 = vld [vmem:[%s1004] sm:$0xff]
      %v1006 = vld [vmem:[%s1004 + $0x8] sm:$0xff]
      %v1007 = vld [vmem:[%s1004 + $0x10] sm:$0xff]
      %v1008 = vld [vmem:[%s1004 + $0x18] sm:$0xff]
      %s1009 = scalar_lea.vmem %s3, 1
      %v1010 = vld [vmem:[%s1009] sm:$0x1]
      %v1012 = vlaneseq
      %v1013 = vshrl.u32 %v1012, 7
      %v1014 = vsub.s32 0, %v1013
      %v1015 = vrot.slane %v1010, %v1014
      %1017 = vmatprep.subr.mxu0 0.0
      %1018 = vmatpush1.msra.mxu0 %v1005
      %1019 = vmatprep.subr.mxu0 0.0
      %1020 = vmatpush1.msra.mxu0 %v1006
      %1021 = vmatprep.subr.mxu0 0.0
      %1022 = vmatpush1.msra.mxu0 %v1007
      %1023 = vmatprep.subr.mxu0 0.0
      %1024 = vmatpush1.msra.mxu0 %v1008
      %1025 = vmatprep.subr.mxu0 0.0
      %1026 = vmatpush1.msra.mxu0 0.0
      %1027 = vmatprep.subr.mxu0 0.0
      %1028 = vmatpush1.msra.mxu0 0.0
      %1029 = vmatprep.subr.mxu0 0.0
      %1030 = vmatpush1.msra.mxu0 0.0
      %1031 = vmatprep.subr.mxu0 0.0
      %1032 = vmatpush1.msra.mxu0 0.0
      %1033 = vmatprep.subr.mxu0 0.0
      %1034 = vmatpush1.msra.mxu0 0.0
      %1035 = vmatprep.subr.mxu0 0.0
      %1036 = vmatpush1.msra.mxu0 0.0
      %1037 = vmatprep.subr.mxu0 0.0
      %1038 = vmatpush1.msra.mxu0 0.0
      %1039 = vmatprep.subr.mxu0 0.0
      %1040 = vmatpush1.msra.mxu0 0.0
      %1041 = vmatprep.subr.mxu0 0.0
      %1042 = vmatpush1.msra.mxu0 0.0
      %1043 = vmatprep.subr.mxu0 0.0
      %1044 = vmatpush1.msra.mxu0 0.0
      %1045 = vmatprep.subr.mxu0 0.0
      %1046 = vmatpush1.msra.mxu0 0.0
      %1047 = vmatprep.subr.mxu0 0.0
      %1048 = vmatpush1.msra.mxu0 0.0
      %1049 = vmatprep.subr.mxu0 0.0
      %1050 = vmatpush1.msra.mxu0 0.0
      %1051 = vmatprep.subr.mxu0 0.0
      %1052 = vmatpush1.msra.mxu0 0.0
      %1053 = vmatprep.subr.mxu0 0.0
      %1054 = vmatpush1.msra.mxu0 0.0
      %1055 = vmatprep.subr.mxu0 0.0
      %1056 = vmatpush1.msra.mxu0 0.0
      %1057 = vmatprep.subr.mxu0 0.0
      %1058 = vmatpush1.msra.mxu0 0.0
      %1059 = vmatprep.subr.mxu0 0.0
      %1060 = vmatpush1.msra.mxu0 0.0
      %1061 = vmatprep.subr.mxu0 0.0
      %1062 = vmatpush1.msra.mxu0 0.0
      %1063 = vmatprep.subr.mxu0 0.0
      %1064 = vmatpush1.msra.mxu0 0.0
      %1065 = vmatprep.subr.mxu0 0.0
      %1066 = vmatpush1.msra.mxu0 0.0
      %1067 = vmatprep.subr.mxu0 0.0
      %1068 = vmatpush1.msra.mxu0 0.0
      %1069 = vmatprep.subr.mxu0 0.0
      %1070 = vmatpush1.msra.mxu0 0.0
      %1071 = vmatprep.subr.mxu0 0.0
      %1072 = vmatpush1.msra.mxu0 0.0
      %1073 = vmatprep.subr.mxu0 0.0
      %1074 = vmatpush1.msra.mxu0 0.0
      %1075 = vmatprep.subr.mxu0 0.0
      %1076 = vmatpush1.msra.mxu0 0.0
      %1077 = vmatprep.subr.mxu0 0.0
      %1078 = vmatpush1.msra.mxu0 0.0
      %1079 = vmatprep.subr.mxu0 0.0
      %1080 = vmatpush1.msra.mxu0 0.0
      %1081 = vmatprep.mubr.f32.mxu0 0.0
      %1082 = vmatmul.mubr.f32.gmra.mrb[0].mxu0 %v600
      %v1083 = vpop.f32.mrb[0].mxu0
      %v1084 = vadd.f32 %v1015, %v1083
      %v1085 = vpop.f32.mrb[0].mxu0
      %1086 = vdwg.mxu0
      %s1087 = scalar_lea.vmem %s4, 32
      %v1088 = vld [vmem:[%s1087] sm:$0xff]
      %v1089 = vld [vmem:[%s1087 + $0x8] sm:$0xff]
      %v1090 = vld [vmem:[%s1087 + $0x10] sm:$0xff]
      %v1091 = vld [vmem:[%s1087 + $0x18] sm:$0xff]
      %s1092 = scalar_lea.vmem %s5, 1
      %v1093 = vld [vmem:[%s1092] sm:$0x1]
      %v1095 = vlaneseq
      %v1096 = vshrl.u32 %v1095, 7
      %v1097 = vsub.s32 0, %v1096
      %v1098 = vrot.slane %v1093, %v1097
      %1100 = vmatprep.subr.mxu0 0.0
      %1101 = vmatpush1.msra.mxu0 %v1088
      %1102 = vmatprep.subr.mxu0 0.0
      %1103 = vmatpush1.msra.mxu0 %v1089
      %1104 = vmatprep.subr.mxu0 0.0
      %1105 = vmatpush1.msra.mxu0 %v1090
      %1106 = vmatprep.subr.mxu0 0.0
      %1107 = vmatpush1.msra.mxu0 %v1091
      %1108 = vmatprep.subr.mxu0 0.0
      %1109 = vmatpush1.msra.mxu0 0.0
      %1110 = vmatprep.subr.mxu0 0.0
      %1111 = vmatpush1.msra.mxu0 0.0
      %1112 = vmatprep.subr.mxu0 0.0
      %1113 = vmatpush1.msra.mxu0 0.0
      %1114 = vmatprep.subr.mxu0 0.0
      %1115 = vmatpush1.msra.mxu0 0.0
      %1116 = vmatprep.subr.mxu0 0.0
      %1117 = vmatpush1.msra.mxu0 0.0
      %1118 = vmatprep.subr.mxu0 0.0
      %1119 = vmatpush1.msra.mxu0 0.0
      %1120 = vmatprep.subr.mxu0 0.0
      %1121 = vmatpush1.msra.mxu0 0.0
      %1122 = vmatprep.subr.mxu0 0.0
      %1123 = vmatpush1.msra.mxu0 0.0
      %1124 = vmatprep.subr.mxu0 0.0
      %1125 = vmatpush1.msra.mxu0 0.0
      %1126 = vmatprep.subr.mxu0 0.0
      %1127 = vmatpush1.msra.mxu0 0.0
      %1128 = vmatprep.subr.mxu0 0.0
      %1129 = vmatpush1.msra.mxu0 0.0
      %1130 = vmatprep.subr.mxu0 0.0
      %1131 = vmatpush1.msra.mxu0 0.0
      %1132 = vmatprep.subr.mxu0 0.0
      %1133 = vmatpush1.msra.mxu0 0.0
      %1134 = vmatprep.subr.mxu0 0.0
      %1135 = vmatpush1.msra.mxu0 0.0
      %1136 = vmatprep.subr.mxu0 0.0
      %1137 = vmatpush1.msra.mxu0 0.0
      %1138 = vmatprep.subr.mxu0 0.0
      %1139 = vmatpush1.msra.mxu0 0.0
      %1140 = vmatprep.subr.mxu0 0.0
      %1141 = vmatpush1.msra.mxu0 0.0
      %1142 = vmatprep.subr.mxu0 0.0
      %1143 = vmatpush1.msra.mxu0 0.0
      %1144 = vmatprep.subr.mxu0 0.0
      %1145 = vmatpush1.msra.mxu0 0.0
      %1146 = vmatprep.subr.mxu0 0.0
      %1147 = vmatpush1.msra.mxu0 0.0
      %1148 = vmatprep.subr.mxu0 0.0
      %1149 = vmatpush1.msra.mxu0 0.0
      %1150 = vmatprep.subr.mxu0 0.0
      %1151 = vmatpush1.msra.mxu0 0.0
      %1152 = vmatprep.subr.mxu0 0.0
      %1153 = vmatpush1.msra.mxu0 0.0
      %1154 = vmatprep.subr.mxu0 0.0
      %1155 = vmatpush1.msra.mxu0 0.0
      %1156 = vmatprep.subr.mxu0 0.0
      %1157 = vmatpush1.msra.mxu0 0.0
      %1158 = vmatprep.subr.mxu0 0.0
      %1159 = vmatpush1.msra.mxu0 0.0
      %1160 = vmatprep.subr.mxu0 0.0
      %1161 = vmatpush1.msra.mxu0 0.0
      %1162 = vmatprep.subr.mxu0 0.0
      %1163 = vmatpush1.msra.mxu0 0.0
      %1164 = vmatprep.mubr.f32.mxu0 0.0
      %1165 = vmatmul.mubr.f32.gmra.mrb[0].mxu0 %v600
      %v1166 = vpop.f32.mrb[0].mxu0
      %v1167 = vadd.f32 %v1098, %v1166
      %v1168 = vpop.f32.mrb[0].mxu0
      %1169 = vdwg.mxu0
      %s1170 = scalar_lea.vmem %s6, 32
      %v1171 = vld [vmem:[%s1170] sm:$0xff]
      %v1172 = vld [vmem:[%s1170 + $0x8] sm:$0xff]
      %v1173 = vld [vmem:[%s1170 + $0x10] sm:$0xff]
      %v1174 = vld [vmem:[%s1170 + $0x18] sm:$0xff]
      %s1175 = scalar_lea.vmem %s7, 1
      %v1176 = vld [vmem:[%s1175] sm:$0x1]
      %v1178 = vlaneseq
      %v1179 = vshrl.u32 %v1178, 7
      %v1180 = vsub.s32 0, %v1179
      %v1181 = vrot.slane %v1176, %v1180
      %1183 = vmatprep.subr.mxu0 0.0
      %1184 = vmatpush1.msra.mxu0 %v1171
      %1185 = vmatprep.subr.mxu0 0.0
      %1186 = vmatpush1.msra.mxu0 %v1172
      %1187 = vmatprep.subr.mxu0 0.0
      %1188 = vmatpush1.msra.mxu0 %v1173
      %1189 = vmatprep.subr.mxu0 0.0
      %1190 = vmatpush1.msra.mxu0 %v1174
      %1191 = vmatprep.subr.mxu0 0.0
      %1192 = vmatpush1.msra.mxu0 0.0
      %1193 = vmatprep.subr.mxu0 0.0
      %1194 = vmatpush1.msra.mxu0 0.0
      %1195 = vmatprep.subr.mxu0 0.0
      %1196 = vmatpush1.msra.mxu0 0.0
      %1197 = vmatprep.subr.mxu0 0.0
      %1198 = vmatpush1.msra.mxu0 0.0
      %1199 = vmatprep.subr.mxu0 0.0
      %1200 = vmatpush1.msra.mxu0 0.0
      %1201 = vmatprep.subr.mxu0 0.0
      %1202 = vmatpush1.msra.mxu0 0.0
      %1203 = vmatprep.subr.mxu0 0.0
      %1204 = vmatpush1.msra.mxu0 0.0
      %1205 = vmatprep.subr.mxu0 0.0
      %1206 = vmatpush1.msra.mxu0 0.0
      %1207 = vmatprep.subr.mxu0 0.0
      %1208 = vmatpush1.msra.mxu0 0.0
      %1209 = vmatprep.subr.mxu0 0.0
      %1210 = vmatpush1.msra.mxu0 0.0
      %1211 = vmatprep.subr.mxu0 0.0
      %1212 = vmatpush1.msra.mxu0 0.0
      %1213 = vmatprep.subr.mxu0 0.0
      %1214 = vmatpush1.msra.mxu0 0.0
      %1215 = vmatprep.subr.mxu0 0.0
      %1216 = vmatpush1.msra.mxu0 0.0
      %1217 = vmatprep.subr.mxu0 0.0
      %1218 = vmatpush1.msra.mxu0 0.0
      %1219 = vmatprep.subr.mxu0 0.0
      %1220 = vmatpush1.msra.mxu0 0.0
      %1221 = vmatprep.subr.mxu0 0.0
      %1222 = vmatpush1.msra.mxu0 0.0
      %1223 = vmatprep.subr.mxu0 0.0
      %1224 = vmatpush1.msra.mxu0 0.0
      %1225 = vmatprep.subr.mxu0 0.0
      %1226 = vmatpush1.msra.mxu0 0.0
      %1227 = vmatprep.subr.mxu0 0.0
      %1228 = vmatpush1.msra.mxu0 0.0
      %1229 = vmatprep.subr.mxu0 0.0
      %1230 = vmatpush1.msra.mxu0 0.0
      %1231 = vmatprep.subr.mxu0 0.0
      %1232 = vmatpush1.msra.mxu0 0.0
      %1233 = vmatprep.subr.mxu0 0.0
      %1234 = vmatpush1.msra.mxu0 0.0
      %1235 = vmatprep.subr.mxu0 0.0
      %1236 = vmatpush1.msra.mxu0 0.0
      %1237 = vmatprep.subr.mxu0 0.0
      %1238 = vmatpush1.msra.mxu0 0.0
      %1239 = vmatprep.subr.mxu0 0.0
      %1240 = vmatpush1.msra.mxu0 0.0
      %1241 = vmatprep.subr.mxu0 0.0
      %1242 = vmatpush1.msra.mxu0 0.0
      %1243 = vmatprep.subr.mxu0 0.0
      %1244 = vmatpush1.msra.mxu0 0.0
      %1245 = vmatprep.subr.mxu0 0.0
      %1246 = vmatpush1.msra.mxu0 0.0
      %1247 = vmatprep.mubr.f32.mxu0 0.0
      %1248 = vmatmul.mubr.f32.gmra.mrb[0].mxu0 %v600
      %v1249 = vpop.f32.mrb[0].mxu0
      %v1250 = vadd.f32 %v1181, %v1249
      %v1251 = vpop.f32.mrb[0].mxu0
      %1252 = vdwg.mxu0
      %v1254 = vsel %vm834, %v1084, 0
      %v1257 = vsel %vm834, %v1167, 0
      %1259 = vmatprep.subr.mxu0 0.0
      %1260 = vmatpush1.xpose.msra.mxu0 %v1257
      %1261 = vmatprep.subr.mxu0 0.0
      %1262 = vmatpush1.xpose.msra.mxu0 0.0
      %1263 = vmatprep.subr.mxu0 0.0
      %1264 = vmatpush1.xpose.msra.mxu0 0.0
      %1265 = vmatprep.subr.mxu0 0.0
      %1266 = vmatpush1.xpose.msra.mxu0 0.0
      %1267 = vmatprep.subr.mxu0 0.0
      %1268 = vmatpush1.xpose.msra.mxu0 0.0
      %1269 = vmatprep.subr.mxu0 0.0
      %1270 = vmatpush1.xpose.msra.mxu0 0.0
      %1271 = vmatprep.subr.mxu0 0.0
      %1272 = vmatpush1.xpose.msra.mxu0 0.0
      %1273 = vmatprep.subr.mxu0 0.0
      %1274 = vmatpush1.xpose.msra.mxu0 0.0
      %1275 = vmatprep.subr.mxu0 0.0
      %1276 = vmatpush1.xpose.msra.mxu0 0.0
      %1277 = vmatprep.subr.mxu0 0.0
      %1278 = vmatpush1.xpose.msra.mxu0 0.0
      %1279 = vmatprep.subr.mxu0 0.0
      %1280 = vmatpush1.xpose.msra.mxu0 0.0
      %1281 = vmatprep.subr.mxu0 0.0
      %1282 = vmatpush1.xpose.msra.mxu0 0.0
      %1283 = vmatprep.subr.mxu0 0.0
      %1284 = vmatpush1.xpose.msra.mxu0 0.0
      %1285 = vmatprep.subr.mxu0 0.0
      %1286 = vmatpush1.xpose.msra.mxu0 0.0
      %1287 = vmatprep.subr.mxu0 0.0
      %1288 = vmatpush1.xpose.msra.mxu0 0.0
      %1289 = vmatprep.subr.mxu0 0.0
      %1290 = vmatpush1.xpose.msra.mxu0 0.0
      %1291 = vmatprep.subr.mxu0 0.0
      %1292 = vmatpush1.xpose.msra.mxu0 0.0
      %1293 = vmatprep.subr.mxu0 0.0
      %1294 = vmatpush1.xpose.msra.mxu0 0.0
      %1295 = vmatprep.subr.mxu0 0.0
      %1296 = vmatpush1.xpose.msra.mxu0 0.0
      %1297 = vmatprep.subr.mxu0 0.0
      %1298 = vmatpush1.xpose.msra.mxu0 0.0
      %1299 = vmatprep.subr.mxu0 0.0
      %1300 = vmatpush1.xpose.msra.mxu0 0.0
      %1301 = vmatprep.subr.mxu0 0.0
      %1302 = vmatpush1.xpose.msra.mxu0 0.0
      %1303 = vmatprep.subr.mxu0 0.0
      %1304 = vmatpush1.xpose.msra.mxu0 0.0
      %1305 = vmatprep.subr.mxu0 0.0
      %1306 = vmatpush1.xpose.msra.mxu0 0.0
      %1307 = vmatprep.subr.mxu0 0.0
      %1308 = vmatpush1.xpose.msra.mxu0 0.0
      %1309 = vmatprep.subr.mxu0 0.0
      %1310 = vmatpush1.xpose.msra.mxu0 0.0
      %1311 = vmatprep.subr.mxu0 0.0
      %1312 = vmatpush1.xpose.msra.mxu0 0.0
      %1313 = vmatprep.subr.mxu0 0.0
      %1314 = vmatpush1.xpose.msra.mxu0 0.0
      %1315 = vmatprep.subr.mxu0 0.0
      %1316 = vmatpush1.xpose.msra.mxu0 0.0
      %1317 = vmatprep.subr.mxu0 0.0
      %1318 = vmatpush1.xpose.msra.mxu0 0.0
      %1319 = vmatprep.subr.mxu0 0.0
      %1320 = vmatpush1.xpose.msra.mxu0 0.0
      %1321 = vmatprep.subr.mxu0 0.0
      %1322 = vmatpush1.xpose.msra.mxu0 0.0
      %1323 = vmatprep.mubr.f32.mxu0 0.0
      %1324 = vmatmul.mubr.f32.gmra.mrb[0].mxu0 %v1254
      %v1325 = vpop.f32.mrb[0].mxu0
      %v1326 = vadd.f32 0.0, %v1325
      %v1327 = vpop.f32.mrb[0].mxu0
      %1328 = vdwg.mxu0
      %v1329 = vmul.f32 %v1326, 0.35355338
      %v1330 = vadd.f32 %v1329, %v916
      %v1331 = vsel %vm834, %v1330, -inf
      %1332 = vmax.xlane.f32.xlu0 %v1331
      %v1333 = vpop.xlane.xlu0 %1332
      %v1334 = vsub.f32 %v1330, %v1333
      %v1335 = vmul.f32 %v1334, 1.442695
      %v1336 = vpow.pop %v1335
      %v1337 = vsel %vm834, %v1336, 0.0
      %1338 = vadd.xlane.f32.xlu0 %v1337
      %v1339 = vpop.xlane.xlu0 %1338
      %v1340 = vrcp.pop %v1339
      %v1341 = vmul.f32 %v1336, %v1340
      %v1343 = vsel %vm834, %v1341, 0
      %1345 = vmatprep.subr.mxu0 0.0
      %1346 = vmatpush1.msra.mxu0 %v1250
      %1347 = vmatprep.subr.mxu0 0.0
      %1348 = vmatpush1.msra.mxu0 0.0
      %1349 = vmatprep.subr.mxu0 0.0
      %1350 = vmatpush1.msra.mxu0 0.0
      %1351 = vmatprep.subr.mxu0 0.0
      %1352 = vmatpush1.msra.mxu0 0.0
      %1353 = vmatprep.subr.mxu0 0.0
      %1354 = vmatpush1.msra.mxu0 0.0
      %1355 = vmatprep.subr.mxu0 0.0
      %1356 = vmatpush1.msra.mxu0 0.0
      %1357 = vmatprep.subr.mxu0 0.0
      %1358 = vmatpush1.msra.mxu0 0.0
      %1359 = vmatprep.subr.mxu0 0.0
      %1360 = vmatpush1.msra.mxu0 0.0
      %1361 = vmatprep.subr.mxu0 0.0
      %1362 = vmatpush1.msra.mxu0 0.0
      %1363 = vmatprep.subr.mxu0 0.0
      %1364 = vmatpush1.msra.mxu0 0.0
      %1365 = vmatprep.subr.mxu0 0.0
      %1366 = vmatpush1.msra.mxu0 0.0
      %1367 = vmatprep.subr.mxu0 0.0
      %1368 = vmatpush1.msra.mxu0 0.0
      %1369 = vmatprep.subr.mxu0 0.0
      %1370 = vmatpush1.msra.mxu0 0.0
      %1371 = vmatprep.subr.mxu0 0.0
      %1372 = vmatpush1.msra.mxu0 0.0
      %1373 = vmatprep.subr.mxu0 0.0
      %1374 = vmatpush1.msra.mxu0 0.0
      %1375 = vmatprep.subr.mxu0 0.0
      %1376 = vmatpush1.msra.mxu0 0.0
      %1377 = vmatprep.subr.mxu0 0.0
      %1378 = vmatpush1.msra.mxu0 0.0
      %1379 = vmatprep.subr.mxu0 0.0
      %1380 = vmatpush1.msra.mxu0 0.0
      %1381 = vmatprep.subr.mxu0 0.0
      %1382 = vmatpush1.msra.mxu0 0.0
      %1383 = vmatprep.subr.mxu0 0.0
      %1384 = vmatpush1.msra.mxu0 0.0
      %1385 = vmatprep.subr.mxu0 0.0
      %1386 = vmatpush1.msra.mxu0 0.0
      %1387 = vmatprep.subr.mxu0 0.0
      %1388 = vmatpush1.msra.mxu0 0.0
      %1389 = vmatprep.subr.mxu0 0.0
      %1390 = vmatpush1.msra.mxu0 0.0
      %1391 = vmatprep.subr.mxu0 0.0
      %1392 = vmatpush1.msra.mxu0 0.0
      %1393 = vmatprep.subr.mxu0 0.0
      %1394 = vmatpush1.msra.mxu0 0.0
      %1395 = vmatprep.subr.mxu0 0.0
      %1396 = vmatpush1.msra.mxu0 0.0
      %1397 = vmatprep.subr.mxu0 0.0
      %1398 = vmatpush1.msra.mxu0 0.0
      %1399 = vmatprep.subr.mxu0 0.0
      %1400 = vmatpush1.msra.mxu0 0.0
      %1401 = vmatprep.subr.mxu0 0.0
      %1402 = vmatpush1.msra.mxu0 0.0
      %1403 = vmatprep.subr.mxu0 0.0
      %1404 = vmatpush1.msra.mxu0 0.0
      %1405 = vmatprep.subr.mxu0 0.0
      %1406 = vmatpush1.msra.mxu0 0.0
      %1407 = vmatprep.subr.mxu0 0.0
      %1408 = vmatpush1.msra.mxu0 0.0
      %1409 = vmatprep.mubr.f32.mxu0 0.0
      %1410 = vmatmul.mubr.f32.gmra.mrb[0].mxu0 %v1343
      %v1411 = vpop.f32.mrb[0].mxu0
      %v1412 = vadd.f32 0.0, %v1411
      %v1413 = vpop.f32.mrb[0].mxu0
      %1414 = vdwg.mxu0
      %s1415 = scalar_lea.vmem %s8, 8
      %v1416 = vld [vmem:[%s1415] sm:$0xff]
      %v1418 = vsel %vm834, %v1412, 0
      %1420 = vmatprep.subr.mxu0 0.0
      %1421 = vmatpush1.msra.mxu0 %v1416
      %1422 = vmatprep.subr.mxu0 0.0
      %1423 = vmatpush1.msra.mxu0 0.0
      %1424 = vmatprep.subr.mxu0 0.0
      %1425 = vmatpush1.msra.mxu0 0.0
      %1426 = vmatprep.subr.mxu0 0.0
      %1427 = vmatpush1.msra.mxu0 0.0
      %1428 = vmatprep.subr.mxu0 0.0
      %1429 = vmatpush1.msra.mxu0 0.0
      %1430 = vmatprep.subr.mxu0 0.0
      %1431 = vmatpush1.msra.mxu0 0.0
      %1432 = vmatprep.subr.mxu0 0.0
      %1433 = vmatpush1.msra.mxu0 0.0
      %1434 = vmatprep.subr.mxu0 0.0
      %1435 = vmatpush1.msra.mxu0 0.0
      %1436 = vmatprep.subr.mxu0 0.0
      %1437 = vmatpush1.msra.mxu0 0.0
      %1438 = vmatprep.subr.mxu0 0.0
      %1439 = vmatpush1.msra.mxu0 0.0
      %1440 = vmatprep.subr.mxu0 0.0
      %1441 = vmatpush1.msra.mxu0 0.0
      %1442 = vmatprep.subr.mxu0 0.0
      %1443 = vmatpush1.msra.mxu0 0.0
      %1444 = vmatprep.subr.mxu0 0.0
      %1445 = vmatpush1.msra.mxu0 0.0
      %1446 = vmatprep.subr.mxu0 0.0
      %1447 = vmatpush1.msra.mxu0 0.0
      %1448 = vmatprep.subr.mxu0 0.0
      %1449 = vmatpush1.msra.mxu0 0.0
      %1450 = vmatprep.subr.mxu0 0.0
      %1451 = vmatpush1.msra.mxu0 0.0
      %1452 = vmatprep.subr.mxu0 0.0
      %1453 = vmatpush1.msra.mxu0 0.0
      %1454 = vmatprep.subr.mxu0 0.0
      %1455 = vmatpush1.msra.mxu0 0.0
      %1456 = vmatprep.subr.mxu0 0.0
      %1457 = vmatpush1.msra.mxu0 0.0
      %1458 = vmatprep.subr.mxu0 0.0
      %1459 = vmatpush1.msra.mxu0 0.0
      %1460 = vmatprep.subr.mxu0 0.0
      %1461 = vmatpush1.msra.mxu0 0.0
      %1462 = vmatprep.subr.mxu0 0.0
      %1463 = vmatpush1.msra.mxu0 0.0
      %1464 = vmatprep.subr.mxu0 0.0
      %1465 = vmatpush1.msra.mxu0 0.0
      %1466 = vmatprep.subr.mxu0 0.0
      %1467 = vmatpush1.msra.mxu0 0.0
      %1468 = vmatprep.subr.mxu0 0.0
      %1469 = vmatpush1.msra.mxu0 0.0
      %1470 = vmatprep.subr.mxu0 0.0
      %1471 = vmatpush1.msra.mxu0 0.0
      %1472 = vmatprep.subr.mxu0 0.0
      %1473 = vmatpush1.msra.mxu0 0.0
      %1474 = vmatprep.subr.mxu0 0.0
      %1475 = vmatpush1.msra.mxu0 0.0
      %1476 = vmatprep.subr.mxu0 0.0
      %1477 = vmatpush1.msra.mxu0 0.0
      %1478 = vmatprep.subr.mxu0 0.0
      %1479 = vmatpush1.msra.mxu0 0.0
      %1480 = vmatprep.subr.mxu0 0.0
      %1481 = vmatpush1.msra.mxu0 0.0
      %1482 = vmatprep.subr.mxu0 0.0
      %1483 = vmatpush1.msra.mxu0 0.0
      %1484 = vmatprep.mubr.f32.mxu0 0.0
      %1485 = vmatmul.mubr.f32.gmra.mrb[0].mxu0 %v1418
      %v1486 = vpop.f32.mrb[0].mxu0
      %v1487 = vadd.f32 0.0, %v1486
      %v1488 = vpop.f32.mrb[0].mxu0
      %1489 = vdwg.mxu0
      %v1491 = vsel %vm834, %v1000, 0
      %1493 = vmatprep.subr.mxu0 0.0
      %1494 = vmatpush1.msra.mxu0 %v1003
      %1495 = vmatprep.subr.mxu0 0.0
      %1496 = vmatpush1.msra.mxu0 0.0
      %1497 = vmatprep.subr.mxu0 0.0
      %1498 = vmatpush1.msra.mxu0 0.0
      %1499 = vmatprep.subr.mxu0 0.0
      %1500 = vmatpush1.msra.mxu0 0.0
      %1501 = vmatprep.subr.mxu0 0.0
      %1502 = vmatpush1.msra.mxu0 0.0
      %1503 = vmatprep.subr.mxu0 0.0
      %1504 = vmatpush1.msra.mxu0 0.0
      %1505 = vmatprep.subr.mxu0 0.0
      %1506 = vmatpush1.msra.mxu0 0.0
      %1507 = vmatprep.subr.mxu0 0.0
      %1508 = vmatpush1.msra.mxu0 0.0
      %1509 = vmatprep.subr.mxu0 0.0
      %1510 = vmatpush1.msra.mxu0 0.0
      %1511 = vmatprep.subr.mxu0 0.0
      %1512 = vmatpush1.msra.mxu0 0.0
      %1513 = vmatprep.subr.mxu0 0.0
      %1514 = vmatpush1.msra.mxu0 0.0
      %1515 = vmatprep.subr.mxu0 0.0
      %1516 = vmatpush1.msra.mxu0 0.0
      %1517 = vmatprep.subr.mxu0 0.0
      %1518 = vmatpush1.msra.mxu0 0.0
      %1519 = vmatprep.subr.mxu0 0.0
      %1520 = vmatpush1.msra.mxu0 0.0
      %1521 = vmatprep.subr.mxu0 0.0
      %1522 = vmatpush1.msra.mxu0 0.0
      %1523 = vmatprep.subr.mxu0 0.0
      %1524 = vmatpush1.msra.mxu0 0.0
      %1525 = vmatprep.subr.mxu0 0.0
      %1526 = vmatpush1.msra.mxu0 0.0
      %1527 = vmatprep.subr.mxu0 0.0
      %1528 = vmatpush1.msra.mxu0 0.0
      %1529 = vmatprep.subr.mxu0 0.0
      %1530 = vmatpush1.msra.mxu0 0.0
      %1531 = vmatprep.subr.mxu0 0.0
      %1532 = vmatpush1.msra.mxu0 0.0
      %1533 = vmatprep.subr.mxu0 0.0
      %1534 = vmatpush1.msra.mxu0 0.0
      %1535 = vmatprep.subr.mxu0 0.0
      %1536 = vmatpush1.msra.mxu0 0.0
      %1537 = vmatprep.subr.mxu0 0.0
      %1538 = vmatpush1.msra.mxu0 0.0
      %1539 = vmatprep.subr.mxu0 0.0
      %1540 = vmatpush1.msra.mxu0 0.0
      %1541 = vmatprep.subr.mxu0 0.0
      %1542 = vmatpush1.msra.mxu0 0.0
      %1543 = vmatprep.subr.mxu0 0.0
      %1544 = vmatpush1.msra.mxu0 0.0
      %1545 = vmatprep.subr.mxu0 0.0
      %1546 = vmatpush1.msra.mxu0 0.0
      %1547 = vmatprep.subr.mxu0 0.0
      %1548 = vmatpush1.msra.mxu0 0.0
      %1549 = vmatprep.subr.mxu0 0.0
      %1550 = vmatpush1.msra.mxu0 0.0
      %1551 = vmatprep.subr.mxu0 0.0
      %1552 = vmatpush1.msra.mxu0 0.0
      %1553 = vmatprep.subr.mxu0 0.0
      %1554 = vmatpush1.msra.mxu0 0.0
      %1555 = vmatprep.subr.mxu0 0.0
      %1556 = vmatpush1.msra.mxu0 0.0
      %1557 = vmatprep.mubr.f32.mxu0 0.0
      %1558 = vmatmul.mubr.f32.gmra.mrb[0].mxu0 %v1491
      %v1559 = vpop.f32.mrb[0].mxu0
      %v1560 = vadd.f32 %v1487, %v1559
      %v1561 = vpop.f32.mrb[0].mxu0
      %1562 = vdwg.mxu0
      %s1563 = scalar_lea.vmem %s2, 64
      %v1564 = vld [vmem:[%s1563] sm:$0xff]
      %v1565 = vld [vmem:[%s1563 + $0x8] sm:$0xff]
      %v1566 = vld [vmem:[%s1563 + $0x10] sm:$0xff]
      %v1567 = vld [vmem:[%s1563 + $0x18] sm:$0xff]
      %s1568 = scalar_lea.vmem %s3, 2
      %v1569 = vld [vmem:[%s1568] sm:$0x1]
      %v1571 = vlaneseq
      %v1572 = vshrl.u32 %v1571, 7
      %v1573 = vsub.s32 0, %v1572
      %v1574 = vrot.slane %v1569, %v1573
      %1576 = vmatprep.subr.mxu0 0.0
      %1577 = vmatpush1.msra.mxu0 %v1564
      %1578 = vmatprep.subr.mxu0 0.0
      %1579 = vmatpush1.msra.mxu0 %v1565
      %1580 = vmatprep.subr.mxu0 0.0
      %1581 = vmatpush1.msra.mxu0 %v1566
      %1582 = vmatprep.subr.mxu0 0.0
      %1583 = vmatpush1.msra.mxu0 %v1567
      %1584 = vmatprep.subr.mxu0 0.0
      %1585 = vmatpush1.msra.mxu0 0.0
      %1586 = vmatprep.subr.mxu0 0.0
      %1587 = vmatpush1.msra.mxu0 0.0
      %1588 = vmatprep.subr.mxu0 0.0
      %1589 = vmatpush1.msra.mxu0 0.0
      %1590 = vmatprep.subr.mxu0 0.0
      %1591 = vmatpush1.msra.mxu0 0.0
      %1592 = vmatprep.subr.mxu0 0.0
      %1593 = vmatpush1.msra.mxu0 0.0
      %1594 = vmatprep.subr.mxu0 0.0
      %1595 = vmatpush1.msra.mxu0 0.0
      %1596 = vmatprep.subr.mxu0 0.0
      %1597 = vmatpush1.msra.mxu0 0.0
      %1598 = vmatprep.subr.mxu0 0.0
      %1599 = vmatpush1.msra.mxu0 0.0
      %1600 = vmatprep.subr.mxu0 0.0
      %1601 = vmatpush1.msra.mxu0 0.0
      %1602 = vmatprep.subr.mxu0 0.0
      %1603 = vmatpush1.msra.mxu0 0.0
      %1604 = vmatprep.subr.mxu0 0.0
      %1605 = vmatpush1.msra.mxu0 0.0
      %1606 = vmatprep.subr.mxu0 0.0
      %1607 = vmatpush1.msra.mxu0 0.0
      %1608 = vmatprep.subr.mxu0 0.0
      %1609 = vmatpush1.msra.mxu0 0.0
      %1610 = vmatprep.subr.mxu0 0.0
      %1611 = vmatpush1.msra.mxu0 0.0
      %1612 = vmatprep.subr.mxu0 0.0
      %1613 = vmatpush1.msra.mxu0 0.0
      %1614 = vmatprep.subr.mxu0 0.0
      %1615 = vmatpush1.msra.mxu0 0.0
      %1616 = vmatprep.subr.mxu0 0.0
      %1617 = vmatpush1.msra.mxu0 0.0
      %1618 = vmatprep.subr.mxu0 0.0
      %1619 = vmatpush1.msra.mxu0 0.0
      %1620 = vmatprep.subr.mxu0 0.0
      %1621 = vmatpush1.msra.mxu0 0.0
      %1622 = vmatprep.subr.mxu0 0.0
      %1623 = vmatpush1.msra.mxu0 0.0
      %1624 = vmatprep.subr.mxu0 0.0
      %1625 = vmatpush1.msra.mxu0 0.0
      %1626 = vmatprep.subr.mxu0 0.0
      %1627 = vmatpush1.msra.mxu0 0.0
      %1628 = vmatprep.subr.mxu0 0.0
      %1629 = vmatpush1.msra.mxu0 0.0
      %1630 = vmatprep.subr.mxu0 0.0
      %1631 = vmatpush1.msra.mxu0 0.0
      %1632 = vmatprep.subr.mxu0 0.0
      %1633 = vmatpush1.msra.mxu0 0.0
      %1634 = vmatprep.subr.mxu0 0.0
      %1635 = vmatpush1.msra.mxu0 0.0
      %1636 = vmatprep.subr.mxu0 0.0
      %1637 = vmatpush1.msra.mxu0 0.0
      %1638 = vmatprep.subr.mxu0 0.0
      %1639 = vmatpush1.msra.mxu0 0.0
      %1640 = vmatprep.mubr.f32.mxu0 0.0
      %1641 = vmatmul.mubr.f32.gmra.mrb[0].mxu0 %v600
      %v1642 = vpop.f32.mrb[0].mxu0
      %v1643 = vadd.f32 %v1574, %v1642
      %v1644 = vpop.f32.mrb[0].mxu0
      %1645 = vdwg.mxu0
      %s1646 = scalar_lea.vmem %s4, 64
      %v1647 = vld [vmem:[%s1646] sm:$0xff]
      %v1648 = vld [vmem:[%s1646 + $0x8] sm:$0xff]
      %v1649 = vld [vmem:[%s1646 + $0x10] sm:$0xff]
      %v1650 = vld [vmem:[%s1646 + $0x18] sm:$0xff]
      %s1651 = scalar_lea.vmem %s5, 2
      %v1652 = vld [vmem:[%s1651] sm:$0x1]
      %v1654 = vlaneseq
      %v1655 = vshrl.u32 %v1654, 7
      %v1656 = vsub.s32 0, %v1655
      %v1657 = vrot.slane %v1652, %v1656
      %1659 = vmatprep.subr.mxu0 0.0
      %1660 = vmatpush1.msra.mxu0 %v1647
      %1661 = vmatprep.subr.mxu0 0.0
      %1662 = vmatpush1.msra.mxu0 %v1648
      %1663 = vmatprep.subr.mxu0 0.0
      %1664 = vmatpush1.msra.mxu0 %v1649
      %1665 = vmatprep.subr.mxu0 0.0
      %1666 = vmatpush1.msra.mxu0 %v1650
      %1667 = vmatprep.subr.mxu0 0.0
      %1668 = vmatpush1.msra.mxu0 0.0
      %1669 = vmatprep.subr.mxu0 0.0
      %1670 = vmatpush1.msra.mxu0 0.0
      %1671 = vmatprep.subr.mxu0 0.0
      %1672 = vmatpush1.msra.mxu0 0.0
      %1673 = vmatprep.subr.mxu0 0.0
      %1674 = vmatpush1.msra.mxu0 0.0
      %1675 = vmatprep.subr.mxu0 0.0
      %1676 = vmatpush1.msra.mxu0 0.0
      %1677 = vmatprep.subr.mxu0 0.0
      %1678 = vmatpush1.msra.mxu0 0.0
      %1679 = vmatprep.subr.mxu0 0.0
      %1680 = vmatpush1.msra.mxu0 0.0
      %1681 = vmatprep.subr.mxu0 0.0
      %1682 = vmatpush1.msra.mxu0 0.0
      %1683 = vmatprep.subr.mxu0 0.0
      %1684 = vmatpush1.msra.mxu0 0.0
      %1685 = vmatprep.subr.mxu0 0.0
      %1686 = vmatpush1.msra.mxu0 0.0
      %1687 = vmatprep.subr.mxu0 0.0
      %1688 = vmatpush1.msra.mxu0 0.0
      %1689 = vmatprep.subr.mxu0 0.0
      %1690 = vmatpush1.msra.mxu0 0.0
      %1691 = vmatprep.subr.mxu0 0.0
      %1692 = vmatpush1.msra.mxu0 0.0
      %1693 = vmatprep.subr.mxu0 0.0
      %1694 = vmatpush1.msra.mxu0 0.0
      %1695 = vmatprep.subr.mxu0 0.0
      %1696 = vmatpush1.msra.mxu0 0.0
      %1697 = vmatprep.subr.mxu0 0.0
      %1698 = vmatpush1.msra.mxu0 0.0
      %1699 = vmatprep.subr.mxu0 0.0
      %1700 = vmatpush1.msra.mxu0 0.0
      %1701 = vmatprep.subr.mxu0 0.0
      %1702 = vmatpush1.msra.mxu0 0.0
      %1703 = vmatprep.subr.mxu0 0.0
      %1704 = vmatpush1.msra.mxu0 0.0
      %1705 = vmatprep.subr.mxu0 0.0
      %1706 = vmatpush1.msra.mxu0 0.0
      %1707 = vmatprep.subr.mxu0 0.0
      %1708 = vmatpush1.msra.mxu0 0.0
      %1709 = vmatprep.subr.mxu0 0.0
      %1710 = vmatpush1.msra.mxu0 0.0
      %1711 = vmatprep.subr.mxu0 0.0
      %1712 = vmatpush1.msra.mxu0 0.0
      %1713 = vmatprep.subr.mxu0 0.0
      %1714 = vmatpush1.msra.mxu0 0.0
      %1715 = vmatprep.subr.mxu0 0.0
      %1716 = vmatpush1.msra.mxu0 0.0
      %1717 = vmatprep.subr.mxu0 0.0
      %1718 = vmatpush1.msra.mxu0 0.0
      %1719 = vmatprep.subr.mxu0 0.0
      %1720 = vmatpush1.msra.mxu0 0.0
      %1721 = vmatprep.subr.mxu0 0.0
      %1722 = vmatpush1.msra.mxu0 0.0
      %1723 = vmatprep.mubr.f32.mxu0 0.0
      %1724 = vmatmul.mubr.f32.gmra.mrb[0].mxu0 %v600
      %v1725 = vpop.f32.mrb[0].mxu0
      %v1726 = vadd.f32 %v1657, %v1725
      %v1727 = vpop.f32.mrb[0].mxu0
      %1728 = vdwg.mxu0
      %s1729 = scalar_lea.vmem %s6, 64
      %v1730 = vld [vmem:[%s1729] sm:$0xff]
      %v1731 = vld [vmem:[%s1729 + $0x8] sm:$0xff]
      %v1732 = vld [vmem:[%s1729 + $0x10] sm:$0xff]
      %v1733 = vld [vmem:[%s1729 + $0x18] sm:$0xff]
      %s1734 = scalar_lea.vmem %s7, 2
      %v1735 = vld [vmem:[%s1734] sm:$0x1]
      %v1737 = vlaneseq
      %v1738 = vshrl.u32 %v1737, 7
      %v1739 = vsub.s32 0, %v1738
      %v1740 = vrot.slane %v1735, %v1739
      %1742 = vmatprep.subr.mxu0 0.0
      %1743 = vmatpush1.msra.mxu0 %v1730
      %1744 = vmatprep.subr.mxu0 0.0
      %1745 = vmatpush1.msra.mxu0 %v1731
      %1746 = vmatprep.subr.mxu0 0.0
      %1747 = vmatpush1.msra.mxu0 %v1732
      %1748 = vmatprep.subr.mxu0 0.0
      %1749 = vmatpush1.msra.mxu0 %v1733
      %1750 = vmatprep.subr.mxu0 0.0
      %1751 = vmatpush1.msra.mxu0 0.0
      %1752 = vmatprep.subr.mxu0 0.0
      %1753 = vmatpush1.msra.mxu0 0.0
      %1754 = vmatprep.subr.mxu0 0.0
      %1755 = vmatpush1.msra.mxu0 0.0
      %1756 = vmatprep.subr.mxu0 0.0
      %1757 = vmatpush1.msra.mxu0 0.0
      %1758 = vmatprep.subr.mxu0 0.0
      %1759 = vmatpush1.msra.mxu0 0.0
      %1760 = vmatprep.subr.mxu0 0.0
      %1761 = vmatpush1.msra.mxu0 0.0
      %1762 = vmatprep.subr.mxu0 0.0
      %1763 = vmatpush1.msra.mxu0 0.0
      %1764 = vmatprep.subr.mxu0 0.0
      %1765 = vmatpush1.msra.mxu0 0.0
      %1766 = vmatprep.subr.mxu0 0.0
      %1767 = vmatpush1.msra.mxu0 0.0
      %1768 = vmatprep.subr.mxu0 0.0
      %1769 = vmatpush1.msra.mxu0 0.0
      %1770 = vmatprep.subr.mxu0 0.0
      %1771 = vmatpush1.msra.mxu0 0.0
      %1772 = vmatprep.subr.mxu0 0.0
      %1773 = vmatpush1.msra.mxu0 0.0
      %1774 = vmatprep.subr.mxu0 0.0
      %1775 = vmatpush1.msra.mxu0 0.0
      %1776 = vmatprep.subr.mxu0 0.0
      %1777 = vmatpush1.msra.mxu0 0.0
      %1778 = vmatprep.subr.mxu0 0.0
      %1779 = vmatpush1.msra.mxu0 0.0
      %1780 = vmatprep.subr.mxu0 0.0
      %1781 = vmatpush1.msra.mxu0 0.0
      %1782 = vmatprep.subr.mxu0 0.0
      %1783 = vmatpush1.msra.mxu0 0.0
      %1784 = vmatprep.subr.mxu0 0.0
      %1785 = vmatpush1.msra.mxu0 0.0
      %1786 = vmatprep.subr.mxu0 0.0
      %1787 = vmatpush1.msra.mxu0 0.0
      %1788 = vmatprep.subr.mxu0 0.0
      %1789 = vmatpush1.msra.mxu0 0.0
      %1790 = vmatprep.subr.mxu0 0.0
      %1791 = vmatpush1.msra.mxu0 0.0
      %1792 = vmatprep.subr.mxu0 0.0
      %1793 = vmatpush1.msra.mxu0 0.0
      %1794 = vmatprep.subr.mxu0 0.0
      %1795 = vmatpush1.msra.mxu0 0.0
      %1796 = vmatprep.subr.mxu0 0.0
      %1797 = vmatpush1.msra.mxu0 0.0
      %1798 = vmatprep.subr.mxu0 0.0
      %1799 = vmatpush1.msra.mxu0 0.0
      %1800 = vmatprep.subr.mxu0 0.0
      %1801 = vmatpush1.msra.mxu0 0.0
      %1802 = vmatprep.subr.mxu0 0.0
      %1803 = vmatpush1.msra.mxu0 0.0
      %1804 = vmatprep.subr.mxu0 0.0
      %1805 = vmatpush1.msra.mxu0 0.0
      %1806 = vmatprep.mubr.f32.mxu0 0.0
      %1807 = vmatmul.mubr.f32.gmra.mrb[0].mxu0 %v600
      %v1808 = vpop.f32.mrb[0].mxu0
      %v1809 = vadd.f32 %v1740, %v1808
      %v1810 = vpop.f32.mrb[0].mxu0
      %1811 = vdwg.mxu0
      %v1813 = vsel %vm834, %v1643, 0
      %v1816 = vsel %vm834, %v1726, 0
      %1818 = vmatprep.subr.mxu0 0.0
      %1819 = vmatpush1.xpose.msra.mxu0 %v1816
      %1820 = vmatprep.subr.mxu0 0.0
      %1821 = vmatpush1.xpose.msra.mxu0 0.0
      %1822 = vmatprep.subr.mxu0 0.0
      %1823 = vmatpush1.xpose.msra.mxu0 0.0
      %1824 = vmatprep.subr.mxu0 0.0
      %1825 = vmatpush1.xpose.msra.mxu0 0.0
      %1826 = vmatprep.subr.mxu0 0.0
      %1827 = vmatpush1.xpose.msra.mxu0 0.0
      %1828 = vmatprep.subr.mxu0 0.0
      %1829 = vmatpush1.xpose.msra.mxu0 0.0
      %1830 = vmatprep.subr.mxu0 0.0
      %1831 = vmatpush1.xpose.msra.mxu0 0.0
      %1832 = vmatprep.subr.mxu0 0.0
      %1833 = vmatpush1.xpose.msra.mxu0 0.0
      %1834 = vmatprep.subr.mxu0 0.0
      %1835 = vmatpush1.xpose.msra.mxu0 0.0
      %1836 = vmatprep.subr.mxu0 0.0
      %1837 = vmatpush1.xpose.msra.mxu0 0.0
      %1838 = vmatprep.subr.mxu0 0.0
      %1839 = vmatpush1.xpose.msra.mxu0 0.0
      %1840 = vmatprep.subr.mxu0 0.0
      %1841 = vmatpush1.xpose.msra.mxu0 0.0
      %1842 = vmatprep.subr.mxu0 0.0
      %1843 = vmatpush1.xpose.msra.mxu0 0.0
      %1844 = vmatprep.subr.mxu0 0.0
      %1845 = vmatpush1.xpose.msra.mxu0 0.0
      %1846 = vmatprep.subr.mxu0 0.0
      %1847 = vmatpush1.xpose.msra.mxu0 0.0
      %1848 = vmatprep.subr.mxu0 0.0
      %1849 = vmatpush1.xpose.msra.mxu0 0.0
      %1850 = vmatprep.subr.mxu0 0.0
      %1851 = vmatpush1.xpose.msra.mxu0 0.0
      %1852 = vmatprep.subr.mxu0 0.0
      %1853 = vmatpush1.xpose.msra.mxu0 0.0
      %1854 = vmatprep.subr.mxu0 0.0
      %1855 = vmatpush1.xpose.msra.mxu0 0.0
      %1856 = vmatprep.subr.mxu0 0.0
      %1857 = vmatpush1.xpose.msra.mxu0 0.0
      %1858 = vmatprep.subr.mxu0 0.0
      %1859 = vmatpush1.xpose.msra.mxu0 0.0
      %1860 = vmatprep.subr.mxu0 0.0
      %1861 = vmatpush1.xpose.msra.mxu0 0.0
      %1862 = vmatprep.subr.mxu0 0.0
      %1863 = vmatpush1.xpose.msra.mxu0 0.0
      %1864 = vmatprep.subr.mxu0 0.0
      %1865 = vmatpush1.xpose.msra.mxu0 0.0
      %1866 = vmatprep.subr.mxu0 0.0
      %1867 = vmatpush1.xpose.msra.mxu0 0.0
      %1868 = vmatprep.subr.mxu0 0.0
      %1869 = vmatpush1.xpose.msra.mxu0 0.0
      %1870 = vmatprep.subr.mxu0 0.0
      %1871 = vmatpush1.xpose.msra.mxu0 0.0
      %1872 = vmatprep.subr.mxu0 0.0
      %1873 = vmatpush1.xpose.msra.mxu0 0.0
      %1874 = vmatprep.subr.mxu0 0.0
      %1875 = vmatpush1.xpose.msra.mxu0 0.0
      %1876 = vmatprep.subr.mxu0 0.0
      %1877 = vmatpush1.xpose.msra.mxu0 0.0
      %1878 = vmatprep.subr.mxu0 0.0
      %1879 = vmatpush1.xpose.msra.mxu0 0.0
      %1880 = vmatprep.subr.mxu0 0.0
      %1881 = vmatpush1.xpose.msra.mxu0 0.0
      %1882 = vmatprep.mubr.f32.mxu0 0.0
      %1883 = vmatmul.mubr.f32.gmra.mrb[0].mxu0 %v1813
      %v1884 = vpop.f32.mrb[0].mxu0
      %v1885 = vadd.f32 0.0, %v1884
      %v1886 = vpop.f32.mrb[0].mxu0
      %1887 = vdwg.mxu0
      %v1888 = vmul.f32 %v1885, 0.35355338
      %v1889 = vadd.f32 %v1888, %v916
      %v1890 = vsel %vm834, %v1889, -inf
      %1891 = vmax.xlane.f32.xlu0 %v1890
      %v1892 = vpop.xlane.xlu0 %1891
      %v1893 = vsub.f32 %v1889, %v1892
      %v1894 = vmul.f32 %v1893, 1.442695
      %v1895 = vpow.pop %v1894
      %v1896 = vsel %vm834, %v1895, 0.0
      %1897 = vadd.xlane.f32.xlu0 %v1896
      %v1898 = vpop.xlane.xlu0 %1897
      %v1899 = vrcp.pop %v1898
      %v1900 = vmul.f32 %v1895, %v1899
      %v1902 = vsel %vm834, %v1900, 0
      %1904 = vmatprep.subr.mxu0 0.0
      %1905 = vmatpush1.msra.mxu0 %v1809
      %1906 = vmatprep.subr.mxu0 0.0
      %1907 = vmatpush1.msra.mxu0 0.0
      %1908 = vmatprep.subr.mxu0 0.0
      %1909 = vmatpush1.msra.mxu0 0.0
      %1910 = vmatprep.subr.mxu0 0.0
      %1911 = vmatpush1.msra.mxu0 0.0
      %1912 = vmatprep.subr.mxu0 0.0
      %1913 = vmatpush1.msra.mxu0 0.0
      %1914 = vmatprep.subr.mxu0 0.0
      %1915 = vmatpush1.msra.mxu0 0.0
      %1916 = vmatprep.subr.mxu0 0.0
      %1917 = vmatpush1.msra.mxu0 0.0
      %1918 = vmatprep.subr.mxu0 0.0
      %1919 = vmatpush1.msra.mxu0 0.0
      %1920 = vmatprep.subr.mxu0 0.0
      %1921 = vmatpush1.msra.mxu0 0.0
      %1922 = vmatprep.subr.mxu0 0.0
      %1923 = vmatpush1.msra.mxu0 0.0
      %1924 = vmatprep.subr.mxu0 0.0
      %1925 = vmatpush1.msra.mxu0 0.0
      %1926 = vmatprep.subr.mxu0 0.0
      %1927 = vmatpush1.msra.mxu0 0.0
      %1928 = vmatprep.subr.mxu0 0.0
      %1929 = vmatpush1.msra.mxu0 0.0
      %1930 = vmatprep.subr.mxu0 0.0
      %1931 = vmatpush1.msra.mxu0 0.0
      %1932 = vmatprep.subr.mxu0 0.0
      %1933 = vmatpush1.msra.mxu0 0.0
      %1934 = vmatprep.subr.mxu0 0.0
      %1935 = vmatpush1.msra.mxu0 0.0
      %1936 = vmatprep.subr.mxu0 0.0
      %1937 = vmatpush1.msra.mxu0 0.0
      %1938 = vmatprep.subr.mxu0 0.0
      %1939 = vmatpush1.msra.mxu0 0.0
      %1940 = vmatprep.subr.mxu0 0.0
      %1941 = vmatpush1.msra.mxu0 0.0
      %1942 = vmatprep.subr.mxu0 0.0
      %1943 = vmatpush1.msra.mxu0 0.0
      %1944 = vmatprep.subr.mxu0 0.0
      %1945 = vmatpush1.msra.mxu0 0.0
      %1946 = vmatprep.subr.mxu0 0.0
      %1947 = vmatpush1.msra.mxu0 0.0
      %1948 = vmatprep.subr.mxu0 0.0
      %1949 = vmatpush1.msra.mxu0 0.0
      %1950 = vmatprep.subr.mxu0 0.0
      %1951 = vmatpush1.msra.mxu0 0.0
      %1952 = vmatprep.subr.mxu0 0.0
      %1953 = vmatpush1.msra.mxu0 0.0
      %1954 = vmatprep.subr.mxu0 0.0
      %1955 = vmatpush1.msra.mxu0 0.0
      %1956 = vmatprep.subr.mxu0 0.0
      %1957 = vmatpush1.msra.mxu0 0.0
      %1958 = vmatprep.subr.mxu0 0.0
      %1959 = vmatpush1.msra.mxu0 0.0
      %1960 = vmatprep.subr.mxu0 0.0
      %1961 = vmatpush1.msra.mxu0 0.0
      %1962 = vmatprep.subr.mxu0 0.0
      %1963 = vmatpush1.msra.mxu0 0.0
      %1964 = vmatprep.subr.mxu0 0.0
      %1965 = vmatpush1.msra.mxu0 0.0
      %1966 = vmatprep.subr.mxu0 0.0
      %1967 = vmatpush1.msra.mxu0 0.0
      %1968 = vmatprep.mubr.f32.mxu0 0.0
      %1969 = vmatmul.mubr.f32.gmra.mrb[0].mxu0 %v1902
      %v1970 = vpop.f32.mrb[0].mxu0
      %v1971 = vadd.f32 0.0, %v1970
      %v1972 = vpop.f32.mrb[0].mxu0
      %1973 = vdwg.mxu0
      %s1974 = scalar_lea.vmem %s8, 16
      %v1975 = vld [vmem:[%s1974] sm:$0xff]
      %v1977 = vsel %vm834, %v1971, 0
      %1979 = vmatprep.subr.mxu0 0.0
      %1980 = vmatpush1.msra.mxu0 %v1975
      %1981 = vmatprep.subr.mxu0 0.0
      %1982 = vmatpush1.msra.mxu0 0.0
      %1983 = vmatprep.subr.mxu0 0.0
      %1984 = vmatpush1.msra.mxu0 0.0
      %1985 = vmatprep.subr.mxu0 0.0
      %1986 = vmatpush1.msra.mxu0 0.0
      %1987 = vmatprep.subr.mxu0 0.0
      %1988 = vmatpush1.msra.mxu0 0.0
      %1989 = vmatprep.subr.mxu0 0.0
      %1990 = vmatpush1.msra.mxu0 0.0
      %1991 = vmatprep.subr.mxu0 0.0
      %1992 = vmatpush1.msra.mxu0 0.0
      %1993 = vmatprep.subr.mxu0 0.0
      %1994 = vmatpush1.msra.mxu0 0.0
      %1995 = vmatprep.subr.mxu0 0.0
      %1996 = vmatpush1.msra.mxu0 0.0
      %1997 = vmatprep.subr.mxu0 0.0
      %1998 = vmatpush1.msra.mxu0 0.0
      %1999 = vmatprep.subr.mxu0 0.0
      %2000 = vmatpush1.msra.mxu0 0.0
      %2001 = vmatprep.subr.mxu0 0.0
      %2002 = vmatpush1.msra.mxu0 0.0
      %2003 = vmatprep.subr.mxu0 0.0
      %2004 = vmatpush1.msra.mxu0 0.0
      %2005 = vmatprep.subr.mxu0 0.0
      %2006 = vmatpush1.msra.mxu0 0.0
      %2007 = vmatprep.subr.mxu0 0.0
      %2008 = vmatpush1.msra.mxu0 0.0
      %2009 = vmatprep.subr.mxu0 0.0
      %2010 = vmatpush1.msra.mxu0 0.0
      %2011 = vmatprep.subr.mxu0 0.0
      %2012 = vmatpush1.msra.mxu0 0.0
      %2013 = vmatprep.subr.mxu0 0.0
      %2014 = vmatpush1.msra.mxu0 0.0
      %2015 = vmatprep.subr.mxu0 0.0
      %2016 = vmatpush1.msra.mxu0 0.0
      %2017 = vmatprep.subr.mxu0 0.0
      %2018 = vmatpush1.msra.mxu0 0.0
      %2019 = vmatprep.subr.mxu0 0.0
      %2020 = vmatpush1.msra.mxu0 0.0
      %2021 = vmatprep.subr.mxu0 0.0
      %2022 = vmatpush1.msra.mxu0 0.0
      %2023 = vmatprep.subr.mxu0 0.0
      %2024 = vmatpush1.msra.mxu0 0.0
      %2025 = vmatprep.subr.mxu0 0.0
      %2026 = vmatpush1.msra.mxu0 0.0
      %2027 = vmatprep.subr.mxu0 0.0
      %2028 = vmatpush1.msra.mxu0 0.0
      %2029 = vmatprep.subr.mxu0 0.0
      %2030 = vmatpush1.msra.mxu0 0.0
      %2031 = vmatprep.subr.mxu0 0.0
      %2032 = vmatpush1.msra.mxu0 0.0
      %2033 = vmatprep.subr.mxu0 0.0
      %2034 = vmatpush1.msra.mxu0 0.0
      %2035 = vmatprep.subr.mxu0 0.0
      %2036 = vmatpush1.msra.mxu0 0.0
      %2037 = vmatprep.subr.mxu0 0.0
      %2038 = vmatpush1.msra.mxu0 0.0
      %2039 = vmatprep.subr.mxu0 0.0
      %2040 = vmatpush1.msra.mxu0 0.0
      %2041 = vmatprep.subr.mxu0 0.0
      %2042 = vmatpush1.msra.mxu0 0.0
      %2043 = vmatprep.mubr.f32.mxu0 0.0
      %2044 = vmatmul.mubr.f32.gmra.mrb[0].mxu0 %v1977
      %v2045 = vpop.f32.mrb[0].mxu0
      %v2046 = vadd.f32 0.0, %v2045
      %v2047 = vpop.f32.mrb[0].mxu0
      %2048 = vdwg.mxu0
      %v2049 = vadd.f32 %v1560, %v2046
      %s2050 = scalar_lea.vmem %s2, 96
      %v2051 = vld [vmem:[%s2050] sm:$0xff]
      %v2052 = vld [vmem:[%s2050 + $0x8] sm:$0xff]
      %v2053 = vld [vmem:[%s2050 + $0x10] sm:$0xff]
      %v2054 = vld [vmem:[%s2050 + $0x18] sm:$0xff]
      %s2055 = scalar_lea.vmem %s3, 3
      %v2056 = vld [vmem:[%s2055] sm:$0x1]
      %v2058 = vlaneseq
      %v2059 = vshrl.u32 %v2058, 7
      %v2060 = vsub.s32 0, %v2059
      %v2061 = vrot.slane %v2056, %v2060
      %2063 = vmatprep.subr.mxu0 0.0
      %2064 = vmatpush1.msra.mxu0 %v2051
      %2065 = vmatprep.subr.mxu0 0.0
      %2066 = vmatpush1.msra.mxu0 %v2052
      %2067 = vmatprep.subr.mxu0 0.0
      %2068 = vmatpush1.msra.mxu0 %v2053
      %2069 = vmatprep.subr.mxu0 0.0
      %2070 = vmatpush1.msra.mxu0 %v2054
      %2071 = vmatprep.subr.mxu0 0.0
      %2072 = vmatpush1.msra.mxu0 0.0
      %2073 = vmatprep.subr.mxu0 0.0
      %2074 = vmatpush1.msra.mxu0 0.0
      %2075 = vmatprep.subr.mxu0 0.0
      %2076 = vmatpush1.msra.mxu0 0.0
      %2077 = vmatprep.subr.mxu0 0.0
      %2078 = vmatpush1.msra.mxu0 0.0
      %2079 = vmatprep.subr.mxu0 0.0
      %2080 = vmatpush1.msra.mxu0 0.0
      %2081 = vmatprep.subr.mxu0 0.0
      %2082 = vmatpush1.msra.mxu0 0.0
      %2083 = vmatprep.subr.mxu0 0.0
      %2084 = vmatpush1.msra.mxu0 0.0
      %2085 = vmatprep.subr.mxu0 0.0
      %2086 = vmatpush1.msra.mxu0 0.0
      %2087 = vmatprep.subr.mxu0 0.0
      %2088 = vmatpush1.msra.mxu0 0.0
      %2089 = vmatprep.subr.mxu0 0.0
      %2090 = vmatpush1.msra.mxu0 0.0
      %2091 = vmatprep.subr.mxu0 0.0
      %2092 = vmatpush1.msra.mxu0 0.0
      %2093 = vmatprep.subr.mxu0 0.0
      %2094 = vmatpush1.msra.mxu0 0.0
      %2095 = vmatprep.subr.mxu0 0.0
      %2096 = vmatpush1.msra.mxu0 0.0
      %2097 = vmatprep.subr.mxu0 0.0
      %2098 = vmatpush1.msra.mxu0 0.0
      %2099 = vmatprep.subr.mxu0 0.0
      %2100 = vmatpush1.msra.mxu0 0.0
      %2101 = vmatprep.subr.mxu0 0.0
      %2102 = vmatpush1.msra.mxu0 0.0
      %2103 = vmatprep.subr.mxu0 0.0
      %2104 = vmatpush1.msra.mxu0 0.0
      %2105 = vmatprep.subr.mxu0 0.0
      %2106 = vmatpush1.msra.mxu0 0.0
      %2107 = vmatprep.subr.mxu0 0.0
      %2108 = vmatpush1.msra.mxu0 0.0
      %2109 = vmatprep.subr.mxu0 0.0
      %2110 = vmatpush1.msra.mxu0 0.0
      %2111 = vmatprep.subr.mxu0 0.0
      %2112 = vmatpush1.msra.mxu0 0.0
      %2113 = vmatprep.subr.mxu0 0.0
      %2114 = vmatpush1.msra.mxu0 0.0
      %2115 = vmatprep.subr.mxu0 0.0
      %2116 = vmatpush1.msra.mxu0 0.0
      %2117 = vmatprep.subr.mxu0 0.0
      %2118 = vmatpush1.msra.mxu0 0.0
      %2119 = vmatprep.subr.mxu0 0.0
      %2120 = vmatpush1.msra.mxu0 0.0
      %2121 = vmatprep.subr.mxu0 0.0
      %2122 = vmatpush1.msra.mxu0 0.0
      %2123 = vmatprep.subr.mxu0 0.0
      %2124 = vmatpush1.msra.mxu0 0.0
      %2125 = vmatprep.subr.mxu0 0.0
      %2126 = vmatpush1.msra.mxu0 0.0
      %2127 = vmatprep.mubr.f32.mxu0 0.0
      %2128 = vmatmul.mubr.f32.gmra.mrb[0].mxu0 %v600
      %v2129 = vpop.f32.mrb[0].mxu0
      %v2130 = vadd.f32 %v2061, %v2129
      %v2131 = vpop.f32.mrb[0].mxu0
      %2132 = vdwg.mxu0
      %s2133 = scalar_lea.vmem %s4, 96
      %v2134 = vld [vmem:[%s2133] sm:$0xff]
      %v2135 = vld [vmem:[%s2133 + $0x8] sm:$0xff]
      %v2136 = vld [vmem:[%s2133 + $0x10] sm:$0xff]
      %v2137 = vld [vmem:[%s2133 + $0x18] sm:$0xff]
      %s2138 = scalar_lea.vmem %s5, 3
      %v2139 = vld [vmem:[%s2138] sm:$0x1]
      %v2141 = vlaneseq
      %v2142 = vshrl.u32 %v2141, 7
      %v2143 = vsub.s32 0, %v2142
      %v2144 = vrot.slane %v2139, %v2143
      %2146 = vmatprep.subr.mxu0 0.0
      %2147 = vmatpush1.msra.mxu0 %v2134
      %2148 = vmatprep.subr.mxu0 0.0
      %2149 = vmatpush1.msra.mxu0 %v2135
      %2150 = vmatprep.subr.mxu0 0.0
      %2151 = vmatpush1.msra.mxu0 %v2136
      %2152 = vmatprep.subr.mxu0 0.0
      %2153 = vmatpush1.msra.mxu0 %v2137
      %2154 = vmatprep.subr.mxu0 0.0
      %2155 = vmatpush1.msra.mxu0 0.0
      %2156 = vmatprep.subr.mxu0 0.0
      %2157 = vmatpush1.msra.mxu0 0.0
      %2158 = vmatprep.subr.mxu0 0.0
      %2159 = vmatpush1.msra.mxu0 0.0
      %2160 = vmatprep.subr.mxu0 0.0
      %2161 = vmatpush1.msra.mxu0 0.0
      %2162 = vmatprep.subr.mxu0 0.0
      %2163 = vmatpush1.msra.mxu0 0.0
      %2164 = vmatprep.subr.mxu0 0.0
      %2165 = vmatpush1.msra.mxu0 0.0
      %2166 = vmatprep.subr.mxu0 0.0
      %2167 = vmatpush1.msra.mxu0 0.0
      %2168 = vmatprep.subr.mxu0 0.0
      %2169 = vmatpush1.msra.mxu0 0.0
      %2170 = vmatprep.subr.mxu0 0.0
      %2171 = vmatpush1.msra.mxu0 0.0
      %2172 = vmatprep.subr.mxu0 0.0
      %2173 = vmatpush1.msra.mxu0 0.0
      %2174 = vmatprep.subr.mxu0 0.0
      %2175 = vmatpush1.msra.mxu0 0.0
      %2176 = vmatprep.subr.mxu0 0.0
      %2177 = vmatpush1.msra.mxu0 0.0
      %2178 = vmatprep.subr.mxu0 0.0
      %2179 = vmatpush1.msra.mxu0 0.0
      %2180 = vmatprep.subr.mxu0 0.0
      %2181 = vmatpush1.msra.mxu0 0.0
      %2182 = vmatprep.subr.mxu0 0.0
      %2183 = vmatpush1.msra.mxu0 0.0
      %2184 = vmatprep.subr.mxu0 0.0
      %2185 = vmatpush1.msra.mxu0 0.0
      %2186 = vmatprep.subr.mxu0 0.0
      %2187 = vmatpush1.msra.mxu0 0.0
      %2188 = vmatprep.subr.mxu0 0.0
      %2189 = vmatpush1.msra.mxu0 0.0
      %2190 = vmatprep.subr.mxu0 0.0
      %2191 = vmatpush1.msra.mxu0 0.0
      %2192 = vmatprep.subr.mxu0 0.0
      %2193 = vmatpush1.msra.mxu0 0.0
      %2194 = vmatprep.subr.mxu0 0.0
      %2195 = vmatpush1.msra.mxu0 0.0
      %2196 = vmatprep.subr.mxu0 0.0
      %2197 = vmatpush1.msra.mxu0 0.0
      %2198 = vmatprep.subr.mxu0 0.0
      %2199 = vmatpush1.msra.mxu0 0.0
      %2200 = vmatprep.subr.mxu0 0.0
      %2201 = vmatpush1.msra.mxu0 0.0
      %2202 = vmatprep.subr.mxu0 0.0
      %2203 = vmatpush1.msra.mxu0 0.0
      %2204 = vmatprep.subr.mxu0 0.0
      %2205 = vmatpush1.msra.mxu0 0.0
      %2206 = vmatprep.subr.mxu0 0.0
      %2207 = vmatpush1.msra.mxu0 0.0
      %2208 = vmatprep.subr.mxu0 0.0
      %2209 = vmatpush1.msra.mxu0 0.0
      %2210 = vmatprep.mubr.f32.mxu0 0.0
      %2211 = vmatmul.mubr.f32.gmra.mrb[0].mxu0 %v600
      %v2212 = vpop.f32.mrb[0].mxu0
      %v2213 = vadd.f32 %v2144, %v2212
      %v2214 = vpop.f32.mrb[0].mxu0
      %2215 = vdwg.mxu0
      %s2216 = scalar_lea.vmem %s6, 96
      %v2217 = vld [vmem:[%s2216] sm:$0xff]
      %v2218 = vld [vmem:[%s2216 + $0x8] sm:$0xff]
      %v2219 = vld [vmem:[%s2216 + $0x10] sm:$0xff]
      %v2220 = vld [vmem:[%s2216 + $0x18] sm:$0xff]
      %s2221 = scalar_lea.vmem %s7, 3
      %v2222 = vld [vmem:[%s2221] sm:$0x1]
      %v2224 = vlaneseq
      %v2225 = vshrl.u32 %v2224, 7
      %v2226 = vsub.s32 0, %v2225
      %v2227 = vrot.slane %v2222, %v2226
      %2229 = vmatprep.subr.mxu0 0.0
      %2230 = vmatpush1.msra.mxu0 %v2217
      %2231 = vmatprep.subr.mxu0 0.0
      %2232 = vmatpush1.msra.mxu0 %v2218
      %2233 = vmatprep.subr.mxu0 0.0
      %2234 = vmatpush1.msra.mxu0 %v2219
      %2235 = vmatprep.subr.mxu0 0.0
      %2236 = vmatpush1.msra.mxu0 %v2220
      %2237 = vmatprep.subr.mxu0 0.0
      %2238 = vmatpush1.msra.mxu0 0.0
      %2239 = vmatprep.subr.mxu0 0.0
      %2240 = vmatpush1.msra.mxu0 0.0
      %2241 = vmatprep.subr.mxu0 0.0
      %2242 = vmatpush1.msra.mxu0 0.0
      %2243 = vmatprep.subr.mxu0 0.0
      %2244 = vmatpush1.msra.mxu0 0.0
      %2245 = vmatprep.subr.mxu0 0.0
      %2246 = vmatpush1.msra.mxu0 0.0
      %2247 = vmatprep.subr.mxu0 0.0
      %2248 = vmatpush1.msra.mxu0 0.0
      %2249 = vmatprep.subr.mxu0 0.0
      %2250 = vmatpush1.msra.mxu0 0.0
      %2251 = vmatprep.subr.mxu0 0.0
      %2252 = vmatpush1.msra.mxu0 0.0
      %2253 = vmatprep.subr.mxu0 0.0
      %2254 = vmatpush1.msra.mxu0 0.0
      %2255 = vmatprep.subr.mxu0 0.0
      %2256 = vmatpush1.msra.mxu0 0.0
      %2257 = vmatprep.subr.mxu0 0.0
      %2258 = vmatpush1.msra.mxu0 0.0
      %2259 = vmatprep.subr.mxu0 0.0
      %2260 = vmatpush1.msra.mxu0 0.0
      %2261 = vmatprep.subr.mxu0 0.0
      %2262 = vmatpush1.msra.mxu0 0.0
      %2263 = vmatprep.subr.mxu0 0.0
      %2264 = vmatpush1.msra.mxu0 0.0
      %2265 = vmatprep.subr.mxu0 0.0
      %2266 = vmatpush1.msra.mxu0 0.0
      %2267 = vmatprep.subr.mxu0 0.0
      %2268 = vmatpush1.msra.mxu0 0.0
      %2269 = vmatprep.subr.mxu0 0.0
      %2270 = vmatpush1.msra.mxu0 0.0
      %2271 = vmatprep.subr.mxu0 0.0
      %2272 = vmatpush1.msra.mxu0 0.0
      %2273 = vmatprep.subr.mxu0 0.0
      %2274 = vmatpush1.msra.mxu0 0.0
      %2275 = vmatprep.subr.mxu0 0.0
      %2276 = vmatpush1.msra.mxu0 0.0
      %2277 = vmatprep.subr.mxu0 0.0
      %2278 = vmatpush1.msra.mxu0 0.0
      %2279 = vmatprep.subr.mxu0 0.0
      %2280 = vmatpush1.msra.mxu0 0.0
      %2281 = vmatprep.subr.mxu0 0.0
      %2282 = vmatpush1.msra.mxu0 0.0
      %2283 = vmatprep.subr.mxu0 0.0
      %2284 = vmatpush1.msra.mxu0 0.0
      %2285 = vmatprep.subr.mxu0 0.0
      %2286 = vmatpush1.msra.mxu0 0.0
      %2287 = vmatprep.subr.mxu0 0.0
      %2288 = vmatpush1.msra.mxu0 0.0
      %2289 = vmatprep.subr.mxu0 0.0
      %2290 = vmatpush1.msra.mxu0 0.0
      %2291 = vmatprep.subr.mxu0 0.0
      %2292 = vmatpush1.msra.mxu0 0.0
      %2293 = vmatprep.mubr.f32.mxu0 0.0
      %2294 = vmatmul.mubr.f32.gmra.mrb[0].mxu0 %v600
      %v2295 = vpop.f32.mrb[0].mxu0
      %v2296 = vadd.f32 %v2227, %v2295
      %v2297 = vpop.f32.mrb[0].mxu0
      %2298 = vdwg.mxu0
      %v2300 = vsel %vm834, %v2130, 0
      %v2303 = vsel %vm834, %v2213, 0
      %2305 = vmatprep.subr.mxu0 0.0
      %2306 = vmatpush1.xpose.msra.mxu0 %v2303
      %2307 = vmatprep.subr.mxu0 0.0
      %2308 = vmatpush1.xpose.msra.mxu0 0.0
      %2309 = vmatprep.subr.mxu0 0.0
      %2310 = vmatpush1.xpose.msra.mxu0 0.0
      %2311 = vmatprep.subr.mxu0 0.0
      %2312 = vmatpush1.xpose.msra.mxu0 0.0
      %2313 = vmatprep.subr.mxu0 0.0
      %2314 = vmatpush1.xpose.msra.mxu0 0.0
      %2315 = vmatprep.subr.mxu0 0.0
      %2316 = vmatpush1.xpose.msra.mxu0 0.0
      %2317 = vmatprep.subr.mxu0 0.0
      %2318 = vmatpush1.xpose.msra.mxu0 0.0
      %2319 = vmatprep.subr.mxu0 0.0
      %2320 = vmatpush1.xpose.msra.mxu0 0.0
      %2321 = vmatprep.subr.mxu0 0.0
      %2322 = vmatpush1.xpose.msra.mxu0 0.0
      %2323 = vmatprep.subr.mxu0 0.0
      %2324 = vmatpush1.xpose.msra.mxu0 0.0
      %2325 = vmatprep.subr.mxu0 0.0
      %2326 = vmatpush1.xpose.msra.mxu0 0.0
      %2327 = vmatprep.subr.mxu0 0.0
      %2328 = vmatpush1.xpose.msra.mxu0 0.0
      %2329 = vmatprep.subr.mxu0 0.0
      %2330 = vmatpush1.xpose.msra.mxu0 0.0
      %2331 = vmatprep.subr.mxu0 0.0
      %2332 = vmatpush1.xpose.msra.mxu0 0.0
      %2333 = vmatprep.subr.mxu0 0.0
      %2334 = vmatpush1.xpose.msra.mxu0 0.0
      %2335 = vmatprep.subr.mxu0 0.0
      %2336 = vmatpush1.xpose.msra.mxu0 0.0
      %2337 = vmatprep.subr.mxu0 0.0
      %2338 = vmatpush1.xpose.msra.mxu0 0.0
      %2339 = vmatprep.subr.mxu0 0.0
      %2340 = vmatpush1.xpose.msra.mxu0 0.0
      %2341 = vmatprep.subr.mxu0 0.0
      %2342 = vmatpush1.xpose.msra.mxu0 0.0
      %2343 = vmatprep.subr.mxu0 0.0
      %2344 = vmatpush1.xpose.msra.mxu0 0.0
      %2345 = vmatprep.subr.mxu0 0.0
      %2346 = vmatpush1.xpose.msra.mxu0 0.0
      %2347 = vmatprep.subr.mxu0 0.0
      %2348 = vmatpush1.xpose.msra.mxu0 0.0
      %2349 = vmatprep.subr.mxu0 0.0
      %2350 = vmatpush1.xpose.msra.mxu0 0.0
      %2351 = vmatprep.subr.mxu0 0.0
      %2352 = vmatpush1.xpose.msra.mxu0 0.0
      %2353 = vmatprep.subr.mxu0 0.0
      %2354 = vmatpush1.xpose.msra.mxu0 0.0
      %2355 = vmatprep.subr.mxu0 0.0
      %2356 = vmatpush1.xpose.msra.mxu0 0.0
      %2357 = vmatprep.subr.mxu0 0.0
      %2358 = vmatpush1.xpose.msra.mxu0 0.0
      %2359 = vmatprep.subr.mxu0 0.0
      %2360 = vmatpush1.xpose.msra.mxu0 0.0
      %2361 = vmatprep.subr.mxu0 0.0
      %2362 = vmatpush1.xpose.msra.mxu0 0.0
      %2363 = vmatprep.subr.mxu0 0.0
      %2364 = vmatpush1.xpose.msra.mxu0 0.0
      %2365 = vmatprep.subr.mxu0 0.0
      %2366 = vmatpush1.xpose.msra.mxu0 0.0
      %2367 = vmatprep.subr.mxu0 0.0
      %2368 = vmatpush1.xpose.msra.mxu0 0.0
      %2369 = vmatprep.mubr.f32.mxu0 0.0
      %2370 = vmatmul.mubr.f32.gmra.mrb[0].mxu0 %v2300
      %v2371 = vpop.f32.mrb[0].mxu0
      %v2372 = vadd.f32 0.0, %v2371
      %v2373 = vpop.f32.mrb[0].mxu0
      %2374 = vdwg.mxu0
      %v2375 = vmul.f32 %v2372, 0.35355338
      %v2376 = vadd.f32 %v2375, %v916
      %v2377 = vsel %vm834, %v2376, -inf
      %2378 = vmax.xlane.f32.xlu0 %v2377
      %v2379 = vpop.xlane.xlu0 %2378
      %v2380 = vsub.f32 %v2376, %v2379
      %v2381 = vmul.f32 %v2380, 1.442695
      %v2382 = vpow.pop %v2381
      %v2383 = vsel %vm834, %v2382, 0.0
      %2384 = vadd.xlane.f32.xlu0 %v2383
      %v2385 = vpop.xlane.xlu0 %2384
      %v2386 = vrcp.pop %v2385
      %v2387 = vmul.f32 %v2382, %v2386
      %v2389 = vsel %vm834, %v2387, 0
      %2391 = vmatprep.subr.mxu0 0.0
      %2392 = vmatpush1.msra.mxu0 %v2296
      %2393 = vmatprep.subr.mxu0 0.0
      %2394 = vmatpush1.msra.mxu0 0.0
      %2395 = vmatprep.subr.mxu0 0.0
      %2396 = vmatpush1.msra.mxu0 0.0
      %2397 = vmatprep.subr.mxu0 0.0
      %2398 = vmatpush1.msra.mxu0 0.0
      %2399 = vmatprep.subr.mxu0 0.0
      %2400 = vmatpush1.msra.mxu0 0.0
      %2401 = vmatprep.subr.mxu0 0.0
      %2402 = vmatpush1.msra.mxu0 0.0
      %2403 = vmatprep.subr.mxu0 0.0
      %2404 = vmatpush1.msra.mxu0 0.0
      %2405 = vmatprep.subr.mxu0 0.0
      %2406 = vmatpush1.msra.mxu0 0.0
      %2407 = vmatprep.subr.mxu0 0.0
      %2408 = vmatpush1.msra.mxu0 0.0
      %2409 = vmatprep.subr.mxu0 0.0
      %2410 = vmatpush1.msra.mxu0 0.0
      %2411 = vmatprep.subr.mxu0 0.0
      %2412 = vmatpush1.msra.mxu0 0.0
      %2413 = vmatprep.subr.mxu0 0.0
      %2414 = vmatpush1.msra.mxu0 0.0
      %2415 = vmatprep.subr.mxu0 0.0
      %2416 = vmatpush1.msra.mxu0 0.0
      %2417 = vmatprep.subr.mxu0 0.0
      %2418 = vmatpush1.msra.mxu0 0.0
      %2419 = vmatprep.subr.mxu0 0.0
      %2420 = vmatpush1.msra.mxu0 0.0
      %2421 = vmatprep.subr.mxu0 0.0
      %2422 = vmatpush1.msra.mxu0 0.0
      %2423 = vmatprep.subr.mxu0 0.0
      %2424 = vmatpush1.msra.mxu0 0.0
      %2425 = vmatprep.subr.mxu0 0.0
      %2426 = vmatpush1.msra.mxu0 0.0
      %2427 = vmatprep.subr.mxu0 0.0
      %2428 = vmatpush1.msra.mxu0 0.0
      %2429 = vmatprep.subr.mxu0 0.0
      %2430 = vmatpush1.msra.mxu0 0.0
      %2431 = vmatprep.subr.mxu0 0.0
      %2432 = vmatpush1.msra.mxu0 0.0
      %2433 = vmatprep.subr.mxu0 0.0
      %2434 = vmatpush1.msra.mxu0 0.0
      %2435 = vmatprep.subr.mxu0 0.0
      %2436 = vmatpush1.msra.mxu0 0.0
      %2437 = vmatprep.subr.mxu0 0.0
      %2438 = vmatpush1.msra.mxu0 0.0
      %2439 = vmatprep.subr.mxu0 0.0
      %2440 = vmatpush1.msra.mxu0 0.0
      %2441 = vmatprep.subr.mxu0 0.0
      %2442 = vmatpush1.msra.mxu0 0.0
      %2443 = vmatprep.subr.mxu0 0.0
      %2444 = vmatpush1.msra.mxu0 0.0
      %2445 = vmatprep.subr.mxu0 0.0
      %2446 = vmatpush1.msra.mxu0 0.0
      %2447 = vmatprep.subr.mxu0 0.0
      %2448 = vmatpush1.msra.mxu0 0.0
      %2449 = vmatprep.subr.mxu0 0.0
      %2450 = vmatpush1.msra.mxu0 0.0
      %2451 = vmatprep.subr.mxu0 0.0
      %2452 = vmatpush1.msra.mxu0 0.0
      %2453 = vmatprep.subr.mxu0 0.0
      %2454 = vmatpush1.msra.mxu0 0.0
      %2455 = vmatprep.mubr.f32.mxu0 0.0
      %2456 = vmatmul.mubr.f32.gmra.mrb[0].mxu0 %v2389
      %v2457 = vpop.f32.mrb[0].mxu0
      %v2458 = vadd.f32 0.0, %v2457
      %v2459 = vpop.f32.mrb[0].mxu0
      %2460 = vdwg.mxu0
      %s2461 = scalar_lea.vmem %s8, 24
      %v2462 = vld [vmem:[%s2461] sm:$0xff]
      %v2464 = vsel %vm834, %v2458, 0
      %2466 = vmatprep.subr.mxu0 0.0
      %2467 = vmatpush1.msra.mxu0 %v2462
      %2468 = vmatprep.subr.mxu0 0.0
      %2469 = vmatpush1.msra.mxu0 0.0
      %2470 = vmatprep.subr.mxu0 0.0
      %2471 = vmatpush1.msra.mxu0 0.0
      %2472 = vmatprep.subr.mxu0 0.0
      %2473 = vmatpush1.msra.mxu0 0.0
      %2474 = vmatprep.subr.mxu0 0.0
      %2475 = vmatpush1.msra.mxu0 0.0
      %2476 = vmatprep.subr.mxu0 0.0
      %2477 = vmatpush1.msra.mxu0 0.0
      %2478 = vmatprep.subr.mxu0 0.0
      %2479 = vmatpush1.msra.mxu0 0.0
      %2480 = vmatprep.subr.mxu0 0.0
      %2481 = vmatpush1.msra.mxu0 0.0
      %2482 = vmatprep.subr.mxu0 0.0
      %2483 = vmatpush1.msra.mxu0 0.0
      %2484 = vmatprep.subr.mxu0 0.0
      %2485 = vmatpush1.msra.mxu0 0.0
      %2486 = vmatprep.subr.mxu0 0.0
      %2487 = vmatpush1.msra.mxu0 0.0
      %2488 = vmatprep.subr.mxu0 0.0
      %2489 = vmatpush1.msra.mxu0 0.0
      %2490 = vmatprep.subr.mxu0 0.0
      %2491 = vmatpush1.msra.mxu0 0.0
      %2492 = vmatprep.subr.mxu0 0.0
      %2493 = vmatpush1.msra.mxu0 0.0
      %2494 = vmatprep.subr.mxu0 0.0
      %2495 = vmatpush1.msra.mxu0 0.0
      %2496 = vmatprep.subr.mxu0 0.0
      %2497 = vmatpush1.msra.mxu0 0.0
      %2498 = vmatprep.subr.mxu0 0.0
      %2499 = vmatpush1.msra.mxu0 0.0
      %2500 = vmatprep.subr.mxu0 0.0
      %2501 = vmatpush1.msra.mxu0 0.0
      %2502 = vmatprep.subr.mxu0 0.0
      %2503 = vmatpush1.msra.mxu0 0.0
      %2504 = vmatprep.subr.mxu0 0.0
      %2505 = vmatpush1.msra.mxu0 0.0
      %2506 = vmatprep.subr.mxu0 0.0
      %2507 = vmatpush1.msra.mxu0 0.0
      %2508 = vmatprep.subr.mxu0 0.0
      %2509 = vmatpush1.msra.mxu0 0.0
      %2510 = vmatprep.subr.mxu0 0.0
      %2511 = vmatpush1.msra.mxu0 0.0
      %2512 = vmatprep.subr.mxu0 0.0
      %2513 = vmatpush1.msra.mxu0 0.0
      %2514 = vmatprep.subr.mxu0 0.0
      %2515 = vmatpush1.msra.mxu0 0.0
      %2516 = vmatprep.subr.mxu0 0.0
      %2517 = vmatpush1.msra.mxu0 0.0
      %2518 = vmatprep.subr.mxu0 0.0
      %2519 = vmatpush1.msra.mxu0 0.0
      %2520 = vmatprep.subr.mxu0 0.0
      %2521 = vmatpush1.msra.mxu0 0.0
      %2522 = vmatprep.subr.mxu0 0.0
      %2523 = vmatpush1.msra.mxu0 0.0
      %2524 = vmatprep.subr.mxu0 0.0
      %2525 = vmatpush1.msra.mxu0 0.0
      %2526 = vmatprep.subr.mxu0 0.0
      %2527 = vmatpush1.msra.mxu0 0.0
      %2528 = vmatprep.subr.mxu0 0.0
      %2529 = vmatpush1.msra.mxu0 0.0
      %2530 = vmatprep.mubr.f32.mxu0 0.0
      %2531 = vmatmul.mubr.f32.gmra.mrb[0].mxu0 %v2464
      %v2532 = vpop.f32.mrb[0].mxu0
      %v2533 = vadd.f32 0.0, %v2532
      %v2534 = vpop.f32.mrb[0].mxu0
      %2535 = vdwg.mxu0
      %v2536 = vadd.f32 %v2049, %v2533
      %v2537 = vld [vmem:[%s9] sm:$0x1]
      %v2539 = vlaneseq
      %v2540 = vshrl.u32 %v2539, 7
      %v2541 = vsub.s32 0, %v2540
      %v2542 = vrot.slane %v2537, %v2541
      %v2544 = vadd.f32 %v2536, %v2542
      %v2545 = vadd.f32 %v585, %v2544
      %v2546 = vld [vmem:[%s10] sm:$0x1]
      %v2547 = vld [vmem:[%s11] sm:$0x1]
      %v2548 = vsel %vm598, %v2545, 0.0
      %2549 = vadd.xlane.f32.xlu0 %v2548
      %v2550 = vpop.xlane.xlu0 %2549
      %v2551 = vrcp.pop 32.0
      %v2552 = vmul.f32 %v2550, %v2551
      %v2553 = vsub.f32 %v2545, %v2552
      %v2554 = vmul.f32 %v2553, %v2553
      %v2555 = vsel %vm598, %v2554, 0.0
      %2556 = vadd.xlane.f32.xlu0 %v2555
      %v2557 = vpop.xlane.xlu0 %2556
      %v2558 = vmul.f32 %v2557, %v2551
      %v2559 = vadd.f32 %v2558, 1e-12
      %v2560 = vrsqrt.pop %v2559
      %v2561 = vmul.f32 %v2553, %v2560
      %v2563 = vlaneseq
      %v2564 = vshrl.u32 %v2563, 7
      %v2565 = vsub.s32 0, %v2564
      %v2566 = vrot.slane %v2546, %v2565
      %v2568 = vmul.f32 %v2561, %v2566
      %v2570 = vlaneseq
      %v2571 = vshrl.u32 %v2570, 7
      %v2572 = vsub.s32 0, %v2571
      %v2573 = vrot.slane %v2547, %v2572
      %v2575 = vadd.f32 %v2568, %v2573
      %v2576 = vld [vmem:[%s12] sm:$0xff]
      %v2577 = vld [vmem:[%s12 + $0x8] sm:$0xff]
      %v2578 = vld [vmem:[%s12 + $0x10] sm:$0xff]
      %v2579 = vld [vmem:[%s12 + $0x18] sm:$0xff]
      %v2580 = vld [vmem:[%s13] sm:$0x1]
      %v2582 = vlaneseq
      %v2583 = vshrl.u32 %v2582, 7
      %v2584 = vsub.s32 0, %v2583
      %v2585 = vrot.slane %v2580, %v2584
      %v2588 = vsel %vm598, %v2575, 0
      %2590 = vmatprep.subr.mxu0 0.0
      %2591 = vmatpush1.msra.mxu0 %v2576
      %2592 = vmatprep.subr.mxu0 0.0
      %2593 = vmatpush1.msra.mxu0 %v2577
      %2594 = vmatprep.subr.mxu0 0.0
      %2595 = vmatpush1.msra.mxu0 %v2578
      %2596 = vmatprep.subr.mxu0 0.0
      %2597 = vmatpush1.msra.mxu0 %v2579
      %2598 = vmatprep.subr.mxu0 0.0
      %2599 = vmatpush1.msra.mxu0 0.0
      %2600 = vmatprep.subr.mxu0 0.0
      %2601 = vmatpush1.msra.mxu0 0.0
      %2602 = vmatprep.subr.mxu0 0.0
      %2603 = vmatpush1.msra.mxu0 0.0
      %2604 = vmatprep.subr.mxu0 0.0
      %2605 = vmatpush1.msra.mxu0 0.0
      %2606 = vmatprep.subr.mxu0 0.0
      %2607 = vmatpush1.msra.mxu0 0.0
      %2608 = vmatprep.subr.mxu0 0.0
      %2609 = vmatpush1.msra.mxu0 0.0
      %2610 = vmatprep.subr.mxu0 0.0
      %2611 = vmatpush1.msra.mxu0 0.0
      %2612 = vmatprep.subr.mxu0 0.0
      %2613 = vmatpush1.msra.mxu0 0.0
      %2614 = vmatprep.subr.mxu0 0.0
      %2615 = vmatpush1.msra.mxu0 0.0
      %2616 = vmatprep.subr.mxu0 0.0
      %2617 = vmatpush1.msra.mxu0 0.0
      %2618 = vmatprep.subr.mxu0 0.0
      %2619 = vmatpush1.msra.mxu0 0.0
      %2620 = vmatprep.subr.mxu0 0.0
      %2621 = vmatpush1.msra.mxu0 0.0
      %2622 = vmatprep.subr.mxu0 0.0
      %2623 = vmatpush1.msra.mxu0 0.0
      %2624 = vmatprep.subr.mxu0 0.0
      %2625 = vmatpush1.msra.mxu0 0.0
      %2626 = vmatprep.subr.mxu0 0.0
      %2627 = vmatpush1.msra.mxu0 0.0
      %2628 = vmatprep.subr.mxu0 0.0
      %2629 = vmatpush1.msra.mxu0 0.0
      %2630 = vmatprep.subr.mxu0 0.0
      %2631 = vmatpush1.msra.mxu0 0.0
      %2632 = vmatprep.subr.mxu0 0.0
      %2633 = vmatpush1.msra.mxu0 0.0
      %2634 = vmatprep.subr.mxu0 0.0
      %2635 = vmatpush1.msra.mxu0 0.0
      %2636 = vmatprep.subr.mxu0 0.0
      %2637 = vmatpush1.msra.mxu0 0.0
      %2638 = vmatprep.subr.mxu0 0.0
      %2639 = vmatpush1.msra.mxu0 0.0
      %2640 = vmatprep.subr.mxu0 0.0
      %2641 = vmatpush1.msra.mxu0 0.0
      %2642 = vmatprep.subr.mxu0 0.0
      %2643 = vmatpush1.msra.mxu0 0.0
      %2644 = vmatprep.subr.mxu0 0.0
      %2645 = vmatpush1.msra.mxu0 0.0
      %2646 = vmatprep.subr.mxu0 0.0
      %2647 = vmatpush1.msra.mxu0 0.0
      %2648 = vmatprep.subr.mxu0 0.0
      %2649 = vmatpush1.msra.mxu0 0.0
      %2650 = vmatprep.subr.mxu0 0.0
      %2651 = vmatpush1.msra.mxu0 0.0
      %2652 = vmatprep.subr.mxu0 0.0
      %2653 = vmatpush1.msra.mxu0 0.0
      %2654 = vmatprep.mubr.f32.mxu0 0.0
      %2655 = vmatmul.mubr.f32.gmra.mrb[0].mxu0 %v2588
      %v2656 = vpop.f32.mrb[0].mxu0
      %v2657 = vadd.f32 %v2585, %v2656
      %v2658 = vpop.f32.mrb[0].mxu0
      %2659 = vdwg.mxu0
      %v2660 = vmul.f32 %v2657, %v2657
      %v2661 = vmul.f32 %v2657, %v2660
      %v2662 = vmul.f32 %v2661, 0.044715
      %v2663 = vadd.f32 %v2657, %v2662
      %v2664 = vmul.f32 %v2663, 0.7978846
      %v2665 = vtanh.pop %v2664
      %v2666 = vadd.f32 %v2665, 1.0
      %v2667 = vmul.f32 %v2666, 0.5
      %v2668 = vmul.f32 %v2657, %v2667
      %v2669 = vld [vmem:[%s14] sm:$0xff]
      %v2670 = vld [vmem:[%s14 + $0x8] sm:$0xff]
      %v2671 = vld [vmem:[%s14 + $0x10] sm:$0xff]
      %v2672 = vld [vmem:[%s14 + $0x18] sm:$0xff]
      %v2673 = vld [vmem:[%s14 + $0x20] sm:$0xff]
      %v2674 = vld [vmem:[%s14 + $0x28] sm:$0xff]
      %v2675 = vld [vmem:[%s14 + $0x30] sm:$0xff]
      %v2676 = vld [vmem:[%s14 + $0x38] sm:$0xff]
      %v2677 = vld [vmem:[%s15] sm:$0x1]
      %v2679 = vlaneseq
      %v2680 = vshrl.u32 %v2679, 7
      %v2681 = vsub.s32 0, %v2680
      %v2682 = vrot.slane %v2677, %v2681
      %vm2684 = vcmask 523264
      %v2686 = vsel %vm2684, %v2668, 0
      %2688 = vmatprep.subr.mxu0 0.0
      %2689 = vmatpush1.msra.mxu0 %v2669
      %2690 = vmatprep.subr.mxu0 0.0
      %2691 = vmatpush1.msra.mxu0 %v2670
      %2692 = vmatprep.subr.mxu0 0.0
      %2693 = vmatpush1.msra.mxu0 %v2671
      %2694 = vmatprep.subr.mxu0 0.0
      %2695 = vmatpush1.msra.mxu0 %v2672
      %2696 = vmatprep.subr.mxu0 0.0
      %2697 = vmatpush1.msra.mxu0 %v2673
      %2698 = vmatprep.subr.mxu0 0.0
      %2699 = vmatpush1.msra.mxu0 %v2674
      %2700 = vmatprep.subr.mxu0 0.0
      %2701 = vmatpush1.msra.mxu0 %v2675
      %2702 = vmatprep.subr.mxu0 0.0
      %2703 = vmatpush1.msra.mxu0 %v2676
      %2704 = vmatprep.subr.mxu0 0.0
      %2705 = vmatpush1.msra.mxu0 0.0
      %2706 = vmatprep.subr.mxu0 0.0
      %2707 = vmatpush1.msra.mxu0 0.0
      %2708 = vmatprep.subr.mxu0 0.0
      %2709 = vmatpush1.msra.mxu0 0.0
      %2710 = vmatprep.subr.mxu0 0.0
      %2711 = vmatpush1.msra.mxu0 0.0
      %2712 = vmatprep.subr.mxu0 0.0
      %2713 = vmatpush1.msra.mxu0 0.0
      %2714 = vmatprep.subr.mxu0 0.0
      %2715 = vmatpush1.msra.mxu0 0.0
      %2716 = vmatprep.subr.mxu0 0.0
      %2717 = vmatpush1.msra.mxu0 0.0
      %2718 = vmatprep.subr.mxu0 0.0
      %2719 = vmatpush1.msra.mxu0 0.0
      %2720 = vmatprep.subr.mxu0 0.0
      %2721 = vmatpush1.msra.mxu0 0.0
      %2722 = vmatprep.subr.mxu0 0.0
      %2723 = vmatpush1.msra.mxu0 0.0
      %2724 = vmatprep.subr.mxu0 0.0
      %2725 = vmatpush1.msra.mxu0 0.0
      %2726 = vmatprep.subr.mxu0 0.0
      %2727 = vmatpush1.msra.mxu0 0.0
      %2728 = vmatprep.subr.mxu0 0.0
      %2729 = vmatpush1.msra.mxu0 0.0
      %2730 = vmatprep.subr.mxu0 0.0
      %2731 = vmatpush1.msra.mxu0 0.0
      %2732 = vmatprep.subr.mxu0 0.0
      %2733 = vmatpush1.msra.mxu0 0.0
      %2734 = vmatprep.subr.mxu0 0.0
      %2735 = vmatpush1.msra.mxu0 0.0
      %2736 = vmatprep.subr.mxu0 0.0
      %2737 = vmatpush1.msra.mxu0 0.0
      %2738 = vmatprep.subr.mxu0 0.0
      %2739 = vmatpush1.msra.mxu0 0.0
      %2740 = vmatprep.subr.mxu0 0.0
      %2741 = vmatpush1.msra.mxu0 0.0
      %2742 = vmatprep.subr.mxu0 0.0
      %2743 = vmatpush1.msra.mxu0 0.0
      %2744 = vmatprep.subr.mxu0 0.0
      %2745 = vmatpush1.msra.mxu0 0.0
      %2746 = vmatprep.subr.mxu0 0.0
      %2747 = vmatpush1.msra.mxu0 0.0
      %2748 = vmatprep.subr.mxu0 0.0
      %2749 = vmatpush1.msra.mxu0 0.0
      %2750 = vmatprep.subr.mxu0 0.0
      %2751 = vmatpush1.msra.mxu0 0.0
      %2752 = vmatprep.mubr.f32.mxu0 0.0
      %2753 = vmatmul.mubr.f32.gmra.mrb[0].mxu0 %v2686
      %v2754 = vpop.f32.mrb[0].mxu0
      %v2755 = vadd.f32 %v2682, %v2754
      %v2756 = vpop.f32.mrb[0].mxu0
      %2757 = vdwg.mxu0
      %v2758 = vadd.f32 %v2575, %v2755
      %v2759 = vld [vmem:[%s16] sm:$0x1]
      %v2760 = vld [vmem:[%s17] sm:$0x1]
      %v2761 = vsel %vm598, %v2758, 0.0
      %2762 = vadd.xlane.f32.xlu0 %v2761
      %v2763 = vpop.xlane.xlu0 %2762
      %v2764 = vmul.f32 %v2763, %v2551
      %v2765 = vsub.f32 %v2758, %v2764
      %v2766 = vmul.f32 %v2765, %v2765
      %v2767 = vsel %vm598, %v2766, 0.0
      %2768 = vadd.xlane.f32.xlu0 %v2767
      %v2769 = vpop.xlane.xlu0 %2768
      %v2770 = vmul.f32 %v2769, %v2551
      %v2771 = vadd.f32 %v2770, 1e-12
      %v2772 = vrsqrt.pop %v2771
      %v2773 = vmul.f32 %v2765, %v2772
      %v2775 = vlaneseq
      %v2776 = vshrl.u32 %v2775, 7
      %v2777 = vsub.s32 0, %v2776
      %v2778 = vrot.slane %v2759, %v2777
      %v2780 = vmul.f32 %v2773, %v2778
      %v2782 = vlaneseq
      %v2783 = vshrl.u32 %v2782, 7
      %v2784 = vsub.s32 0, %v2783
      %v2785 = vrot.slane %v2760, %v2784
      %v2787 = vadd.f32 %v2780, %v2785
      %2788 = vst.msk [vmem:[%s584] sm:$0xff] %vm598, %v2787
      %p2789 = scmp.lt.s32.totalorder %s29, 1
      %s2790 = scalar_select %p2789, %s29, 1
      %s2791 = smul.addr %s2790, 8
      %s2792 = scalar_lea.vmem %s18, %s2791
      // Predicated region
      $region93: #{_forward.6} parent=91 // pred_check
        %p2793 = pneg %p435
      $region94: #{_forward.6} parent=91 // pred_check_branch
        %2795 = sbr.rel (%p2793) target = $region96
      $region95: #{_forward.6} parent=91 // pred_region
        _
      $region96: #{_forward.6} parent=91 // pred_fallthru
        _
    $region92: #{_forward.6} parent=5 // pred_fallthru
      _
    %p2796 = scmp.le.s32.totalorder 2, %s24
    // Predicated region
    $region97: #{_forward.6} parent=5 // pred_check
      %p2797 = pneg %p2796
    $region98: #{_forward.6} parent=5 // pred_check_branch
      %2799 = sbr.rel (%p2797) target = $region100
    $region99: #{_forward.6} parent=5 // pred_region
      %s2800 = ssub.s32 %s24, 2
      // Predicated region
      $region101: #{_forward.6} parent=99 // pred_check
        %p2801 = pneg %p441
      $region102: #{_forward.6} parent=99 // pred_check_branch
        %2803 = sbr.rel (%p2801) target = $region104
      $region103: #{_forward.6} parent=99 // pred_region
        %p2804 = scmp.lt.s32.totalorder %s30, 1
        %s2805 = scalar_select %p2804, %s30, 1
        %s2806 = smul.addr %s2805, 8
        %s2807 = scalar_lea.vmem %s18, %s2806
      $region104: #{_forward.6} parent=99 // pred_fallthru
        _
    $region100: #{_forward.6} parent=5 // pred_fallthru
      _
  $region6: #{_forward.6} parent=0 // loop_footer
    %s28 = sadd.s32 1, %s24
  $region7: #{_forward.6} parent=0 // loop_footer_branch
    %23 = sbr.rel target = $region3
  $region8: #{_forward.6} parent=0 // loop_exit
    _

</llo_original>
